<compile_context>
chip_gen: v7x
topology: tpu7x:2x2x1
jax: 0.10.0
libtpu: 0.0.40
codegen_flags: <defaults>
</compile_context>

<pallas_src>
import functools

import jax
import jax.numpy as jnp
import numpy as np
from jax import lax
from jax.experimental import pallas as pl
from jax.experimental.pallas import tpu as pltpu

NEG_SLOPE = 0.01   # nn.LeakyReLU default negative_slope
BN_EPS = 1e-5      # nn.BatchNorm2d default eps


def _leaky_relu(v):
    return jnp.where(v > 0, v, NEG_SLOPE * v)


def _conv3x3_flat(x_flat, w_mat, *, cin, cout, wp, l_out):
    """y[:, k] = sum_{kh,kw} W_tap @ x_flat[:, k + kh*wp + kw],  k in [0, l_out)."""
    acc = jnp.zeros((cout, l_out), jnp.float32)
    for kh in range(3):
        for kw in range(3):
            tap = kh * 3 + kw
            off = kh * wp + kw
            w_tap = w_mat[:, tap * cin:(tap + 1) * cin]       # (Cout, Cin)
            x_win = x_flat[:, off:off + l_out]                # (Cin, l_out)
            if cin >= 8:
                # TODO(synk): for real ResNet widths, stack the 9 shifted windows
                # along the contraction axis and issue one (Cout,9Cin)x(9Cin,L)
                # MXU matmul instead of 9 K=Cin dots.
                acc = acc + jnp.dot(w_tap, x_win,
                                    preferred_element_type=jnp.float32)
            else:
                # Tiny contraction: the MXU would be >97% idle; use the VPU.
                for ci in range(cin):
                    acc = acc + w_tap[:, ci:ci + 1] * x_win[ci:ci + 1, :]
    return acc


# ------------------------------ fused kernel --------------------------------

def _fused_residual_block_kernel(xp_ref, w1_ref, w2_ref, bn_ref, mask_ref,
                                 o_ref, *, n, c, wp, chunk, l1, L1, L2,
                                 m_valid):
    """conv1 -> BN1(batch stats)+LeakyReLU -> conv2 -> BN2 -> +res -> LeakyReLU."""
    xs = xp_ref[...]                       # (C, Lx)  padded flat batch
    mask1 = mask_ref[...]                  # (1, L1)  valid-position mask (conv1 grid)
    w1 = w1_ref[...]                       # (C, 9C)
    w2 = w2_ref[...]                       # (C, 9C)
    bn = bn_ref[...]                       # (C, 4) = [gamma1, beta1, gamma2, beta2]

    inv_m = jnp.float32(1.0 / m_valid)

    # ---- conv1 over the whole batch (flat shifted windows) ----
    acc1 = _conv3x3_flat(xs, w1, cin=c, cout=c, wp=wp, l_out=L1)

    # ---- BN1 batch statistics + apply + LeakyReLU ----
    # NOTE: var = E[x^2]-E[x]^2 in f32; fine at these magnitudes, would need a
    # shifted/two-pass formulation if |mean| >> std.
    m1 = acc1 * mask1
    mean1 = jnp.sum(m1, axis=1, keepdims=True) * inv_m
    var1 = jnp.sum(m1 * m1, axis=1, keepdims=True) * inv_m - mean1 * mean1
    scale1 = bn[:, 0:1] * lax.rsqrt(var1 + BN_EPS)
    shift1 = bn[:, 1:2] - mean1 * scale1
    # Masking makes a1 *be* conv2's zero-padded input layout (no re-pad copy).
    a1 = _leaky_relu(acc1 * scale1 + shift1) * mask1

    # ---- conv2 (same shifted-window trick, offset by one padded row+col) ----
    acc2 = _conv3x3_flat(a1, w2, cin=c, cout=c, wp=wp, l_out=L2)

    # ---- BN2 batch statistics + apply + residual add + LeakyReLU ----
    mask2 = mask1[:, wp + 1:wp + 1 + L2]
    m2 = acc2 * mask2
    mean2 = jnp.sum(m2, axis=1, keepdims=True) * inv_m
    var2 = jnp.sum(m2 * m2, axis=1, keepdims=True) * inv_m - mean2 * mean2
    scale2 = bn[:, 2:3] * lax.rsqrt(var2 + BN_EPS)
    shift2 = bn[:, 3:4] - mean2 * scale2
    xres = xs[:, 2 * (wp + 1):2 * (wp + 1) + L2]   # residual, aligned with acc2
    y = _leaky_relu(acc2 * scale2 + shift2 + xres)

    # ---- lane-dense output: one (C, H*(W+2)) slab per sample ----
    for i in range(n):
        o_ref[i] = y[:, i * chunk:i * chunk + l1]


# --------------------------------- forward ----------------------------------

@functools.partial(jax.jit, static_argnames=("stride",))
def residual_block_forward(x, params, stride=1):
    """ResidualBlock.forward (downsample=None -> requires stride=1, Cin==Cout)."""
    n, cin, h, w = x.shape
    cout = params["w1"].shape[0]
    if stride != 1 or cin != cout:
        # TODO(synk): downsample branch (arbitrary user nn.Module) not implemented.
        raise NotImplementedError("downsample=None requires stride=1, Cin==Cout")

    wp = w + 2                    # padded row width
    chunk = (h + 2) * wp          # one zero-padded sample, flattened
    l1 = h * wp                   # valid output rows per sample (junk cols kept)
    bx0 = wp + 1                  # flat offset of sample 0's padded image
    L2 = (n - 1) * chunk + l1     # conv2 output length (covers all output slabs)
    L1 = L2 + 2 * wp + 2          # conv1 output length (conv2 read horizon)
    Lx = L1 + 2 * wp + 2          # padded input length (conv1 read horizon)
    m_valid = n * h * w           # positions per channel for batch statistics

    x = x.astype(jnp.float32)

    # Concatenate zero-padded samples along the flat (lane) axis:
    #   xp[:, bx0 + i*chunk + r*wp + cc] = pad(x[i])[r, cc]
    xpad = jnp.pad(x, ((0, 0), (0, 0), (1, 1), (1, 1)))            # (N,C,h+2,wp)
    xcat = jnp.transpose(xpad, (1, 0, 2, 3)).reshape(cin, n * chunk)
    xp = jnp.pad(xcat, ((0, 0), (bx0, Lx - bx0 - n * chunk)))

    # Valid-position mask on the conv1 output grid (trace-time numpy constant,
    # shipped as one tiny input).
    j = np.arange(chunk)
    cmask = (((j % wp) < w) & (j < h * wp)).astype(np.float32)
    full = np.zeros(max(L1, bx0 + n * chunk), np.float32)
    for i in range(n):
        full[bx0 + i * chunk: bx0 + (i + 1) * chunk] = cmask
    mask = jnp.asarray(full[:L1].reshape(1, L1))

    # (kh, kw, cin)-ordered weight matrices.  Conv biases dropped on purpose:
    # training-mode BatchNorm subtracts the batch mean, which cancels a
    # per-channel constant exactly (the reference keeps the bias; results match).
    w1t = jnp.transpose(params["w1"], (0, 2, 3, 1)).reshape(cout, 9 * cin).astype(jnp.float32)
    w2t = jnp.transpose(params["w2"], (0, 2, 3, 1)).reshape(cout, 9 * cout).astype(jnp.float32)

    bnp = jnp.stack([params["gamma1"], params["beta1"],
                     params["gamma2"], params["beta2"]], axis=1).astype(jnp.float32)

    kern = functools.partial(_fused_residual_block_kernel, n=n, c=cout, wp=wp,
                             chunk=chunk, l1=l1, L1=L1, L2=L2, m_valid=m_valid)
    out_flat = pl.pallas_call(
        kern,
        out_shape=jax.ShapeDtypeStruct((n, cout, l1), jnp.float32),
        grid=(1,),
        in_specs=[pl.BlockSpec((cin, Lx), lambda i: (0, 0)),
                  pl.BlockSpec((cout, 9 * cin), lambda i: (0, 0)),
                  pl.BlockSpec((cout, 9 * cout), lambda i: (0, 0)),
                  pl.BlockSpec((cout, 4), lambda i: (0, 0)),
                  pl.BlockSpec((1, L1), lambda i: (0, 0))],
        out_specs=pl.BlockSpec((n, cout, l1), lambda i: (0, 0, 0)),
        compiler_params=pltpu.CompilerParams(
            dimension_semantics=("arbitrary",)),
    )(xp, w1t, w2t, bnp, mask)

    # Strip the 2 junk columns per row (tiny XLA reshape+slice; fuses).
    return out_flat.reshape(n, cout, h, wp)[:, :, :, :w]


# ----------------------------- reference (pure JAX) --------------------------

def residual_block_reference(x, params):
    def conv(x, w, b):
        y = jax.lax.conv_general_dilated(
            x, w, (1, 1), ((1, 1), (1, 1)),
            dimension_numbers=("NCHW", "OIHW", "NCHW"))
        return y + b.reshape(1, -1, 1, 1)

    def bn(x, g, bta):
        mean = x.mean(axis=(0, 2, 3), keepdims=True)
        var = jnp.square(x - mean).mean(axis=(0, 2, 3), keepdims=True)
        return (x - mean) * jax.lax.rsqrt(var + BN_EPS) * g.reshape(1, -1, 1, 1) \
            + bta.reshape(1, -1, 1, 1)

    def lrelu(v):
        return jnp.where(v > 0, v, NEG_SLOPE * v)

    out = lrelu(bn(conv(x, params["w1"], params["b1"]), params["gamma1"], params["beta1"]))
    out = bn(conv(out, params["w2"], params["b2"]), params["gamma2"], params["beta2"])
    return lrelu(out + x)


# ----------------------------------- main ------------------------------------

if __name__ == "__main__":
    # Small shapes consistent with the module: batch=2, channels=4, spatial=16.
    N, C, H, W = 2, 4, 16, 16
    key = jax.random.PRNGKey(0)
    kx, kw1, kb1, kw2, kb2 = jax.random.split(key, 5)

    x = jax.random.normal(kx, (N, C, H, W), dtype=jnp.float32)

    params = {
        "w1": jax.random.normal(kw1, (C, C, 3, 3), dtype=jnp.float32) * 0.1,
        "b1": jax.random.normal(kb1, (C,), dtype=jnp.float32) * 0.1,
        "gamma1": jnp.ones((C,), jnp.float32),   # BatchNorm2d default affine params
        "beta1": jnp.zeros((C,), jnp.float32),
        "w2": jax.random.normal(kw2, (C, C, 3, 3), dtype=jnp.float32) * 0.1,
        "b2": jax.random.normal(kb2, (C,), dtype=jnp.float32) * 0.1,
        "gamma2": jnp.ones((C,), jnp.float32),
        "beta2": jnp.zeros((C,), jnp.float32),
    }

    out = residual_block_forward(x, params, stride=1)
    out = jax.block_until_ready(out)

    ref = jax.block_until_ready(residual_block_reference(x, params))
    np.testing.assert_allclose(np.asarray(out), np.asarray(ref), rtol=1e-4, atol=1e-4)

    print("KERNEL_OK")
</pallas_src>

<mosaic_0001>
module attributes {stable_mosaic.version = 11 : i64} {
  func.func @_fused_residual_block_kernel(%arg0: i32, %arg1: memref<4x688xf32, #tpu.memory_space<vmem>>, %arg2: memref<4x36xf32, #tpu.memory_space<vmem>>, %arg3: memref<4x36xf32, #tpu.memory_space<vmem>>, %arg4: memref<4x4xf32, #tpu.memory_space<vmem>>, %arg5: memref<1x650xf32, #tpu.memory_space<vmem>>, %arg6: memref<2x4x288xf32, #tpu.memory_space<vmem>>) attributes {dimension_semantics = [#tpu.dimension_semantics<arbitrary>], iteration_bounds = array<i64: 1>, scalar_prefetch = 0 : i64, scratch_operands = 0 : i64, tpu.core_type = #tpu.core_type<tc>, window_params = [{pipeline_mode = #tpu.pipeline_mode<synchronous>, transform_indices = @transform_0, window_bounds = array<i64: 4, 688>}, {pipeline_mode = #tpu.pipeline_mode<synchronous>, transform_indices = @transform_1, window_bounds = array<i64: 4, 36>}, {pipeline_mode = #tpu.pipeline_mode<synchronous>, transform_indices = @transform_2, window_bounds = array<i64: 4, 36>}, {pipeline_mode = #tpu.pipeline_mode<synchronous>, transform_indices = @transform_3, window_bounds = array<i64: 4, 4>}, {pipeline_mode = #tpu.pipeline_mode<synchronous>, transform_indices = @transform_4, window_bounds = array<i64: 1, 650>}, {pipeline_mode = #tpu.pipeline_mode<synchronous>, transform_indices = @transform_5, window_bounds = array<i64: 2, 4, 288>}]} {
    %c0 = arith.constant 0 : index
    %c0_0 = arith.constant 0 : index
    %0 = vector.load %arg1[%c0, %c0_0] : memref<4x688xf32, #tpu.memory_space<vmem>>, vector<4x688xf32>
    %c0_1 = arith.constant 0 : index
    %c0_2 = arith.constant 0 : index
    %1 = vector.load %arg5[%c0_1, %c0_2] : memref<1x650xf32, #tpu.memory_space<vmem>>, vector<1x650xf32>
    %c0_3 = arith.constant 0 : index
    %c0_4 = arith.constant 0 : index
    %2 = vector.load %arg2[%c0_3, %c0_4] : memref<4x36xf32, #tpu.memory_space<vmem>>, vector<4x36xf32>
    %c0_5 = arith.constant 0 : index
    %c0_6 = arith.constant 0 : index
    %3 = vector.load %arg3[%c0_5, %c0_6] : memref<4x36xf32, #tpu.memory_space<vmem>>, vector<4x36xf32>
    %c0_7 = arith.constant 0 : index
    %c0_8 = arith.constant 0 : index
    %4 = vector.load %arg4[%c0_7, %c0_8] : memref<4x4xf32, #tpu.memory_space<vmem>>, vector<4x4xf32>
    %cst = arith.constant 0.000000e+00 : f32
    %5 = vector.broadcast %cst : f32 to vector<4x650xf32>
    %6 = vector.extract_strided_slice %2 {offsets = [0, 0], sizes = [4, 4], strides = [1, 1]} : vector<4x36xf32> to vector<4x4xf32>
    %7 = vector.extract_strided_slice %0 {offsets = [0, 0], sizes = [4, 650], strides = [1, 1]} : vector<4x688xf32> to vector<4x650xf32>
    %8 = vector.extract_strided_slice %6 {offsets = [0, 0], sizes = [4, 1], strides = [1, 1]} : vector<4x4xf32> to vector<4x1xf32>
    %9 = vector.extract_strided_slice %7 {offsets = [0, 0], sizes = [1, 650], strides = [1, 1]} : vector<4x650xf32> to vector<1x650xf32>
    %10 = vector.broadcast %8 : vector<4x1xf32> to vector<4x650xf32>
    %11 = vector.broadcast %9 : vector<1x650xf32> to vector<4x650xf32>
    %12 = arith.mulf %10, %11 : vector<4x650xf32>
    %13 = arith.addf %5, %12 : vector<4x650xf32>
    %14 = vector.extract_strided_slice %6 {offsets = [0, 1], sizes = [4, 1], strides = [1, 1]} : vector<4x4xf32> to vector<4x1xf32>
    %15 = vector.extract_strided_slice %7 {offsets = [1, 0], sizes = [1, 650], strides = [1, 1]} : vector<4x650xf32> to vector<1x650xf32>
    %16 = vector.broadcast %14 : vector<4x1xf32> to vector<4x650xf32>
    %17 = vector.broadcast %15 : vector<1x650xf32> to vector<4x650xf32>
    %18 = arith.mulf %16, %17 : vector<4x650xf32>
    %19 = arith.addf %13, %18 : vector<4x650xf32>
    %20 = vector.extract_strided_slice %6 {offsets = [0, 2], sizes = [4, 1], strides = [1, 1]} : vector<4x4xf32> to vector<4x1xf32>
    %21 = vector.extract_strided_slice %7 {offsets = [2, 0], sizes = [1, 650], strides = [1, 1]} : vector<4x650xf32> to vector<1x650xf32>
    %22 = vector.broadcast %20 : vector<4x1xf32> to vector<4x650xf32>
    %23 = vector.broadcast %21 : vector<1x650xf32> to vector<4x650xf32>
    %24 = arith.mulf %22, %23 : vector<4x650xf32>
    %25 = arith.addf %19, %24 : vector<4x650xf32>
    %26 = vector.extract_strided_slice %6 {offsets = [0, 3], sizes = [4, 1], strides = [1, 1]} : vector<4x4xf32> to vector<4x1xf32>
    %27 = vector.extract_strided_slice %7 {offsets = [3, 0], sizes = [1, 650], strides = [1, 1]} : vector<4x650xf32> to vector<1x650xf32>
    %28 = vector.broadcast %26 : vector<4x1xf32> to vector<4x650xf32>
    %29 = vector.broadcast %27 : vector<1x650xf32> to vector<4x650xf32>
    %30 = arith.mulf %28, %29 : vector<4x650xf32>
    %31 = arith.addf %25, %30 : vector<4x650xf32>
    %32 = vector.extract_strided_slice %2 {offsets = [0, 4], sizes = [4, 4], strides = [1, 1]} : vector<4x36xf32> to vector<4x4xf32>
    %33 = vector.extract_strided_slice %0 {offsets = [0, 1], sizes = [4, 650], strides = [1, 1]} : vector<4x688xf32> to vector<4x650xf32>
    %34 = vector.extract_strided_slice %32 {offsets = [0, 0], sizes = [4, 1], strides = [1, 1]} : vector<4x4xf32> to vector<4x1xf32>
    %35 = vector.extract_strided_slice %33 {offsets = [0, 0], sizes = [1, 650], strides = [1, 1]} : vector<4x650xf32> to vector<1x650xf32>
    %36 = vector.broadcast %34 : vector<4x1xf32> to vector<4x650xf32>
    %37 = vector.broadcast %35 : vector<1x650xf32> to vector<4x650xf32>
    %38 = arith.mulf %36, %37 : vector<4x650xf32>
    %39 = arith.addf %31, %38 : vector<4x650xf32>
    %40 = vector.extract_strided_slice %32 {offsets = [0, 1], sizes = [4, 1], strides = [1, 1]} : vector<4x4xf32> to vector<4x1xf32>
    %41 = vector.extract_strided_slice %33 {offsets = [1, 0], sizes = [1, 650], strides = [1, 1]} : vector<4x650xf32> to vector<1x650xf32>
    %42 = vector.broadcast %40 : vector<4x1xf32> to vector<4x650xf32>
    %43 = vector.broadcast %41 : vector<1x650xf32> to vector<4x650xf32>
    %44 = arith.mulf %42, %43 : vector<4x650xf32>
    %45 = arith.addf %39, %44 : vector<4x650xf32>
    %46 = vector.extract_strided_slice %32 {offsets = [0, 2], sizes = [4, 1], strides = [1, 1]} : vector<4x4xf32> to vector<4x1xf32>
    %47 = vector.extract_strided_slice %33 {offsets = [2, 0], sizes = [1, 650], strides = [1, 1]} : vector<4x650xf32> to vector<1x650xf32>
    %48 = vector.broadcast %46 : vector<4x1xf32> to vector<4x650xf32>
    %49 = vector.broadcast %47 : vector<1x650xf32> to vector<4x650xf32>
    %50 = arith.mulf %48, %49 : vector<4x650xf32>
    %51 = arith.addf %45, %50 : vector<4x650xf32>
    %52 = vector.extract_strided_slice %32 {offsets = [0, 3], sizes = [4, 1], strides = [1, 1]} : vector<4x4xf32> to vector<4x1xf32>
    %53 = vector.extract_strided_slice %33 {offsets = [3, 0], sizes = [1, 650], strides = [1, 1]} : vector<4x650xf32> to vector<1x650xf32>
    %54 = vector.broadcast %52 : vector<4x1xf32> to vector<4x650xf32>
    %55 = vector.broadcast %53 : vector<1x650xf32> to vector<4x650xf32>
    %56 = arith.mulf %54, %55 : vector<4x650xf32>
    %57 = arith.addf %51, %56 : vector<4x650xf32>
    %58 = vector.extract_strided_slice %2 {offsets = [0, 8], sizes = [4, 4], strides = [1, 1]} : vector<4x36xf32> to vector<4x4xf32>
    %59 = vector.extract_strided_slice %0 {offsets = [0, 2], sizes = [4, 650], strides = [1, 1]} : vector<4x688xf32> to vector<4x650xf32>
    %60 = vector.extract_strided_slice %58 {offsets = [0, 0], sizes = [4, 1], strides = [1, 1]} : vector<4x4xf32> to vector<4x1xf32>
    %61 = vector.extract_strided_slice %59 {offsets = [0, 0], sizes = [1, 650], strides = [1, 1]} : vector<4x650xf32> to vector<1x650xf32>
    %62 = vector.broadcast %60 : vector<4x1xf32> to vector<4x650xf32>
    %63 = vector.broadcast %61 : vector<1x650xf32> to vector<4x650xf32>
    %64 = arith.mulf %62, %63 : vector<4x650xf32>
    %65 = arith.addf %57, %64 : vector<4x650xf32>
    %66 = vector.extract_strided_slice %58 {offsets = [0, 1], sizes = [4, 1], strides = [1, 1]} : vector<4x4xf32> to vector<4x1xf32>
    %67 = vector.extract_strided_slice %59 {offsets = [1, 0], sizes = [1, 650], strides = [1, 1]} : vector<4x650xf32> to vector<1x650xf32>
    %68 = vector.broadcast %66 : vector<4x1xf32> to vector<4x650xf32>
    %69 = vector.broadcast %67 : vector<1x650xf32> to vector<4x650xf32>
    %70 = arith.mulf %68, %69 : vector<4x650xf32>
    %71 = arith.addf %65, %70 : vector<4x650xf32>
    %72 = vector.extract_strided_slice %58 {offsets = [0, 2], sizes = [4, 1], strides = [1, 1]} : vector<4x4xf32> to vector<4x1xf32>
    %73 = vector.extract_strided_slice %59 {offsets = [2, 0], sizes = [1, 650], strides = [1, 1]} : vector<4x650xf32> to vector<1x650xf32>
    %74 = vector.broadcast %72 : vector<4x1xf32> to vector<4x650xf32>
    %75 = vector.broadcast %73 : vector<1x650xf32> to vector<4x650xf32>
    %76 = arith.mulf %74, %75 : vector<4x650xf32>
    %77 = arith.addf %71, %76 : vector<4x650xf32>
    %78 = vector.extract_strided_slice %58 {offsets = [0, 3], sizes = [4, 1], strides = [1, 1]} : vector<4x4xf32> to vector<4x1xf32>
    %79 = vector.extract_strided_slice %59 {offsets = [3, 0], sizes = [1, 650], strides = [1, 1]} : vector<4x650xf32> to vector<1x650xf32>
    %80 = vector.broadcast %78 : vector<4x1xf32> to vector<4x650xf32>
    %81 = vector.broadcast %79 : vector<1x650xf32> to vector<4x650xf32>
    %82 = arith.mulf %80, %81 : vector<4x650xf32>
    %83 = arith.addf %77, %82 : vector<4x650xf32>
    %84 = vector.extract_strided_slice %2 {offsets = [0, 12], sizes = [4, 4], strides = [1, 1]} : vector<4x36xf32> to vector<4x4xf32>
    %85 = vector.extract_strided_slice %0 {offsets = [0, 18], sizes = [4, 650], strides = [1, 1]} : vector<4x688xf32> to vector<4x650xf32>
    %86 = vector.extract_strided_slice %84 {offsets = [0, 0], sizes = [4, 1], strides = [1, 1]} : vector<4x4xf32> to vector<4x1xf32>
    %87 = vector.extract_strided_slice %85 {offsets = [0, 0], sizes = [1, 650], strides = [1, 1]} : vector<4x650xf32> to vector<1x650xf32>
    %88 = vector.broadcast %86 : vector<4x1xf32> to vector<4x650xf32>
    %89 = vector.broadcast %87 : vector<1x650xf32> to vector<4x650xf32>
    %90 = arith.mulf %88, %89 : vector<4x650xf32>
    %91 = arith.addf %83, %90 : vector<4x650xf32>
    %92 = vector.extract_strided_slice %84 {offsets = [0, 1], sizes = [4, 1], strides = [1, 1]} : vector<4x4xf32> to vector<4x1xf32>
    %93 = vector.extract_strided_slice %85 {offsets = [1, 0], sizes = [1, 650], strides = [1, 1]} : vector<4x650xf32> to vector<1x650xf32>
    %94 = vector.broadcast %92 : vector<4x1xf32> to vector<4x650xf32>
    %95 = vector.broadcast %93 : vector<1x650xf32> to vector<4x650xf32>
    %96 = arith.mulf %94, %95 : vector<4x650xf32>
    %97 = arith.addf %91, %96 : vector<4x650xf32>
    %98 = vector.extract_strided_slice %84 {offsets = [0, 2], sizes = [4, 1], strides = [1, 1]} : vector<4x4xf32> to vector<4x1xf32>
    %99 = vector.extract_strided_slice %85 {offsets = [2, 0], sizes = [1, 650], strides = [1, 1]} : vector<4x650xf32> to vector<1x650xf32>
    %100 = vector.broadcast %98 : vector<4x1xf32> to vector<4x650xf32>
    %101 = vector.broadcast %99 : vector<1x650xf32> to vector<4x650xf32>
    %102 = arith.mulf %100, %101 : vector<4x650xf32>
    %103 = arith.addf %97, %102 : vector<4x650xf32>
    %104 = vector.extract_strided_slice %84 {offsets = [0, 3], sizes = [4, 1], strides = [1, 1]} : vector<4x4xf32> to vector<4x1xf32>
    %105 = vector.extract_strided_slice %85 {offsets = [3, 0], sizes = [1, 650], strides = [1, 1]} : vector<4x650xf32> to vector<1x650xf32>
    %106 = vector.broadcast %104 : vector<4x1xf32> to vector<4x650xf32>
    %107 = vector.broadcast %105 : vector<1x650xf32> to vector<4x650xf32>
    %108 = arith.mulf %106, %107 : vector<4x650xf32>
    %109 = arith.addf %103, %108 : vector<4x650xf32>
    %110 = vector.extract_strided_slice %2 {offsets = [0, 16], sizes = [4, 4], strides = [1, 1]} : vector<4x36xf32> to vector<4x4xf32>
    %111 = vector.extract_strided_slice %0 {offsets = [0, 19], sizes = [4, 650], strides = [1, 1]} : vector<4x688xf32> to vector<4x650xf32>
    %112 = vector.extract_strided_slice %110 {offsets = [0, 0], sizes = [4, 1], strides = [1, 1]} : vector<4x4xf32> to vector<4x1xf32>
    %113 = vector.extract_strided_slice %111 {offsets = [0, 0], sizes = [1, 650], strides = [1, 1]} : vector<4x650xf32> to vector<1x650xf32>
    %114 = vector.broadcast %112 : vector<4x1xf32> to vector<4x650xf32>
    %115 = vector.broadcast %113 : vector<1x650xf32> to vector<4x650xf32>
    %116 = arith.mulf %114, %115 : vector<4x650xf32>
    %117 = arith.addf %109, %116 : vector<4x650xf32>
    %118 = vector.extract_strided_slice %110 {offsets = [0, 1], sizes = [4, 1], strides = [1, 1]} : vector<4x4xf32> to vector<4x1xf32>
    %119 = vector.extract_strided_slice %111 {offsets = [1, 0], sizes = [1, 650], strides = [1, 1]} : vector<4x650xf32> to vector<1x650xf32>
    %120 = vector.broadcast %118 : vector<4x1xf32> to vector<4x650xf32>
    %121 = vector.broadcast %119 : vector<1x650xf32> to vector<4x650xf32>
    %122 = arith.mulf %120, %121 : vector<4x650xf32>
    %123 = arith.addf %117, %122 : vector<4x650xf32>
    %124 = vector.extract_strided_slice %110 {offsets = [0, 2], sizes = [4, 1], strides = [1, 1]} : vector<4x4xf32> to vector<4x1xf32>
    %125 = vector.extract_strided_slice %111 {offsets = [2, 0], sizes = [1, 650], strides = [1, 1]} : vector<4x650xf32> to vector<1x650xf32>
    %126 = vector.broadcast %124 : vector<4x1xf32> to vector<4x650xf32>
    %127 = vector.broadcast %125 : vector<1x650xf32> to vector<4x650xf32>
    %128 = arith.mulf %126, %127 : vector<4x650xf32>
    %129 = arith.addf %123, %128 : vector<4x650xf32>
    %130 = vector.extract_strided_slice %110 {offsets = [0, 3], sizes = [4, 1], strides = [1, 1]} : vector<4x4xf32> to vector<4x1xf32>
    %131 = vector.extract_strided_slice %111 {offsets = [3, 0], sizes = [1, 650], strides = [1, 1]} : vector<4x650xf32> to vector<1x650xf32>
    %132 = vector.broadcast %130 : vector<4x1xf32> to vector<4x650xf32>
    %133 = vector.broadcast %131 : vector<1x650xf32> to vector<4x650xf32>
    %134 = arith.mulf %132, %133 : vector<4x650xf32>
    %135 = arith.addf %129, %134 : vector<4x650xf32>
    %136 = vector.extract_strided_slice %2 {offsets = [0, 20], sizes = [4, 4], strides = [1, 1]} : vector<4x36xf32> to vector<4x4xf32>
    %137 = vector.extract_strided_slice %0 {offsets = [0, 20], sizes = [4, 650], strides = [1, 1]} : vector<4x688xf32> to vector<4x650xf32>
    %138 = vector.extract_strided_slice %136 {offsets = [0, 0], sizes = [4, 1], strides = [1, 1]} : vector<4x4xf32> to vector<4x1xf32>
    %139 = vector.extract_strided_slice %137 {offsets = [0, 0], sizes = [1, 650], strides = [1, 1]} : vector<4x650xf32> to vector<1x650xf32>
    %140 = vector.broadcast %138 : vector<4x1xf32> to vector<4x650xf32>
    %141 = vector.broadcast %139 : vector<1x650xf32> to vector<4x650xf32>
    %142 = arith.mulf %140, %141 : vector<4x650xf32>
    %143 = arith.addf %135, %142 : vector<4x650xf32>
    %144 = vector.extract_strided_slice %136 {offsets = [0, 1], sizes = [4, 1], strides = [1, 1]} : vector<4x4xf32> to vector<4x1xf32>
    %145 = vector.extract_strided_slice %137 {offsets = [1, 0], sizes = [1, 650], strides = [1, 1]} : vector<4x650xf32> to vector<1x650xf32>
    %146 = vector.broadcast %144 : vector<4x1xf32> to vector<4x650xf32>
    %147 = vector.broadcast %145 : vector<1x650xf32> to vector<4x650xf32>
    %148 = arith.mulf %146, %147 : vector<4x650xf32>
    %149 = arith.addf %143, %148 : vector<4x650xf32>
    %150 = vector.extract_strided_slice %136 {offsets = [0, 2], sizes = [4, 1], strides = [1, 1]} : vector<4x4xf32> to vector<4x1xf32>
    %151 = vector.extract_strided_slice %137 {offsets = [2, 0], sizes = [1, 650], strides = [1, 1]} : vector<4x650xf32> to vector<1x650xf32>
    %152 = vector.broadcast %150 : vector<4x1xf32> to vector<4x650xf32>
    %153 = vector.broadcast %151 : vector<1x650xf32> to vector<4x650xf32>
    %154 = arith.mulf %152, %153 : vector<4x650xf32>
    %155 = arith.addf %149, %154 : vector<4x650xf32>
    %156 = vector.extract_strided_slice %136 {offsets = [0, 3], sizes = [4, 1], strides = [1, 1]} : vector<4x4xf32> to vector<4x1xf32>
    %157 = vector.extract_strided_slice %137 {offsets = [3, 0], sizes = [1, 650], strides = [1, 1]} : vector<4x650xf32> to vector<1x650xf32>
    %158 = vector.broadcast %156 : vector<4x1xf32> to vector<4x650xf32>
    %159 = vector.broadcast %157 : vector<1x650xf32> to vector<4x650xf32>
    %160 = arith.mulf %158, %159 : vector<4x650xf32>
    %161 = arith.addf %155, %160 : vector<4x650xf32>
    %162 = vector.extract_strided_slice %2 {offsets = [0, 24], sizes = [4, 4], strides = [1, 1]} : vector<4x36xf32> to vector<4x4xf32>
    %163 = vector.extract_strided_slice %0 {offsets = [0, 36], sizes = [4, 650], strides = [1, 1]} : vector<4x688xf32> to vector<4x650xf32>
    %164 = vector.extract_strided_slice %162 {offsets = [0, 0], sizes = [4, 1], strides = [1, 1]} : vector<4x4xf32> to vector<4x1xf32>
    %165 = vector.extract_strided_slice %163 {offsets = [0, 0], sizes = [1, 650], strides = [1, 1]} : vector<4x650xf32> to vector<1x650xf32>
    %166 = vector.broadcast %164 : vector<4x1xf32> to vector<4x650xf32>
    %167 = vector.broadcast %165 : vector<1x650xf32> to vector<4x650xf32>
    %168 = arith.mulf %166, %167 : vector<4x650xf32>
    %169 = arith.addf %161, %168 : vector<4x650xf32>
    %170 = vector.extract_strided_slice %162 {offsets = [0, 1], sizes = [4, 1], strides = [1, 1]} : vector<4x4xf32> to vector<4x1xf32>
    %171 = vector.extract_strided_slice %163 {offsets = [1, 0], sizes = [1, 650], strides = [1, 1]} : vector<4x650xf32> to vector<1x650xf32>
    %172 = vector.broadcast %170 : vector<4x1xf32> to vector<4x650xf32>
    %173 = vector.broadcast %171 : vector<1x650xf32> to vector<4x650xf32>
    %174 = arith.mulf %172, %173 : vector<4x650xf32>
    %175 = arith.addf %169, %174 : vector<4x650xf32>
    %176 = vector.extract_strided_slice %162 {offsets = [0, 2], sizes = [4, 1], strides = [1, 1]} : vector<4x4xf32> to vector<4x1xf32>
    %177 = vector.extract_strided_slice %163 {offsets = [2, 0], sizes = [1, 650], strides = [1, 1]} : vector<4x650xf32> to vector<1x650xf32>
    %178 = vector.broadcast %176 : vector<4x1xf32> to vector<4x650xf32>
    %179 = vector.broadcast %177 : vector<1x650xf32> to vector<4x650xf32>
    %180 = arith.mulf %178, %179 : vector<4x650xf32>
    %181 = arith.addf %175, %180 : vector<4x650xf32>
    %182 = vector.extract_strided_slice %162 {offsets = [0, 3], sizes = [4, 1], strides = [1, 1]} : vector<4x4xf32> to vector<4x1xf32>
    %183 = vector.extract_strided_slice %163 {offsets = [3, 0], sizes = [1, 650], strides = [1, 1]} : vector<4x650xf32> to vector<1x650xf32>
    %184 = vector.broadcast %182 : vector<4x1xf32> to vector<4x650xf32>
    %185 = vector.broadcast %183 : vector<1x650xf32> to vector<4x650xf32>
    %186 = arith.mulf %184, %185 : vector<4x650xf32>
    %187 = arith.addf %181, %186 : vector<4x650xf32>
    %188 = vector.extract_strided_slice %2 {offsets = [0, 28], sizes = [4, 4], strides = [1, 1]} : vector<4x36xf32> to vector<4x4xf32>
    %189 = vector.extract_strided_slice %0 {offsets = [0, 37], sizes = [4, 650], strides = [1, 1]} : vector<4x688xf32> to vector<4x650xf32>
    %190 = vector.extract_strided_slice %188 {offsets = [0, 0], sizes = [4, 1], strides = [1, 1]} : vector<4x4xf32> to vector<4x1xf32>
    %191 = vector.extract_strided_slice %189 {offsets = [0, 0], sizes = [1, 650], strides = [1, 1]} : vector<4x650xf32> to vector<1x650xf32>
    %192 = vector.broadcast %190 : vector<4x1xf32> to vector<4x650xf32>
    %193 = vector.broadcast %191 : vector<1x650xf32> to vector<4x650xf32>
    %194 = arith.mulf %192, %193 : vector<4x650xf32>
    %195 = arith.addf %187, %194 : vector<4x650xf32>
    %196 = vector.extract_strided_slice %188 {offsets = [0, 1], sizes = [4, 1], strides = [1, 1]} : vector<4x4xf32> to vector<4x1xf32>
    %197 = vector.extract_strided_slice %189 {offsets = [1, 0], sizes = [1, 650], strides = [1, 1]} : vector<4x650xf32> to vector<1x650xf32>
    %198 = vector.broadcast %196 : vector<4x1xf32> to vector<4x650xf32>
    %199 = vector.broadcast %197 : vector<1x650xf32> to vector<4x650xf32>
    %200 = arith.mulf %198, %199 : vector<4x650xf32>
    %201 = arith.addf %195, %200 : vector<4x650xf32>
    %202 = vector.extract_strided_slice %188 {offsets = [0, 2], sizes = [4, 1], strides = [1, 1]} : vector<4x4xf32> to vector<4x1xf32>
    %203 = vector.extract_strided_slice %189 {offsets = [2, 0], sizes = [1, 650], strides = [1, 1]} : vector<4x650xf32> to vector<1x650xf32>
    %204 = vector.broadcast %202 : vector<4x1xf32> to vector<4x650xf32>
    %205 = vector.broadcast %203 : vector<1x650xf32> to vector<4x650xf32>
    %206 = arith.mulf %204, %205 : vector<4x650xf32>
    %207 = arith.addf %201, %206 : vector<4x650xf32>
    %208 = vector.extract_strided_slice %188 {offsets = [0, 3], sizes = [4, 1], strides = [1, 1]} : vector<4x4xf32> to vector<4x1xf32>
    %209 = vector.extract_strided_slice %189 {offsets = [3, 0], sizes = [1, 650], strides = [1, 1]} : vector<4x650xf32> to vector<1x650xf32>
    %210 = vector.broadcast %208 : vector<4x1xf32> to vector<4x650xf32>
    %211 = vector.broadcast %209 : vector<1x650xf32> to vector<4x650xf32>
    %212 = arith.mulf %210, %211 : vector<4x650xf32>
    %213 = arith.addf %207, %212 : vector<4x650xf32>
    %214 = vector.extract_strided_slice %2 {offsets = [0, 32], sizes = [4, 4], strides = [1, 1]} : vector<4x36xf32> to vector<4x4xf32>
    %215 = vector.extract_strided_slice %0 {offsets = [0, 38], sizes = [4, 650], strides = [1, 1]} : vector<4x688xf32> to vector<4x650xf32>
    %216 = vector.extract_strided_slice %214 {offsets = [0, 0], sizes = [4, 1], strides = [1, 1]} : vector<4x4xf32> to vector<4x1xf32>
    %217 = vector.extract_strided_slice %215 {offsets = [0, 0], sizes = [1, 650], strides = [1, 1]} : vector<4x650xf32> to vector<1x650xf32>
    %218 = vector.broadcast %216 : vector<4x1xf32> to vector<4x650xf32>
    %219 = vector.broadcast %217 : vector<1x650xf32> to vector<4x650xf32>
    %220 = arith.mulf %218, %219 : vector<4x650xf32>
    %221 = arith.addf %213, %220 : vector<4x650xf32>
    %222 = vector.extract_strided_slice %214 {offsets = [0, 1], sizes = [4, 1], strides = [1, 1]} : vector<4x4xf32> to vector<4x1xf32>
    %223 = vector.extract_strided_slice %215 {offsets = [1, 0], sizes = [1, 650], strides = [1, 1]} : vector<4x650xf32> to vector<1x650xf32>
    %224 = vector.broadcast %222 : vector<4x1xf32> to vector<4x650xf32>
    %225 = vector.broadcast %223 : vector<1x650xf32> to vector<4x650xf32>
    %226 = arith.mulf %224, %225 : vector<4x650xf32>
    %227 = arith.addf %221, %226 : vector<4x650xf32>
    %228 = vector.extract_strided_slice %214 {offsets = [0, 2], sizes = [4, 1], strides = [1, 1]} : vector<4x4xf32> to vector<4x1xf32>
    %229 = vector.extract_strided_slice %215 {offsets = [2, 0], sizes = [1, 650], strides = [1, 1]} : vector<4x650xf32> to vector<1x650xf32>
    %230 = vector.broadcast %228 : vector<4x1xf32> to vector<4x650xf32>
    %231 = vector.broadcast %229 : vector<1x650xf32> to vector<4x650xf32>
    %232 = arith.mulf %230, %231 : vector<4x650xf32>
    %233 = arith.addf %227, %232 : vector<4x650xf32>
    %234 = vector.extract_strided_slice %214 {offsets = [0, 3], sizes = [4, 1], strides = [1, 1]} : vector<4x4xf32> to vector<4x1xf32>
    %235 = vector.extract_strided_slice %215 {offsets = [3, 0], sizes = [1, 650], strides = [1, 1]} : vector<4x650xf32> to vector<1x650xf32>
    %236 = vector.broadcast %234 : vector<4x1xf32> to vector<4x650xf32>
    %237 = vector.broadcast %235 : vector<1x650xf32> to vector<4x650xf32>
    %238 = arith.mulf %236, %237 : vector<4x650xf32>
    %239 = arith.addf %233, %238 : vector<4x650xf32>
    %240 = vector.broadcast %1 : vector<1x650xf32> to vector<4x650xf32>
    %241 = arith.mulf %239, %240 : vector<4x650xf32>
    %cst_9 = arith.constant dense<0.000000e+00> : vector<4xf32>
    %242 = vector.multi_reduction <add>, %241, %cst_9 [1] : vector<4x650xf32> to vector<4xf32>
    %243 = vector.shape_cast %242 : vector<4xf32> to vector<4x1xf32>
    %cst_10 = arith.constant 0.001953125 : f32
    %244 = vector.broadcast %cst_10 : f32 to vector<4x1xf32>
    %245 = arith.mulf %243, %244 : vector<4x1xf32>
    %246 = arith.mulf %241, %241 : vector<4x650xf32>
    %cst_11 = arith.constant dense<0.000000e+00> : vector<4xf32>
    %247 = vector.multi_reduction <add>, %246, %cst_11 [1] : vector<4x650xf32> to vector<4xf32>
    %248 = vector.shape_cast %247 : vector<4xf32> to vector<4x1xf32>
    %cst_12 = arith.constant 0.001953125 : f32
    %249 = vector.broadcast %cst_12 : f32 to vector<4x1xf32>
    %250 = arith.mulf %248, %249 : vector<4x1xf32>
    %251 = arith.mulf %245, %245 : vector<4x1xf32>
    %252 = arith.subf %250, %251 : vector<4x1xf32>
    %253 = vector.extract_strided_slice %4 {offsets = [0, 0], sizes = [4, 1], strides = [1, 1]} : vector<4x4xf32> to vector<4x1xf32>
    %cst_13 = arith.constant 9.99999974E-6 : f32
    %254 = vector.broadcast %cst_13 : f32 to vector<4x1xf32>
    %255 = arith.addf %252, %254 : vector<4x1xf32>
    %256 = math.rsqrt %255 : vector<4x1xf32>
    %257 = arith.mulf %253, %256 : vector<4x1xf32>
    %258 = vector.extract_strided_slice %4 {offsets = [0, 1], sizes = [4, 1], strides = [1, 1]} : vector<4x4xf32> to vector<4x1xf32>
    %259 = arith.mulf %245, %257 : vector<4x1xf32>
    %260 = arith.subf %258, %259 : vector<4x1xf32>
    %261 = vector.broadcast %257 : vector<4x1xf32> to vector<4x650xf32>
    %262 = arith.mulf %239, %261 : vector<4x650xf32>
    %263 = vector.broadcast %260 : vector<4x1xf32> to vector<4x650xf32>
    %264 = arith.addf %262, %263 : vector<4x650xf32>
    %cst_14 = arith.constant 0.000000e+00 : f32
    %265 = vector.broadcast %cst_14 : f32 to vector<4x650xf32>
    %266 = arith.cmpf ogt, %264, %265 : vector<4x650xf32>
    %cst_15 = arith.constant 0.00999999977 : f32
    %267 = vector.broadcast %cst_15 : f32 to vector<4x650xf32>
    %268 = arith.mulf %267, %264 : vector<4x650xf32>
    %269 = arith.select %266, %264, %268 : vector<4x650xi1>, vector<4x650xf32>
    %270 = vector.broadcast %1 : vector<1x650xf32> to vector<4x650xf32>
    %271 = arith.mulf %269, %270 : vector<4x650xf32>
    %cst_16 = arith.constant 0.000000e+00 : f32
    %272 = vector.broadcast %cst_16 : f32 to vector<4x612xf32>
    %273 = vector.extract_strided_slice %3 {offsets = [0, 0], sizes = [4, 4], strides = [1, 1]} : vector<4x36xf32> to vector<4x4xf32>
    %274 = vector.extract_strided_slice %271 {offsets = [0, 0], sizes = [4, 612], strides = [1, 1]} : vector<4x650xf32> to vector<4x612xf32>
    %275 = vector.extract_strided_slice %273 {offsets = [0, 0], sizes = [4, 1], strides = [1, 1]} : vector<4x4xf32> to vector<4x1xf32>
    %276 = vector.extract_strided_slice %274 {offsets = [0, 0], sizes = [1, 612], strides = [1, 1]} : vector<4x612xf32> to vector<1x612xf32>
    %277 = vector.broadcast %275 : vector<4x1xf32> to vector<4x612xf32>
    %278 = vector.broadcast %276 : vector<1x612xf32> to vector<4x612xf32>
    %279 = arith.mulf %277, %278 : vector<4x612xf32>
    %280 = arith.addf %272, %279 : vector<4x612xf32>
    %281 = vector.extract_strided_slice %273 {offsets = [0, 1], sizes = [4, 1], strides = [1, 1]} : vector<4x4xf32> to vector<4x1xf32>
    %282 = vector.extract_strided_slice %274 {offsets = [1, 0], sizes = [1, 612], strides = [1, 1]} : vector<4x612xf32> to vector<1x612xf32>
    %283 = vector.broadcast %281 : vector<4x1xf32> to vector<4x612xf32>
    %284 = vector.broadcast %282 : vector<1x612xf32> to vector<4x612xf32>
    %285 = arith.mulf %283, %284 : vector<4x612xf32>
    %286 = arith.addf %280, %285 : vector<4x612xf32>
    %287 = vector.extract_strided_slice %273 {offsets = [0, 2], sizes = [4, 1], strides = [1, 1]} : vector<4x4xf32> to vector<4x1xf32>
    %288 = vector.extract_strided_slice %274 {offsets = [2, 0], sizes = [1, 612], strides = [1, 1]} : vector<4x612xf32> to vector<1x612xf32>
    %289 = vector.broadcast %287 : vector<4x1xf32> to vector<4x612xf32>
    %290 = vector.broadcast %288 : vector<1x612xf32> to vector<4x612xf32>
    %291 = arith.mulf %289, %290 : vector<4x612xf32>
    %292 = arith.addf %286, %291 : vector<4x612xf32>
    %293 = vector.extract_strided_slice %273 {offsets = [0, 3], sizes = [4, 1], strides = [1, 1]} : vector<4x4xf32> to vector<4x1xf32>
    %294 = vector.extract_strided_slice %274 {offsets = [3, 0], sizes = [1, 612], strides = [1, 1]} : vector<4x612xf32> to vector<1x612xf32>
    %295 = vector.broadcast %293 : vector<4x1xf32> to vector<4x612xf32>
    %296 = vector.broadcast %294 : vector<1x612xf32> to vector<4x612xf32>
    %297 = arith.mulf %295, %296 : vector<4x612xf32>
    %298 = arith.addf %292, %297 : vector<4x612xf32>
    %299 = vector.extract_strided_slice %3 {offsets = [0, 4], sizes = [4, 4], strides = [1, 1]} : vector<4x36xf32> to vector<4x4xf32>
    %300 = vector.extract_strided_slice %271 {offsets = [0, 1], sizes = [4, 612], strides = [1, 1]} : vector<4x650xf32> to vector<4x612xf32>
    %301 = vector.extract_strided_slice %299 {offsets = [0, 0], sizes = [4, 1], strides = [1, 1]} : vector<4x4xf32> to vector<4x1xf32>
    %302 = vector.extract_strided_slice %300 {offsets = [0, 0], sizes = [1, 612], strides = [1, 1]} : vector<4x612xf32> to vector<1x612xf32>
    %303 = vector.broadcast %301 : vector<4x1xf32> to vector<4x612xf32>
    %304 = vector.broadcast %302 : vector<1x612xf32> to vector<4x612xf32>
    %305 = arith.mulf %303, %304 : vector<4x612xf32>
    %306 = arith.addf %298, %305 : vector<4x612xf32>
    %307 = vector.extract_strided_slice %299 {offsets = [0, 1], sizes = [4, 1], strides = [1, 1]} : vector<4x4xf32> to vector<4x1xf32>
    %308 = vector.extract_strided_slice %300 {offsets = [1, 0], sizes = [1, 612], strides = [1, 1]} : vector<4x612xf32> to vector<1x612xf32>
    %309 = vector.broadcast %307 : vector<4x1xf32> to vector<4x612xf32>
    %310 = vector.broadcast %308 : vector<1x612xf32> to vector<4x612xf32>
    %311 = arith.mulf %309, %310 : vector<4x612xf32>
    %312 = arith.addf %306, %311 : vector<4x612xf32>
    %313 = vector.extract_strided_slice %299 {offsets = [0, 2], sizes = [4, 1], strides = [1, 1]} : vector<4x4xf32> to vector<4x1xf32>
    %314 = vector.extract_strided_slice %300 {offsets = [2, 0], sizes = [1, 612], strides = [1, 1]} : vector<4x612xf32> to vector<1x612xf32>
    %315 = vector.broadcast %313 : vector<4x1xf32> to vector<4x612xf32>
    %316 = vector.broadcast %314 : vector<1x612xf32> to vector<4x612xf32>
    %317 = arith.mulf %315, %316 : vector<4x612xf32>
    %318 = arith.addf %312, %317 : vector<4x612xf32>
    %319 = vector.extract_strided_slice %299 {offsets = [0, 3], sizes = [4, 1], strides = [1, 1]} : vector<4x4xf32> to vector<4x1xf32>
    %320 = vector.extract_strided_slice %300 {offsets = [3, 0], sizes = [1, 612], strides = [1, 1]} : vector<4x612xf32> to vector<1x612xf32>
    %321 = vector.broadcast %319 : vector<4x1xf32> to vector<4x612xf32>
    %322 = vector.broadcast %320 : vector<1x612xf32> to vector<4x612xf32>
    %323 = arith.mulf %321, %322 : vector<4x612xf32>
    %324 = arith.addf %318, %323 : vector<4x612xf32>
    %325 = vector.extract_strided_slice %3 {offsets = [0, 8], sizes = [4, 4], strides = [1, 1]} : vector<4x36xf32> to vector<4x4xf32>
    %326 = vector.extract_strided_slice %271 {offsets = [0, 2], sizes = [4, 612], strides = [1, 1]} : vector<4x650xf32> to vector<4x612xf32>
    %327 = vector.extract_strided_slice %325 {offsets = [0, 0], sizes = [4, 1], strides = [1, 1]} : vector<4x4xf32> to vector<4x1xf32>
    %328 = vector.extract_strided_slice %326 {offsets = [0, 0], sizes = [1, 612], strides = [1, 1]} : vector<4x612xf32> to vector<1x612xf32>
    %329 = vector.broadcast %327 : vector<4x1xf32> to vector<4x612xf32>
    %330 = vector.broadcast %328 : vector<1x612xf32> to vector<4x612xf32>
    %331 = arith.mulf %329, %330 : vector<4x612xf32>
    %332 = arith.addf %324, %331 : vector<4x612xf32>
    %333 = vector.extract_strided_slice %325 {offsets = [0, 1], sizes = [4, 1], strides = [1, 1]} : vector<4x4xf32> to vector<4x1xf32>
    %334 = vector.extract_strided_slice %326 {offsets = [1, 0], sizes = [1, 612], strides = [1, 1]} : vector<4x612xf32> to vector<1x612xf32>
    %335 = vector.broadcast %333 : vector<4x1xf32> to vector<4x612xf32>
    %336 = vector.broadcast %334 : vector<1x612xf32> to vector<4x612xf32>
    %337 = arith.mulf %335, %336 : vector<4x612xf32>
    %338 = arith.addf %332, %337 : vector<4x612xf32>
    %339 = vector.extract_strided_slice %325 {offsets = [0, 2], sizes = [4, 1], strides = [1, 1]} : vector<4x4xf32> to vector<4x1xf32>
    %340 = vector.extract_strided_slice %326 {offsets = [2, 0], sizes = [1, 612], strides = [1, 1]} : vector<4x612xf32> to vector<1x612xf32>
    %341 = vector.broadcast %339 : vector<4x1xf32> to vector<4x612xf32>
    %342 = vector.broadcast %340 : vector<1x612xf32> to vector<4x612xf32>
    %343 = arith.mulf %341, %342 : vector<4x612xf32>
    %344 = arith.addf %338, %343 : vector<4x612xf32>
    %345 = vector.extract_strided_slice %325 {offsets = [0, 3], sizes = [4, 1], strides = [1, 1]} : vector<4x4xf32> to vector<4x1xf32>
    %346 = vector.extract_strided_slice %326 {offsets = [3, 0], sizes = [1, 612], strides = [1, 1]} : vector<4x612xf32> to vector<1x612xf32>
    %347 = vector.broadcast %345 : vector<4x1xf32> to vector<4x612xf32>
    %348 = vector.broadcast %346 : vector<1x612xf32> to vector<4x612xf32>
    %349 = arith.mulf %347, %348 : vector<4x612xf32>
    %350 = arith.addf %344, %349 : vector<4x612xf32>
    %351 = vector.extract_strided_slice %3 {offsets = [0, 12], sizes = [4, 4], strides = [1, 1]} : vector<4x36xf32> to vector<4x4xf32>
    %352 = vector.extract_strided_slice %271 {offsets = [0, 18], sizes = [4, 612], strides = [1, 1]} : vector<4x650xf32> to vector<4x612xf32>
    %353 = vector.extract_strided_slice %351 {offsets = [0, 0], sizes = [4, 1], strides = [1, 1]} : vector<4x4xf32> to vector<4x1xf32>
    %354 = vector.extract_strided_slice %352 {offsets = [0, 0], sizes = [1, 612], strides = [1, 1]} : vector<4x612xf32> to vector<1x612xf32>
    %355 = vector.broadcast %353 : vector<4x1xf32> to vector<4x612xf32>
    %356 = vector.broadcast %354 : vector<1x612xf32> to vector<4x612xf32>
    %357 = arith.mulf %355, %356 : vector<4x612xf32>
    %358 = arith.addf %350, %357 : vector<4x612xf32>
    %359 = vector.extract_strided_slice %351 {offsets = [0, 1], sizes = [4, 1], strides = [1, 1]} : vector<4x4xf32> to vector<4x1xf32>
    %360 = vector.extract_strided_slice %352 {offsets = [1, 0], sizes = [1, 612], strides = [1, 1]} : vector<4x612xf32> to vector<1x612xf32>
    %361 = vector.broadcast %359 : vector<4x1xf32> to vector<4x612xf32>
    %362 = vector.broadcast %360 : vector<1x612xf32> to vector<4x612xf32>
    %363 = arith.mulf %361, %362 : vector<4x612xf32>
    %364 = arith.addf %358, %363 : vector<4x612xf32>
    %365 = vector.extract_strided_slice %351 {offsets = [0, 2], sizes = [4, 1], strides = [1, 1]} : vector<4x4xf32> to vector<4x1xf32>
    %366 = vector.extract_strided_slice %352 {offsets = [2, 0], sizes = [1, 612], strides = [1, 1]} : vector<4x612xf32> to vector<1x612xf32>
    %367 = vector.broadcast %365 : vector<4x1xf32> to vector<4x612xf32>
    %368 = vector.broadcast %366 : vector<1x612xf32> to vector<4x612xf32>
    %369 = arith.mulf %367, %368 : vector<4x612xf32>
    %370 = arith.addf %364, %369 : vector<4x612xf32>
    %371 = vector.extract_strided_slice %351 {offsets = [0, 3], sizes = [4, 1], strides = [1, 1]} : vector<4x4xf32> to vector<4x1xf32>
    %372 = vector.extract_strided_slice %352 {offsets = [3, 0], sizes = [1, 612], strides = [1, 1]} : vector<4x612xf32> to vector<1x612xf32>
    %373 = vector.broadcast %371 : vector<4x1xf32> to vector<4x612xf32>
    %374 = vector.broadcast %372 : vector<1x612xf32> to vector<4x612xf32>
    %375 = arith.mulf %373, %374 : vector<4x612xf32>
    %376 = arith.addf %370, %375 : vector<4x612xf32>
    %377 = vector.extract_strided_slice %3 {offsets = [0, 16], sizes = [4, 4], strides = [1, 1]} : vector<4x36xf32> to vector<4x4xf32>
    %378 = vector.extract_strided_slice %271 {offsets = [0, 19], sizes = [4, 612], strides = [1, 1]} : vector<4x650xf32> to vector<4x612xf32>
    %379 = vector.extract_strided_slice %377 {offsets = [0, 0], sizes = [4, 1], strides = [1, 1]} : vector<4x4xf32> to vector<4x1xf32>
    %380 = vector.extract_strided_slice %378 {offsets = [0, 0], sizes = [1, 612], strides = [1, 1]} : vector<4x612xf32> to vector<1x612xf32>
    %381 = vector.broadcast %379 : vector<4x1xf32> to vector<4x612xf32>
    %382 = vector.broadcast %380 : vector<1x612xf32> to vector<4x612xf32>
    %383 = arith.mulf %381, %382 : vector<4x612xf32>
    %384 = arith.addf %376, %383 : vector<4x612xf32>
    %385 = vector.extract_strided_slice %377 {offsets = [0, 1], sizes = [4, 1], strides = [1, 1]} : vector<4x4xf32> to vector<4x1xf32>
    %386 = vector.extract_strided_slice %378 {offsets = [1, 0], sizes = [1, 612], strides = [1, 1]} : vector<4x612xf32> to vector<1x612xf32>
    %387 = vector.broadcast %385 : vector<4x1xf32> to vector<4x612xf32>
    %388 = vector.broadcast %386 : vector<1x612xf32> to vector<4x612xf32>
    %389 = arith.mulf %387, %388 : vector<4x612xf32>
    %390 = arith.addf %384, %389 : vector<4x612xf32>
    %391 = vector.extract_strided_slice %377 {offsets = [0, 2], sizes = [4, 1], strides = [1, 1]} : vector<4x4xf32> to vector<4x1xf32>
    %392 = vector.extract_strided_slice %378 {offsets = [2, 0], sizes = [1, 612], strides = [1, 1]} : vector<4x612xf32> to vector<1x612xf32>
    %393 = vector.broadcast %391 : vector<4x1xf32> to vector<4x612xf32>
    %394 = vector.broadcast %392 : vector<1x612xf32> to vector<4x612xf32>
    %395 = arith.mulf %393, %394 : vector<4x612xf32>
    %396 = arith.addf %390, %395 : vector<4x612xf32>
    %397 = vector.extract_strided_slice %377 {offsets = [0, 3], sizes = [4, 1], strides = [1, 1]} : vector<4x4xf32> to vector<4x1xf32>
    %398 = vector.extract_strided_slice %378 {offsets = [3, 0], sizes = [1, 612], strides = [1, 1]} : vector<4x612xf32> to vector<1x612xf32>
    %399 = vector.broadcast %397 : vector<4x1xf32> to vector<4x612xf32>
    %400 = vector.broadcast %398 : vector<1x612xf32> to vector<4x612xf32>
    %401 = arith.mulf %399, %400 : vector<4x612xf32>
    %402 = arith.addf %396, %401 : vector<4x612xf32>
    %403 = vector.extract_strided_slice %3 {offsets = [0, 20], sizes = [4, 4], strides = [1, 1]} : vector<4x36xf32> to vector<4x4xf32>
    %404 = vector.extract_strided_slice %271 {offsets = [0, 20], sizes = [4, 612], strides = [1, 1]} : vector<4x650xf32> to vector<4x612xf32>
    %405 = vector.extract_strided_slice %403 {offsets = [0, 0], sizes = [4, 1], strides = [1, 1]} : vector<4x4xf32> to vector<4x1xf32>
    %406 = vector.extract_strided_slice %404 {offsets = [0, 0], sizes = [1, 612], strides = [1, 1]} : vector<4x612xf32> to vector<1x612xf32>
    %407 = vector.broadcast %405 : vector<4x1xf32> to vector<4x612xf32>
    %408 = vector.broadcast %406 : vector<1x612xf32> to vector<4x612xf32>
    %409 = arith.mulf %407, %408 : vector<4x612xf32>
    %410 = arith.addf %402, %409 : vector<4x612xf32>
    %411 = vector.extract_strided_slice %403 {offsets = [0, 1], sizes = [4, 1], strides = [1, 1]} : vector<4x4xf32> to vector<4x1xf32>
    %412 = vector.extract_strided_slice %404 {offsets = [1, 0], sizes = [1, 612], strides = [1, 1]} : vector<4x612xf32> to vector<1x612xf32>
    %413 = vector.broadcast %411 : vector<4x1xf32> to vector<4x612xf32>
    %414 = vector.broadcast %412 : vector<1x612xf32> to vector<4x612xf32>
    %415 = arith.mulf %413, %414 : vector<4x612xf32>
    %416 = arith.addf %410, %415 : vector<4x612xf32>
    %417 = vector.extract_strided_slice %403 {offsets = [0, 2], sizes = [4, 1], strides = [1, 1]} : vector<4x4xf32> to vector<4x1xf32>
    %418 = vector.extract_strided_slice %404 {offsets = [2, 0], sizes = [1, 612], strides = [1, 1]} : vector<4x612xf32> to vector<1x612xf32>
    %419 = vector.broadcast %417 : vector<4x1xf32> to vector<4x612xf32>
    %420 = vector.broadcast %418 : vector<1x612xf32> to vector<4x612xf32>
    %421 = arith.mulf %419, %420 : vector<4x612xf32>
    %422 = arith.addf %416, %421 : vector<4x612xf32>
    %423 = vector.extract_strided_slice %403 {offsets = [0, 3], sizes = [4, 1], strides = [1, 1]} : vector<4x4xf32> to vector<4x1xf32>
    %424 = vector.extract_strided_slice %404 {offsets = [3, 0], sizes = [1, 612], strides = [1, 1]} : vector<4x612xf32> to vector<1x612xf32>
    %425 = vector.broadcast %423 : vector<4x1xf32> to vector<4x612xf32>
    %426 = vector.broadcast %424 : vector<1x612xf32> to vector<4x612xf32>
    %427 = arith.mulf %425, %426 : vector<4x612xf32>
    %428 = arith.addf %422, %427 : vector<4x612xf32>
    %429 = vector.extract_strided_slice %3 {offsets = [0, 24], sizes = [4, 4], strides = [1, 1]} : vector<4x36xf32> to vector<4x4xf32>
    %430 = vector.extract_strided_slice %271 {offsets = [0, 36], sizes = [4, 612], strides = [1, 1]} : vector<4x650xf32> to vector<4x612xf32>
    %431 = vector.extract_strided_slice %429 {offsets = [0, 0], sizes = [4, 1], strides = [1, 1]} : vector<4x4xf32> to vector<4x1xf32>
    %432 = vector.extract_strided_slice %430 {offsets = [0, 0], sizes = [1, 612], strides = [1, 1]} : vector<4x612xf32> to vector<1x612xf32>
    %433 = vector.broadcast %431 : vector<4x1xf32> to vector<4x612xf32>
    %434 = vector.broadcast %432 : vector<1x612xf32> to vector<4x612xf32>
    %435 = arith.mulf %433, %434 : vector<4x612xf32>
    %436 = arith.addf %428, %435 : vector<4x612xf32>
    %437 = vector.extract_strided_slice %429 {offsets = [0, 1], sizes = [4, 1], strides = [1, 1]} : vector<4x4xf32> to vector<4x1xf32>
    %438 = vector.extract_strided_slice %430 {offsets = [1, 0], sizes = [1, 612], strides = [1, 1]} : vector<4x612xf32> to vector<1x612xf32>
    %439 = vector.broadcast %437 : vector<4x1xf32> to vector<4x612xf32>
    %440 = vector.broadcast %438 : vector<1x612xf32> to vector<4x612xf32>
    %441 = arith.mulf %439, %440 : vector<4x612xf32>
    %442 = arith.addf %436, %441 : vector<4x612xf32>
    %443 = vector.extract_strided_slice %429 {offsets = [0, 2], sizes = [4, 1], strides = [1, 1]} : vector<4x4xf32> to vector<4x1xf32>
    %444 = vector.extract_strided_slice %430 {offsets = [2, 0], sizes = [1, 612], strides = [1, 1]} : vector<4x612xf32> to vector<1x612xf32>
    %445 = vector.broadcast %443 : vector<4x1xf32> to vector<4x612xf32>
    %446 = vector.broadcast %444 : vector<1x612xf32> to vector<4x612xf32>
    %447 = arith.mulf %445, %446 : vector<4x612xf32>
    %448 = arith.addf %442, %447 : vector<4x612xf32>
    %449 = vector.extract_strided_slice %429 {offsets = [0, 3], sizes = [4, 1], strides = [1, 1]} : vector<4x4xf32> to vector<4x1xf32>
    %450 = vector.extract_strided_slice %430 {offsets = [3, 0], sizes = [1, 612], strides = [1, 1]} : vector<4x612xf32> to vector<1x612xf32>
    %451 = vector.broadcast %449 : vector<4x1xf32> to vector<4x612xf32>
    %452 = vector.broadcast %450 : vector<1x612xf32> to vector<4x612xf32>
    %453 = arith.mulf %451, %452 : vector<4x612xf32>
    %454 = arith.addf %448, %453 : vector<4x612xf32>
    %455 = vector.extract_strided_slice %3 {offsets = [0, 28], sizes = [4, 4], strides = [1, 1]} : vector<4x36xf32> to vector<4x4xf32>
    %456 = vector.extract_strided_slice %271 {offsets = [0, 37], sizes = [4, 612], strides = [1, 1]} : vector<4x650xf32> to vector<4x612xf32>
    %457 = vector.extract_strided_slice %455 {offsets = [0, 0], sizes = [4, 1], strides = [1, 1]} : vector<4x4xf32> to vector<4x1xf32>
    %458 = vector.extract_strided_slice %456 {offsets = [0, 0], sizes = [1, 612], strides = [1, 1]} : vector<4x612xf32> to vector<1x612xf32>
    %459 = vector.broadcast %457 : vector<4x1xf32> to vector<4x612xf32>
    %460 = vector.broadcast %458 : vector<1x612xf32> to vector<4x612xf32>
    %461 = arith.mulf %459, %460 : vector<4x612xf32>
    %462 = arith.addf %454, %461 : vector<4x612xf32>
    %463 = vector.extract_strided_slice %455 {offsets = [0, 1], sizes = [4, 1], strides = [1, 1]} : vector<4x4xf32> to vector<4x1xf32>
    %464 = vector.extract_strided_slice %456 {offsets = [1, 0], sizes = [1, 612], strides = [1, 1]} : vector<4x612xf32> to vector<1x612xf32>
    %465 = vector.broadcast %463 : vector<4x1xf32> to vector<4x612xf32>
    %466 = vector.broadcast %464 : vector<1x612xf32> to vector<4x612xf32>
    %467 = arith.mulf %465, %466 : vector<4x612xf32>
    %468 = arith.addf %462, %467 : vector<4x612xf32>
    %469 = vector.extract_strided_slice %455 {offsets = [0, 2], sizes = [4, 1], strides = [1, 1]} : vector<4x4xf32> to vector<4x1xf32>
    %470 = vector.extract_strided_slice %456 {offsets = [2, 0], sizes = [1, 612], strides = [1, 1]} : vector<4x612xf32> to vector<1x612xf32>
    %471 = vector.broadcast %469 : vector<4x1xf32> to vector<4x612xf32>
    %472 = vector.broadcast %470 : vector<1x612xf32> to vector<4x612xf32>
    %473 = arith.mulf %471, %472 : vector<4x612xf32>
    %474 = arith.addf %468, %473 : vector<4x612xf32>
    %475 = vector.extract_strided_slice %455 {offsets = [0, 3], sizes = [4, 1], strides = [1, 1]} : vector<4x4xf32> to vector<4x1xf32>
    %476 = vector.extract_strided_slice %456 {offsets = [3, 0], sizes = [1, 612], strides = [1, 1]} : vector<4x612xf32> to vector<1x612xf32>
    %477 = vector.broadcast %475 : vector<4x1xf32> to vector<4x612xf32>
    %478 = vector.broadcast %476 : vector<1x612xf32> to vector<4x612xf32>
    %479 = arith.mulf %477, %478 : vector<4x612xf32>
    %480 = arith.addf %474, %479 : vector<4x612xf32>
    %481 = vector.extract_strided_slice %3 {offsets = [0, 32], sizes = [4, 4], strides = [1, 1]} : vector<4x36xf32> to vector<4x4xf32>
    %482 = vector.extract_strided_slice %271 {offsets = [0, 38], sizes = [4, 612], strides = [1, 1]} : vector<4x650xf32> to vector<4x612xf32>
    %483 = vector.extract_strided_slice %481 {offsets = [0, 0], sizes = [4, 1], strides = [1, 1]} : vector<4x4xf32> to vector<4x1xf32>
    %484 = vector.extract_strided_slice %482 {offsets = [0, 0], sizes = [1, 612], strides = [1, 1]} : vector<4x612xf32> to vector<1x612xf32>
    %485 = vector.broadcast %483 : vector<4x1xf32> to vector<4x612xf32>
    %486 = vector.broadcast %484 : vector<1x612xf32> to vector<4x612xf32>
    %487 = arith.mulf %485, %486 : vector<4x612xf32>
    %488 = arith.addf %480, %487 : vector<4x612xf32>
    %489 = vector.extract_strided_slice %481 {offsets = [0, 1], sizes = [4, 1], strides = [1, 1]} : vector<4x4xf32> to vector<4x1xf32>
    %490 = vector.extract_strided_slice %482 {offsets = [1, 0], sizes = [1, 612], strides = [1, 1]} : vector<4x612xf32> to vector<1x612xf32>
    %491 = vector.broadcast %489 : vector<4x1xf32> to vector<4x612xf32>
    %492 = vector.broadcast %490 : vector<1x612xf32> to vector<4x612xf32>
    %493 = arith.mulf %491, %492 : vector<4x612xf32>
    %494 = arith.addf %488, %493 : vector<4x612xf32>
    %495 = vector.extract_strided_slice %481 {offsets = [0, 2], sizes = [4, 1], strides = [1, 1]} : vector<4x4xf32> to vector<4x1xf32>
    %496 = vector.extract_strided_slice %482 {offsets = [2, 0], sizes = [1, 612], strides = [1, 1]} : vector<4x612xf32> to vector<1x612xf32>
    %497 = vector.broadcast %495 : vector<4x1xf32> to vector<4x612xf32>
    %498 = vector.broadcast %496 : vector<1x612xf32> to vector<4x612xf32>
    %499 = arith.mulf %497, %498 : vector<4x612xf32>
    %500 = arith.addf %494, %499 : vector<4x612xf32>
    %501 = vector.extract_strided_slice %481 {offsets = [0, 3], sizes = [4, 1], strides = [1, 1]} : vector<4x4xf32> to vector<4x1xf32>
    %502 = vector.extract_strided_slice %482 {offsets = [3, 0], sizes = [1, 612], strides = [1, 1]} : vector<4x612xf32> to vector<1x612xf32>
    %503 = vector.broadcast %501 : vector<4x1xf32> to vector<4x612xf32>
    %504 = vector.broadcast %502 : vector<1x612xf32> to vector<4x612xf32>
    %505 = arith.mulf %503, %504 : vector<4x612xf32>
    %506 = arith.addf %500, %505 : vector<4x612xf32>
    %507 = vector.extract_strided_slice %1 {offsets = [0, 19], sizes = [1, 612], strides = [1, 1]} : vector<1x650xf32> to vector<1x612xf32>
    %508 = vector.broadcast %507 : vector<1x612xf32> to vector<4x612xf32>
    %509 = arith.mulf %506, %508 : vector<4x612xf32>
    %cst_17 = arith.constant dense<0.000000e+00> : vector<4xf32>
    %510 = vector.multi_reduction <add>, %509, %cst_17 [1] : vector<4x612xf32> to vector<4xf32>
    %511 = vector.shape_cast %510 : vector<4xf32> to vector<4x1xf32>
    %cst_18 = arith.constant 0.001953125 : f32
    %512 = vector.broadcast %cst_18 : f32 to vector<4x1xf32>
    %513 = arith.mulf %511, %512 : vector<4x1xf32>
    %514 = arith.mulf %509, %509 : vector<4x612xf32>
    %cst_19 = arith.constant dense<0.000000e+00> : vector<4xf32>
    %515 = vector.multi_reduction <add>, %514, %cst_19 [1] : vector<4x612xf32> to vector<4xf32>
    %516 = vector.shape_cast %515 : vector<4xf32> to vector<4x1xf32>
    %cst_20 = arith.constant 0.001953125 : f32
    %517 = vector.broadcast %cst_20 : f32 to vector<4x1xf32>
    %518 = arith.mulf %516, %517 : vector<4x1xf32>
    %519 = arith.mulf %513, %513 : vector<4x1xf32>
    %520 = arith.subf %518, %519 : vector<4x1xf32>
    %521 = vector.extract_strided_slice %4 {offsets = [0, 2], sizes = [4, 1], strides = [1, 1]} : vector<4x4xf32> to vector<4x1xf32>
    %cst_21 = arith.constant 9.99999974E-6 : f32
    %522 = vector.broadcast %cst_21 : f32 to vector<4x1xf32>
    %523 = arith.addf %520, %522 : vector<4x1xf32>
    %524 = math.rsqrt %523 : vector<4x1xf32>
    %525 = arith.mulf %521, %524 : vector<4x1xf32>
    %526 = vector.extract_strided_slice %4 {offsets = [0, 3], sizes = [4, 1], strides = [1, 1]} : vector<4x4xf32> to vector<4x1xf32>
    %527 = arith.mulf %513, %525 : vector<4x1xf32>
    %528 = arith.subf %526, %527 : vector<4x1xf32>
    %529 = vector.extract_strided_slice %0 {offsets = [0, 38], sizes = [4, 612], strides = [1, 1]} : vector<4x688xf32> to vector<4x612xf32>
    %530 = vector.broadcast %525 : vector<4x1xf32> to vector<4x612xf32>
    %531 = arith.mulf %506, %530 : vector<4x612xf32>
    %532 = vector.broadcast %528 : vector<4x1xf32> to vector<4x612xf32>
    %533 = arith.addf %531, %532 : vector<4x612xf32>
    %534 = arith.addf %533, %529 : vector<4x612xf32>
    %cst_22 = arith.constant 0.000000e+00 : f32
    %535 = vector.broadcast %cst_22 : f32 to vector<4x612xf32>
    %536 = arith.cmpf ogt, %534, %535 : vector<4x612xf32>
    %cst_23 = arith.constant 0.00999999977 : f32
    %537 = vector.broadcast %cst_23 : f32 to vector<4x612xf32>
    %538 = arith.mulf %537, %534 : vector<4x612xf32>
    %539 = arith.select %536, %534, %538 : vector<4x612xi1>, vector<4x612xf32>
    %540 = vector.extract_strided_slice %539 {offsets = [0, 0], sizes = [4, 288], strides = [1, 1]} : vector<4x612xf32> to vector<4x288xf32>
    %c0_24 = arith.constant 0 : index
    %c0_25 = arith.constant 0 : index
    %c0_26 = arith.constant 0 : index
    %541 = vector.load %arg6[%c0_24, %c0_25, %c0_26] : memref<2x4x288xf32, #tpu.memory_space<vmem>>, vector<1x4x288xf32>
    %542 = vector.shape_cast %541 : vector<1x4x288xf32> to vector<4x288xf32>
    %543 = vector.shape_cast %540 : vector<4x288xf32> to vector<1x4x288xf32>
    tpu.vector_store %arg6[%c0_24, %c0_25, %c0_26], %543 {strides = array<i32>} : memref<2x4x288xf32, #tpu.memory_space<vmem>>, vector<1x4x288xf32>,
    %544 = vector.extract_strided_slice %539 {offsets = [0, 324], sizes = [4, 288], strides = [1, 1]} : vector<4x612xf32> to vector<4x288xf32>
    %c1 = arith.constant 1 : index
    %c0_27 = arith.constant 0 : index
    %c0_28 = arith.constant 0 : index
    %545 = vector.load %arg6[%c1, %c0_27, %c0_28] : memref<2x4x288xf32, #tpu.memory_space<vmem>>, vector<1x4x288xf32>
    %546 = vector.shape_cast %545 : vector<1x4x288xf32> to vector<4x288xf32>
    %547 = vector.shape_cast %544 : vector<4x288xf32> to vector<1x4x288xf32>
    tpu.vector_store %arg6[%c1, %c0_27, %c0_28], %547 {strides = array<i32>} : memref<2x4x288xf32, #tpu.memory_space<vmem>>, vector<1x4x288xf32>,
    return
  }
  func.func @transform_0(%arg0: i32) -> (i32, i32) {
    %c0_i32 = arith.constant 0 : i32
    %c0_i32_0 = arith.constant 0 : i32
    %c0_i32_1 = arith.constant 0 : i32
    return %c0_i32, %c0_i32_0 : i32, i32
  }
  func.func @transform_1(%arg0: i32) -> (i32, i32) {
    %c0_i32 = arith.constant 0 : i32
    %c0_i32_0 = arith.constant 0 : i32
    %c0_i32_1 = arith.constant 0 : i32
    return %c0_i32, %c0_i32_0 : i32, i32
  }
  func.func @transform_2(%arg0: i32) -> (i32, i32) {
    %c0_i32 = arith.constant 0 : i32
    %c0_i32_0 = arith.constant 0 : i32
    %c0_i32_1 = arith.constant 0 : i32
    return %c0_i32, %c0_i32_0 : i32, i32
  }
  func.func @transform_3(%arg0: i32) -> (i32, i32) {
    %c0_i32 = arith.constant 0 : i32
    %c0_i32_0 = arith.constant 0 : i32
    %c0_i32_1 = arith.constant 0 : i32
    return %c0_i32, %c0_i32_0 : i32, i32
  }
  func.func @transform_4(%arg0: i32) -> (i32, i32) {
    %c0_i32 = arith.constant 0 : i32
    %c0_i32_0 = arith.constant 0 : i32
    %c0_i32_1 = arith.constant 0 : i32
    return %c0_i32, %c0_i32_0 : i32, i32
  }
  func.func @transform_5(%arg0: i32) -> (i32, i32, i32) {
    %c0_i32 = arith.constant 0 : i32
    %c0_i32_0 = arith.constant 0 : i32
    %c0_i32_1 = arith.constant 0 : i32
    %c0_i32_2 = arith.constant 0 : i32
    return %c0_i32, %c0_i32_0, %c0_i32_1 : i32, i32, i32
  }
}

</mosaic_0001>

<llo_original>
// kernel: residual_block_forward.1
$region0: #{residual_block_forward.1}
  #allocation0 [shape = 'u32[]', space=smem, size = 0x4, offset = 0x4, fixed_abs, tag = 'smem constant byte address 0x4 - core index']
  #allocation1 [shape = 'u32[144,128]{1,0:T(1,128)}', space=vmem, size = 0x12000, scoped, tag = 'internal scratch']
  %s0 = inlined_call_operand.vmem [shape: f32[4,688], index: 0, kind: input, shape index: {}]
  %s1 = inlined_call_operand.vmem [shape: f32[4,36], index: 1, kind: input, shape index: {}]
  %s2 = inlined_call_operand.vmem [shape: f32[4,36], index: 2, kind: input, shape index: {}]
  %s3 = inlined_call_operand.vmem [shape: f32[4,4], index: 3, kind: input, shape index: {}]
  %s4 = inlined_call_operand.vmem [shape: f32[1,650], index: 4, kind: input, shape index: {}]
  %s5 = inlined_call_operand.vmem [shape: f32[2,4,288], index: 5, kind: output, shape index: {}]
  %s6 = sld [smem:[#allocation0]]
  $region30: #{residual_block_forward.1} parent=0
    _
  %s8 = ssub.s32 1, %s6
  %s9 = scalar_select 0, %s8, %s6
  // Predicated region
  $region2: #{residual_block_forward.1} parent=0 // pred_check
    _
  $region3: #{residual_block_forward.1} parent=0 // pred_check_branch
    %11 = sbr.rel (0) target = $region5
  $region4: #{residual_block_forward.1} parent=0 // pred_region
    _
  $region5: #{residual_block_forward.1} parent=0 // pred_fallthru
    _
  // Predicated region
  $region6: #{residual_block_forward.1} parent=0 // pred_check
    _
  $region7: #{residual_block_forward.1} parent=0 // pred_check_branch
    %13 = sbr.rel (0) target = $region9
  $region8: #{residual_block_forward.1} parent=0 // pred_region
    _
  $region9: #{residual_block_forward.1} parent=0 // pred_fallthru
    _
  // Predicated region
  $region10: #{residual_block_forward.1} parent=0 // pred_check
    _
  $region11: #{residual_block_forward.1} parent=0 // pred_check_branch
    %15 = sbr.rel (0) target = $region13
  $region12: #{residual_block_forward.1} parent=0 // pred_region
    _
  $region13: #{residual_block_forward.1} parent=0 // pred_fallthru
    _
  // Predicated region
  $region14: #{residual_block_forward.1} parent=0 // pred_check
    _
  $region15: #{residual_block_forward.1} parent=0 // pred_check_branch
    %17 = sbr.rel (0) target = $region17
  $region16: #{residual_block_forward.1} parent=0 // pred_region
    _
  $region17: #{residual_block_forward.1} parent=0 // pred_fallthru
    _
  // Predicated region
  $region18: #{residual_block_forward.1} parent=0 // pred_check
    _
  $region19: #{residual_block_forward.1} parent=0 // pred_check_branch
    %19 = sbr.rel (0) target = $region21
  $region20: #{residual_block_forward.1} parent=0 // pred_region
    _
  $region21: #{residual_block_forward.1} parent=0 // pred_fallthru
    _
  %v20 = vld [vmem:[%s0] sm:$0xff]
  %v21 = vld [vmem:[%s0 + $0x8] sm:$0xff]
  %v22 = vld [vmem:[%s0 + $0x10] sm:$0xff]
  %v23 = vld [vmem:[%s4] sm:$0x3f]
  %v24 = vld [vmem:[%s1] sm:$0xf]
  %v25 = vld [vmem:[%s2] sm:$0xf]
  %v26 = vld [vmem:[%s3] sm:$0xf]
  %28 = vset.pattern.permute.xlu0 0
  %29 = vperm.xlu0 %28, %v24
  %v30 = vpop.permute.xlu0 %29
  %v35 = vlaneseq
  %v36 = vshrl.u32 %v35, 7
  %v37 = vsub.s32 0, %v36
  %v38 = vrot.slane %v20, %v37
  %v39 = vlaneseq
  %v40 = vshrl.u32 %v39, 7
  %v41 = vsub.s32 4, %v40
  %v42 = vrot.slane %v20, %v41
  %v43 = vlaneseq
  %v44 = vshrl.u32 %v43, 7
  %v45 = vsub.s32 0, %v44
  %v46 = vrot.slane %v21, %v45
  %v47 = vlaneseq
  %v48 = vshrl.u32 %v47, 7
  %v49 = vsub.s32 4, %v48
  %v50 = vrot.slane %v21, %v49
  %v51 = vlaneseq
  %v52 = vshrl.u32 %v51, 7
  %v53 = vsub.s32 0, %v52
  %v54 = vrot.slane %v22, %v53
  %v55 = vlaneseq
  %v56 = vshrl.u32 %v55, 7
  %v57 = vsub.s32 4, %v56
  %v58 = vrot.slane %v22, %v57
  %v65 = vlaneseq
  %v66 = vshrl.u32 %v65, 7
  %v67 = vsub.s32 0, %v66
  %v68 = vrot.slane %v38, %v67
  %v69 = vlaneseq
  %v70 = vshrl.u32 %v69, 7
  %v71 = vsub.s32 0, %v70
  %v72 = vrot.slane %v42, %v71
  %v73 = vlaneseq
  %v74 = vshrl.u32 %v73, 7
  %v75 = vsub.s32 0, %v74
  %v76 = vrot.slane %v46, %v75
  %v77 = vlaneseq
  %v78 = vshrl.u32 %v77, 7
  %v79 = vsub.s32 0, %v78
  %v80 = vrot.slane %v50, %v79
  %v81 = vlaneseq
  %v82 = vshrl.u32 %v81, 7
  %v83 = vsub.s32 0, %v82
  %v84 = vrot.slane %v54, %v83
  %v85 = vlaneseq
  %v86 = vshrl.u32 %v85, 7
  %v87 = vsub.s32 0, %v86
  %v88 = vrot.slane %v58, %v87
  %v89 = vmul.f32 %v30, %v68
  %v90 = vmul.f32 %v30, %v72
  %v91 = vmul.f32 %v30, %v76
  %v92 = vmul.f32 %v30, %v80
  %v93 = vmul.f32 %v30, %v84
  %v94 = vmul.f32 %v30, %v88
  %v95 = vadd.f32 %v89, 0.0
  %v96 = vadd.f32 %v90, 0.0
  %v97 = vadd.f32 %v91, 0.0
  %v98 = vadd.f32 %v92, 0.0
  %v99 = vadd.f32 %v93, 0.0
  %v100 = vadd.f32 %v94, 0.0
  %101 = vset.pattern.permute.xlu0 1
  %102 = vperm.xlu0 %101, %v24
  %v103 = vpop.permute.xlu0 %102
  %v105 = vlaneseq
  %v106 = vshrl.u32 %v105, 7
  %v107 = vsub.s32 1, %v106
  %v108 = vrot.slane %v20, %v107
  %v109 = vlaneseq
  %v110 = vshrl.u32 %v109, 7
  %v111 = vsub.s32 5, %v110
  %v112 = vrot.slane %v20, %v111
  %v113 = vlaneseq
  %v114 = vshrl.u32 %v113, 7
  %v115 = vsub.s32 1, %v114
  %v116 = vrot.slane %v21, %v115
  %v117 = vlaneseq
  %v118 = vshrl.u32 %v117, 7
  %v119 = vsub.s32 5, %v118
  %v120 = vrot.slane %v21, %v119
  %v121 = vlaneseq
  %v122 = vshrl.u32 %v121, 7
  %v123 = vsub.s32 1, %v122
  %v124 = vrot.slane %v22, %v123
  %v125 = vlaneseq
  %v126 = vshrl.u32 %v125, 7
  %v127 = vsub.s32 5, %v126
  %v128 = vrot.slane %v22, %v127
  %v135 = vlaneseq
  %v136 = vshrl.u32 %v135, 7
  %v137 = vsub.s32 1, %v136
  %v138 = vrot.slane %v108, %v137
  %v139 = vlaneseq
  %v140 = vshrl.u32 %v139, 7
  %v141 = vsub.s32 1, %v140
  %v142 = vrot.slane %v112, %v141
  %v143 = vlaneseq
  %v144 = vshrl.u32 %v143, 7
  %v145 = vsub.s32 1, %v144
  %v146 = vrot.slane %v116, %v145
  %v147 = vlaneseq
  %v148 = vshrl.u32 %v147, 7
  %v149 = vsub.s32 1, %v148
  %v150 = vrot.slane %v120, %v149
  %v151 = vlaneseq
  %v152 = vshrl.u32 %v151, 7
  %v153 = vsub.s32 1, %v152
  %v154 = vrot.slane %v124, %v153
  %v155 = vlaneseq
  %v156 = vshrl.u32 %v155, 7
  %v157 = vsub.s32 1, %v156
  %v158 = vrot.slane %v128, %v157
  %v159 = vmul.f32 %v103, %v138
  %v160 = vmul.f32 %v103, %v142
  %v161 = vmul.f32 %v103, %v146
  %v162 = vmul.f32 %v103, %v150
  %v163 = vmul.f32 %v103, %v154
  %v164 = vmul.f32 %v103, %v158
  %v165 = vadd.f32 %v95, %v159
  %v166 = vadd.f32 %v96, %v160
  %v167 = vadd.f32 %v97, %v161
  %v168 = vadd.f32 %v98, %v162
  %v169 = vadd.f32 %v99, %v163
  %v170 = vadd.f32 %v100, %v164
  %171 = vset.pattern.permute.xlu0 2
  %172 = vperm.xlu0 %171, %v24
  %v173 = vpop.permute.xlu0 %172
  %v175 = vlaneseq
  %v176 = vshrl.u32 %v175, 7
  %v177 = vsub.s32 2, %v176
  %v178 = vrot.slane %v20, %v177
  %v179 = vlaneseq
  %v180 = vshrl.u32 %v179, 7
  %v181 = vsub.s32 6, %v180
  %v182 = vrot.slane %v20, %v181
  %v183 = vlaneseq
  %v184 = vshrl.u32 %v183, 7
  %v185 = vsub.s32 2, %v184
  %v186 = vrot.slane %v21, %v185
  %v187 = vlaneseq
  %v188 = vshrl.u32 %v187, 7
  %v189 = vsub.s32 6, %v188
  %v190 = vrot.slane %v21, %v189
  %v191 = vlaneseq
  %v192 = vshrl.u32 %v191, 7
  %v193 = vsub.s32 2, %v192
  %v194 = vrot.slane %v22, %v193
  %v195 = vlaneseq
  %v196 = vshrl.u32 %v195, 7
  %v197 = vsub.s32 6, %v196
  %v198 = vrot.slane %v22, %v197
  %v205 = vlaneseq
  %v206 = vshrl.u32 %v205, 7
  %v207 = vsub.s32 2, %v206
  %v208 = vrot.slane %v178, %v207
  %v209 = vlaneseq
  %v210 = vshrl.u32 %v209, 7
  %v211 = vsub.s32 2, %v210
  %v212 = vrot.slane %v182, %v211
  %v213 = vlaneseq
  %v214 = vshrl.u32 %v213, 7
  %v215 = vsub.s32 2, %v214
  %v216 = vrot.slane %v186, %v215
  %v217 = vlaneseq
  %v218 = vshrl.u32 %v217, 7
  %v219 = vsub.s32 2, %v218
  %v220 = vrot.slane %v190, %v219
  %v221 = vlaneseq
  %v222 = vshrl.u32 %v221, 7
  %v223 = vsub.s32 2, %v222
  %v224 = vrot.slane %v194, %v223
  %v225 = vlaneseq
  %v226 = vshrl.u32 %v225, 7
  %v227 = vsub.s32 2, %v226
  %v228 = vrot.slane %v198, %v227
  %v229 = vmul.f32 %v173, %v208
  %v230 = vmul.f32 %v173, %v212
  %v231 = vmul.f32 %v173, %v216
  %v232 = vmul.f32 %v173, %v220
  %v233 = vmul.f32 %v173, %v224
  %v234 = vmul.f32 %v173, %v228
  %v235 = vadd.f32 %v165, %v229
  %v236 = vadd.f32 %v166, %v230
  %v237 = vadd.f32 %v167, %v231
  %v238 = vadd.f32 %v168, %v232
  %v239 = vadd.f32 %v169, %v233
  %v240 = vadd.f32 %v170, %v234
  %241 = vset.pattern.permute.xlu0 3
  %242 = vperm.xlu0 %241, %v24
  %v243 = vpop.permute.xlu0 %242
  %v245 = vlaneseq
  %v246 = vshrl.u32 %v245, 7
  %v247 = vsub.s32 3, %v246
  %v248 = vrot.slane %v20, %v247
  %v249 = vlaneseq
  %v250 = vshrl.u32 %v249, 7
  %v251 = vsub.s32 7, %v250
  %v252 = vrot.slane %v20, %v251
  %v253 = vlaneseq
  %v254 = vshrl.u32 %v253, 7
  %v255 = vsub.s32 3, %v254
  %v256 = vrot.slane %v21, %v255
  %v257 = vlaneseq
  %v258 = vshrl.u32 %v257, 7
  %v259 = vsub.s32 7, %v258
  %v260 = vrot.slane %v21, %v259
  %v261 = vlaneseq
  %v262 = vshrl.u32 %v261, 7
  %v263 = vsub.s32 3, %v262
  %v264 = vrot.slane %v22, %v263
  %v265 = vlaneseq
  %v266 = vshrl.u32 %v265, 7
  %v267 = vsub.s32 7, %v266
  %v268 = vrot.slane %v22, %v267
  %v275 = vlaneseq
  %v276 = vshrl.u32 %v275, 7
  %v277 = vsub.s32 3, %v276
  %v278 = vrot.slane %v248, %v277
  %v279 = vlaneseq
  %v280 = vshrl.u32 %v279, 7
  %v281 = vsub.s32 3, %v280
  %v282 = vrot.slane %v252, %v281
  %v283 = vlaneseq
  %v284 = vshrl.u32 %v283, 7
  %v285 = vsub.s32 3, %v284
  %v286 = vrot.slane %v256, %v285
  %v287 = vlaneseq
  %v288 = vshrl.u32 %v287, 7
  %v289 = vsub.s32 3, %v288
  %v290 = vrot.slane %v260, %v289
  %v291 = vlaneseq
  %v292 = vshrl.u32 %v291, 7
  %v293 = vsub.s32 3, %v292
  %v294 = vrot.slane %v264, %v293
  %v295 = vlaneseq
  %v296 = vshrl.u32 %v295, 7
  %v297 = vsub.s32 3, %v296
  %v298 = vrot.slane %v268, %v297
  %v299 = vmul.f32 %v243, %v278
  %v300 = vmul.f32 %v243, %v282
  %v301 = vmul.f32 %v243, %v286
  %v302 = vmul.f32 %v243, %v290
  %v303 = vmul.f32 %v243, %v294
  %v304 = vmul.f32 %v243, %v298
  %v305 = vadd.f32 %v235, %v299
  %v306 = vadd.f32 %v236, %v300
  %v307 = vadd.f32 %v237, %v301
  %v308 = vadd.f32 %v238, %v302
  %v309 = vadd.f32 %v239, %v303
  %v310 = vadd.f32 %v240, %v304
  %311 = vset.pattern.permute.xlu0 4
  %312 = vperm.xlu0 %311, %v24
  %v313 = vpop.permute.xlu0 %312
  %v315 = vmul.f32 %v313, %v68
  %v316 = vmul.f32 %v313, %v72
  %v317 = vmul.f32 %v313, %v76
  %v318 = vmul.f32 %v313, %v80
  %v319 = vmul.f32 %v313, %v84
  %v320 = vmul.f32 %v313, %v88
  %327 = vrot.lane.b32.xlu0 %v315, 127
  %v328 = vpop.permute.xlu0 %327
  %329 = vrot.lane.b32.xlu0 %v316, 127
  %v330 = vpop.permute.xlu0 %329
  %331 = vrot.lane.b32.xlu0 %v317, 127
  %v332 = vpop.permute.xlu0 %331
  %333 = vrot.lane.b32.xlu0 %v318, 127
  %v334 = vpop.permute.xlu0 %333
  %335 = vrot.lane.b32.xlu0 %v319, 127
  %v336 = vpop.permute.xlu0 %335
  %337 = vrot.lane.b32.xlu0 %v320, 127
  %v338 = vpop.permute.xlu0 %337
  %vm339 = vcmask 1039360
  %v340 = vsel %vm339, %v328, %v330
  %v341 = vsel %vm339, %v330, %v332
  %v342 = vsel %vm339, %v332, %v334
  %v343 = vsel %vm339, %v334, %v336
  %v344 = vsel %vm339, %v336, %v338
  %v351 = vadd.f32 %v305, %v340
  %v352 = vadd.f32 %v306, %v341
  %v353 = vadd.f32 %v307, %v342
  %v354 = vadd.f32 %v308, %v343
  %v355 = vadd.f32 %v309, %v344
  %v356 = vadd.f32 %v310, %v338
  %357 = vset.pattern.permute.xlu0 5
  %358 = vperm.xlu0 %357, %v24
  %v359 = vpop.permute.xlu0 %358
  %v361 = vmul.f32 %v359, %v138
  %v362 = vmul.f32 %v359, %v142
  %v363 = vmul.f32 %v359, %v146
  %v364 = vmul.f32 %v359, %v150
  %v365 = vmul.f32 %v359, %v154
  %v366 = vmul.f32 %v359, %v158
  %373 = vrot.lane.b32.xlu0 %v361, 127
  %v374 = vpop.permute.xlu0 %373
  %375 = vrot.lane.b32.xlu0 %v362, 127
  %v376 = vpop.permute.xlu0 %375
  %377 = vrot.lane.b32.xlu0 %v363, 127
  %v378 = vpop.permute.xlu0 %377
  %379 = vrot.lane.b32.xlu0 %v364, 127
  %v380 = vpop.permute.xlu0 %379
  %381 = vrot.lane.b32.xlu0 %v365, 127
  %v382 = vpop.permute.xlu0 %381
  %383 = vrot.lane.b32.xlu0 %v366, 127
  %v384 = vpop.permute.xlu0 %383
  %v385 = vsel %vm339, %v374, %v376
  %v386 = vsel %vm339, %v376, %v378
  %v387 = vsel %vm339, %v378, %v380
  %v388 = vsel %vm339, %v380, %v382
  %v389 = vsel %vm339, %v382, %v384
  %v396 = vadd.f32 %v351, %v385
  %v397 = vadd.f32 %v352, %v386
  %v398 = vadd.f32 %v353, %v387
  %v399 = vadd.f32 %v354, %v388
  %v400 = vadd.f32 %v355, %v389
  %v401 = vadd.f32 %v356, %v384
  %402 = vset.pattern.permute.xlu0 6
  %403 = vperm.xlu0 %402, %v24
  %v404 = vpop.permute.xlu0 %403
  %v406 = vmul.f32 %v404, %v208
  %v407 = vmul.f32 %v404, %v212
  %v408 = vmul.f32 %v404, %v216
  %v409 = vmul.f32 %v404, %v220
  %v410 = vmul.f32 %v404, %v224
  %v411 = vmul.f32 %v404, %v228
  %418 = vrot.lane.b32.xlu0 %v406, 127
  %v419 = vpop.permute.xlu0 %418
  %420 = vrot.lane.b32.xlu0 %v407, 127
  %v421 = vpop.permute.xlu0 %420
  %422 = vrot.lane.b32.xlu0 %v408, 127
  %v423 = vpop.permute.xlu0 %422
  %424 = vrot.lane.b32.xlu0 %v409, 127
  %v425 = vpop.permute.xlu0 %424
  %426 = vrot.lane.b32.xlu0 %v410, 127
  %v427 = vpop.permute.xlu0 %426
  %428 = vrot.lane.b32.xlu0 %v411, 127
  %v429 = vpop.permute.xlu0 %428
  %v430 = vsel %vm339, %v419, %v421
  %v431 = vsel %vm339, %v421, %v423
  %v432 = vsel %vm339, %v423, %v425
  %v433 = vsel %vm339, %v425, %v427
  %v434 = vsel %vm339, %v427, %v429
  %v441 = vadd.f32 %v396, %v430
  %v442 = vadd.f32 %v397, %v431
  %v443 = vadd.f32 %v398, %v432
  %v444 = vadd.f32 %v399, %v433
  %v445 = vadd.f32 %v400, %v434
  %v446 = vadd.f32 %v401, %v429
  %447 = vset.pattern.permute.xlu0 7
  %448 = vperm.xlu0 %447, %v24
  %v449 = vpop.permute.xlu0 %448
  %v451 = vmul.f32 %v449, %v278
  %v452 = vmul.f32 %v449, %v282
  %v453 = vmul.f32 %v449, %v286
  %v454 = vmul.f32 %v449, %v290
  %v455 = vmul.f32 %v449, %v294
  %v456 = vmul.f32 %v449, %v298
  %463 = vrot.lane.b32.xlu0 %v451, 127
  %v464 = vpop.permute.xlu0 %463
  %465 = vrot.lane.b32.xlu0 %v452, 127
  %v466 = vpop.permute.xlu0 %465
  %467 = vrot.lane.b32.xlu0 %v453, 127
  %v468 = vpop.permute.xlu0 %467
  %469 = vrot.lane.b32.xlu0 %v454, 127
  %v470 = vpop.permute.xlu0 %469
  %471 = vrot.lane.b32.xlu0 %v455, 127
  %v472 = vpop.permute.xlu0 %471
  %473 = vrot.lane.b32.xlu0 %v456, 127
  %v474 = vpop.permute.xlu0 %473
  %v475 = vsel %vm339, %v464, %v466
  %v476 = vsel %vm339, %v466, %v468
  %v477 = vsel %vm339, %v468, %v470
  %v478 = vsel %vm339, %v470, %v472
  %v479 = vsel %vm339, %v472, %v474
  %v486 = vadd.f32 %v441, %v475
  %v487 = vadd.f32 %v442, %v476
  %v488 = vadd.f32 %v443, %v477
  %v489 = vadd.f32 %v444, %v478
  %v490 = vadd.f32 %v445, %v479
  %v491 = vadd.f32 %v446, %v474
  %492 = vset.pattern.permute.xlu0 8
  %493 = vperm.xlu0 %492, %v24
  %v494 = vpop.permute.xlu0 %493
  %v496 = vmul.f32 %v494, %v68
  %v497 = vmul.f32 %v494, %v72
  %v498 = vmul.f32 %v494, %v76
  %v499 = vmul.f32 %v494, %v80
  %v500 = vmul.f32 %v494, %v84
  %v501 = vmul.f32 %v494, %v88
  %508 = vrot.lane.b32.xlu0 %v496, 126
  %v509 = vpop.permute.xlu0 %508
  %510 = vrot.lane.b32.xlu0 %v497, 126
  %v511 = vpop.permute.xlu0 %510
  %512 = vrot.lane.b32.xlu0 %v498, 126
  %v513 = vpop.permute.xlu0 %512
  %514 = vrot.lane.b32.xlu0 %v499, 126
  %v515 = vpop.permute.xlu0 %514
  %516 = vrot.lane.b32.xlu0 %v500, 126
  %v517 = vpop.permute.xlu0 %516
  %518 = vrot.lane.b32.xlu0 %v501, 126
  %v519 = vpop.permute.xlu0 %518
  %vm520 = vcmask 1031168
  %v521 = vsel %vm520, %v509, %v511
  %v522 = vsel %vm520, %v511, %v513
  %v523 = vsel %vm520, %v513, %v515
  %v524 = vsel %vm520, %v515, %v517
  %v525 = vsel %vm520, %v517, %v519
  %v532 = vadd.f32 %v486, %v521
  %v533 = vadd.f32 %v487, %v522
  %v534 = vadd.f32 %v488, %v523
  %v535 = vadd.f32 %v489, %v524
  %v536 = vadd.f32 %v490, %v525
  %v537 = vadd.f32 %v491, %v519
  %538 = vset.pattern.permute.xlu0 9
  %539 = vperm.xlu0 %538, %v24
  %v540 = vpop.permute.xlu0 %539
  %v542 = vmul.f32 %v540, %v138
  %v543 = vmul.f32 %v540, %v142
  %v544 = vmul.f32 %v540, %v146
  %v545 = vmul.f32 %v540, %v150
  %v546 = vmul.f32 %v540, %v154
  %v547 = vmul.f32 %v540, %v158
  %554 = vrot.lane.b32.xlu0 %v542, 126
  %v555 = vpop.permute.xlu0 %554
  %556 = vrot.lane.b32.xlu0 %v543, 126
  %v557 = vpop.permute.xlu0 %556
  %558 = vrot.lane.b32.xlu0 %v544, 126
  %v559 = vpop.permute.xlu0 %558
  %560 = vrot.lane.b32.xlu0 %v545, 126
  %v561 = vpop.permute.xlu0 %560
  %562 = vrot.lane.b32.xlu0 %v546, 126
  %v563 = vpop.permute.xlu0 %562
  %564 = vrot.lane.b32.xlu0 %v547, 126
  %v565 = vpop.permute.xlu0 %564
  %v566 = vsel %vm520, %v555, %v557
  %v567 = vsel %vm520, %v557, %v559
  %v568 = vsel %vm520, %v559, %v561
  %v569 = vsel %vm520, %v561, %v563
  %v570 = vsel %vm520, %v563, %v565
  %v577 = vadd.f32 %v532, %v566
  %v578 = vadd.f32 %v533, %v567
  %v579 = vadd.f32 %v534, %v568
  %v580 = vadd.f32 %v535, %v569
  %v581 = vadd.f32 %v536, %v570
  %v582 = vadd.f32 %v537, %v565
  %583 = vset.pattern.permute.xlu0 10
  %584 = vperm.xlu0 %583, %v24
  %v585 = vpop.permute.xlu0 %584
  %v587 = vmul.f32 %v585, %v208
  %v588 = vmul.f32 %v585, %v212
  %v589 = vmul.f32 %v585, %v216
  %v590 = vmul.f32 %v585, %v220
  %v591 = vmul.f32 %v585, %v224
  %v592 = vmul.f32 %v585, %v228
  %599 = vrot.lane.b32.xlu0 %v587, 126
  %v600 = vpop.permute.xlu0 %599
  %601 = vrot.lane.b32.xlu0 %v588, 126
  %v602 = vpop.permute.xlu0 %601
  %603 = vrot.lane.b32.xlu0 %v589, 126
  %v604 = vpop.permute.xlu0 %603
  %605 = vrot.lane.b32.xlu0 %v590, 126
  %v606 = vpop.permute.xlu0 %605
  %607 = vrot.lane.b32.xlu0 %v591, 126
  %v608 = vpop.permute.xlu0 %607
  %609 = vrot.lane.b32.xlu0 %v592, 126
  %v610 = vpop.permute.xlu0 %609
  %v611 = vsel %vm520, %v600, %v602
  %v612 = vsel %vm520, %v602, %v604
  %v613 = vsel %vm520, %v604, %v606
  %v614 = vsel %vm520, %v606, %v608
  %v615 = vsel %vm520, %v608, %v610
  %v622 = vadd.f32 %v577, %v611
  %v623 = vadd.f32 %v578, %v612
  %v624 = vadd.f32 %v579, %v613
  %v625 = vadd.f32 %v580, %v614
  %v626 = vadd.f32 %v581, %v615
  %v627 = vadd.f32 %v582, %v610
  %628 = vset.pattern.permute.xlu0 11
  %629 = vperm.xlu0 %628, %v24
  %v630 = vpop.permute.xlu0 %629
  %v632 = vmul.f32 %v630, %v278
  %v633 = vmul.f32 %v630, %v282
  %v634 = vmul.f32 %v630, %v286
  %v635 = vmul.f32 %v630, %v290
  %v636 = vmul.f32 %v630, %v294
  %v637 = vmul.f32 %v630, %v298
  %644 = vrot.lane.b32.xlu0 %v632, 126
  %v645 = vpop.permute.xlu0 %644
  %646 = vrot.lane.b32.xlu0 %v633, 126
  %v647 = vpop.permute.xlu0 %646
  %648 = vrot.lane.b32.xlu0 %v634, 126
  %v649 = vpop.permute.xlu0 %648
  %650 = vrot.lane.b32.xlu0 %v635, 126
  %v651 = vpop.permute.xlu0 %650
  %652 = vrot.lane.b32.xlu0 %v636, 126
  %v653 = vpop.permute.xlu0 %652
  %654 = vrot.lane.b32.xlu0 %v637, 126
  %v655 = vpop.permute.xlu0 %654
  %v656 = vsel %vm520, %v645, %v647
  %v657 = vsel %vm520, %v647, %v649
  %v658 = vsel %vm520, %v649, %v651
  %v659 = vsel %vm520, %v651, %v653
  %v660 = vsel %vm520, %v653, %v655
  %v667 = vadd.f32 %v622, %v656
  %v668 = vadd.f32 %v623, %v657
  %v669 = vadd.f32 %v624, %v658
  %v670 = vadd.f32 %v625, %v659
  %v671 = vadd.f32 %v626, %v660
  %v672 = vadd.f32 %v627, %v655
  %673 = vset.pattern.permute.xlu0 12
  %674 = vperm.xlu0 %673, %v24
  %v675 = vpop.permute.xlu0 %674
  %v677 = vmul.f32 %v675, %v68
  %v678 = vmul.f32 %v675, %v72
  %v679 = vmul.f32 %v675, %v76
  %v680 = vmul.f32 %v675, %v80
  %v681 = vmul.f32 %v675, %v84
  %v682 = vmul.f32 %v675, %v88
  %689 = vrot.lane.b32.xlu0 %v677, 110
  %v690 = vpop.permute.xlu0 %689
  %691 = vrot.lane.b32.xlu0 %v678, 110
  %v692 = vpop.permute.xlu0 %691
  %693 = vrot.lane.b32.xlu0 %v679, 110
  %v694 = vpop.permute.xlu0 %693
  %695 = vrot.lane.b32.xlu0 %v680, 110
  %v696 = vpop.permute.xlu0 %695
  %697 = vrot.lane.b32.xlu0 %v681, 110
  %v698 = vpop.permute.xlu0 %697
  %699 = vrot.lane.b32.xlu0 %v682, 110
  %v700 = vpop.permute.xlu0 %699
  %vm701 = vcmask 900096
  %v702 = vsel %vm701, %v690, %v692
  %v703 = vsel %vm701, %v692, %v694
  %v704 = vsel %vm701, %v694, %v696
  %v705 = vsel %vm701, %v696, %v698
  %v706 = vsel %vm701, %v698, %v700
  %v713 = vadd.f32 %v667, %v702
  %v714 = vadd.f32 %v668, %v703
  %v715 = vadd.f32 %v669, %v704
  %v716 = vadd.f32 %v670, %v705
  %v717 = vadd.f32 %v671, %v706
  %v718 = vadd.f32 %v672, %v700
  %719 = vset.pattern.permute.xlu0 13
  %720 = vperm.xlu0 %719, %v24
  %v721 = vpop.permute.xlu0 %720
  %v723 = vmul.f32 %v721, %v138
  %v724 = vmul.f32 %v721, %v142
  %v725 = vmul.f32 %v721, %v146
  %v726 = vmul.f32 %v721, %v150
  %v727 = vmul.f32 %v721, %v154
  %v728 = vmul.f32 %v721, %v158
  %735 = vrot.lane.b32.xlu0 %v723, 110
  %v736 = vpop.permute.xlu0 %735
  %737 = vrot.lane.b32.xlu0 %v724, 110
  %v738 = vpop.permute.xlu0 %737
  %739 = vrot.lane.b32.xlu0 %v725, 110
  %v740 = vpop.permute.xlu0 %739
  %741 = vrot.lane.b32.xlu0 %v726, 110
  %v742 = vpop.permute.xlu0 %741
  %743 = vrot.lane.b32.xlu0 %v727, 110
  %v744 = vpop.permute.xlu0 %743
  %745 = vrot.lane.b32.xlu0 %v728, 110
  %v746 = vpop.permute.xlu0 %745
  %v747 = vsel %vm701, %v736, %v738
  %v748 = vsel %vm701, %v738, %v740
  %v749 = vsel %vm701, %v740, %v742
  %v750 = vsel %vm701, %v742, %v744
  %v751 = vsel %vm701, %v744, %v746
  %v758 = vadd.f32 %v713, %v747
  %v759 = vadd.f32 %v714, %v748
  %v760 = vadd.f32 %v715, %v749
  %v761 = vadd.f32 %v716, %v750
  %v762 = vadd.f32 %v717, %v751
  %v763 = vadd.f32 %v718, %v746
  %764 = vset.pattern.permute.xlu0 14
  %765 = vperm.xlu0 %764, %v24
  %v766 = vpop.permute.xlu0 %765
  %v768 = vmul.f32 %v766, %v208
  %v769 = vmul.f32 %v766, %v212
  %v770 = vmul.f32 %v766, %v216
  %v771 = vmul.f32 %v766, %v220
  %v772 = vmul.f32 %v766, %v224
  %v773 = vmul.f32 %v766, %v228
  %780 = vrot.lane.b32.xlu0 %v768, 110
  %v781 = vpop.permute.xlu0 %780
  %782 = vrot.lane.b32.xlu0 %v769, 110
  %v783 = vpop.permute.xlu0 %782
  %784 = vrot.lane.b32.xlu0 %v770, 110
  %v785 = vpop.permute.xlu0 %784
  %786 = vrot.lane.b32.xlu0 %v771, 110
  %v787 = vpop.permute.xlu0 %786
  %788 = vrot.lane.b32.xlu0 %v772, 110
  %v789 = vpop.permute.xlu0 %788
  %790 = vrot.lane.b32.xlu0 %v773, 110
  %v791 = vpop.permute.xlu0 %790
  %v792 = vsel %vm701, %v781, %v783
  %v793 = vsel %vm701, %v783, %v785
  %v794 = vsel %vm701, %v785, %v787
  %v795 = vsel %vm701, %v787, %v789
  %v796 = vsel %vm701, %v789, %v791
  %v803 = vadd.f32 %v758, %v792
  %v804 = vadd.f32 %v759, %v793
  %v805 = vadd.f32 %v760, %v794
  %v806 = vadd.f32 %v761, %v795
  %v807 = vadd.f32 %v762, %v796
  %v808 = vadd.f32 %v763, %v791
  %809 = vset.pattern.permute.xlu0 15
  %810 = vperm.xlu0 %809, %v24
  %v811 = vpop.permute.xlu0 %810
  %v813 = vmul.f32 %v811, %v278
  %v814 = vmul.f32 %v811, %v282
  %v815 = vmul.f32 %v811, %v286
  %v816 = vmul.f32 %v811, %v290
  %v817 = vmul.f32 %v811, %v294
  %v818 = vmul.f32 %v811, %v298
  %825 = vrot.lane.b32.xlu0 %v813, 110
  %v826 = vpop.permute.xlu0 %825
  %827 = vrot.lane.b32.xlu0 %v814, 110
  %v828 = vpop.permute.xlu0 %827
  %829 = vrot.lane.b32.xlu0 %v815, 110
  %v830 = vpop.permute.xlu0 %829
  %831 = vrot.lane.b32.xlu0 %v816, 110
  %v832 = vpop.permute.xlu0 %831
  %833 = vrot.lane.b32.xlu0 %v817, 110
  %v834 = vpop.permute.xlu0 %833
  %835 = vrot.lane.b32.xlu0 %v818, 110
  %v836 = vpop.permute.xlu0 %835
  %v837 = vsel %vm701, %v826, %v828
  %v838 = vsel %vm701, %v828, %v830
  %v839 = vsel %vm701, %v830, %v832
  %v840 = vsel %vm701, %v832, %v834
  %v841 = vsel %vm701, %v834, %v836
  %v848 = vadd.f32 %v803, %v837
  %v849 = vadd.f32 %v804, %v838
  %v850 = vadd.f32 %v805, %v839
  %v851 = vadd.f32 %v806, %v840
  %v852 = vadd.f32 %v807, %v841
  %v853 = vadd.f32 %v808, %v836
  %854 = vset.pattern.permute.xlu0 16
  %855 = vperm.xlu0 %854, %v24
  %v856 = vpop.permute.xlu0 %855
  %v858 = vmul.f32 %v856, %v68
  %v859 = vmul.f32 %v856, %v72
  %v860 = vmul.f32 %v856, %v76
  %v861 = vmul.f32 %v856, %v80
  %v862 = vmul.f32 %v856, %v84
  %v863 = vmul.f32 %v856, %v88
  %870 = vrot.lane.b32.xlu0 %v858, 109
  %v871 = vpop.permute.xlu0 %870
  %872 = vrot.lane.b32.xlu0 %v859, 109
  %v873 = vpop.permute.xlu0 %872
  %874 = vrot.lane.b32.xlu0 %v860, 109
  %v875 = vpop.permute.xlu0 %874
  %876 = vrot.lane.b32.xlu0 %v861, 109
  %v877 = vpop.permute.xlu0 %876
  %878 = vrot.lane.b32.xlu0 %v862, 109
  %v879 = vpop.permute.xlu0 %878
  %880 = vrot.lane.b32.xlu0 %v863, 109
  %v881 = vpop.permute.xlu0 %880
  %vm882 = vcmask 891904
  %v883 = vsel %vm882, %v871, %v873
  %v884 = vsel %vm882, %v873, %v875
  %v885 = vsel %vm882, %v875, %v877
  %v886 = vsel %vm882, %v877, %v879
  %v887 = vsel %vm882, %v879, %v881
  %v894 = vadd.f32 %v848, %v883
  %v895 = vadd.f32 %v849, %v884
  %v896 = vadd.f32 %v850, %v885
  %v897 = vadd.f32 %v851, %v886
  %v898 = vadd.f32 %v852, %v887
  %v899 = vadd.f32 %v853, %v881
  %900 = vset.pattern.permute.xlu0 17
  %901 = vperm.xlu0 %900, %v24
  %v902 = vpop.permute.xlu0 %901
  %v904 = vmul.f32 %v902, %v138
  %v905 = vmul.f32 %v902, %v142
  %v906 = vmul.f32 %v902, %v146
  %v907 = vmul.f32 %v902, %v150
  %v908 = vmul.f32 %v902, %v154
  %v909 = vmul.f32 %v902, %v158
  %916 = vrot.lane.b32.xlu0 %v904, 109
  %v917 = vpop.permute.xlu0 %916
  %918 = vrot.lane.b32.xlu0 %v905, 109
  %v919 = vpop.permute.xlu0 %918
  %920 = vrot.lane.b32.xlu0 %v906, 109
  %v921 = vpop.permute.xlu0 %920
  %922 = vrot.lane.b32.xlu0 %v907, 109
  %v923 = vpop.permute.xlu0 %922
  %924 = vrot.lane.b32.xlu0 %v908, 109
  %v925 = vpop.permute.xlu0 %924
  %926 = vrot.lane.b32.xlu0 %v909, 109
  %v927 = vpop.permute.xlu0 %926
  %v928 = vsel %vm882, %v917, %v919
  %v929 = vsel %vm882, %v919, %v921
  %v930 = vsel %vm882, %v921, %v923
  %v931 = vsel %vm882, %v923, %v925
  %v932 = vsel %vm882, %v925, %v927
  %v939 = vadd.f32 %v894, %v928
  %v940 = vadd.f32 %v895, %v929
  %v941 = vadd.f32 %v896, %v930
  %v942 = vadd.f32 %v897, %v931
  %v943 = vadd.f32 %v898, %v932
  %v944 = vadd.f32 %v899, %v927
  %945 = vset.pattern.permute.xlu0 18
  %946 = vperm.xlu0 %945, %v24
  %v947 = vpop.permute.xlu0 %946
  %v949 = vmul.f32 %v947, %v208
  %v950 = vmul.f32 %v947, %v212
  %v951 = vmul.f32 %v947, %v216
  %v952 = vmul.f32 %v947, %v220
  %v953 = vmul.f32 %v947, %v224
  %v954 = vmul.f32 %v947, %v228
  %961 = vrot.lane.b32.xlu0 %v949, 109
  %v962 = vpop.permute.xlu0 %961
  %963 = vrot.lane.b32.xlu0 %v950, 109
  %v964 = vpop.permute.xlu0 %963
  %965 = vrot.lane.b32.xlu0 %v951, 109
  %v966 = vpop.permute.xlu0 %965
  %967 = vrot.lane.b32.xlu0 %v952, 109
  %v968 = vpop.permute.xlu0 %967
  %969 = vrot.lane.b32.xlu0 %v953, 109
  %v970 = vpop.permute.xlu0 %969
  %971 = vrot.lane.b32.xlu0 %v954, 109
  %v972 = vpop.permute.xlu0 %971
  %v973 = vsel %vm882, %v962, %v964
  %v974 = vsel %vm882, %v964, %v966
  %v975 = vsel %vm882, %v966, %v968
  %v976 = vsel %vm882, %v968, %v970
  %v977 = vsel %vm882, %v970, %v972
  %v984 = vadd.f32 %v939, %v973
  %v985 = vadd.f32 %v940, %v974
  %v986 = vadd.f32 %v941, %v975
  %v987 = vadd.f32 %v942, %v976
  %v988 = vadd.f32 %v943, %v977
  %v989 = vadd.f32 %v944, %v972
  %990 = vset.pattern.permute.xlu0 19
  %991 = vperm.xlu0 %990, %v24
  %v992 = vpop.permute.xlu0 %991
  %v994 = vmul.f32 %v992, %v278
  %v995 = vmul.f32 %v992, %v282
  %v996 = vmul.f32 %v992, %v286
  %v997 = vmul.f32 %v992, %v290
  %v998 = vmul.f32 %v992, %v294
  %v999 = vmul.f32 %v992, %v298
  %1006 = vrot.lane.b32.xlu0 %v994, 109
  %v1007 = vpop.permute.xlu0 %1006
  %1008 = vrot.lane.b32.xlu0 %v995, 109
  %v1009 = vpop.permute.xlu0 %1008
  %1010 = vrot.lane.b32.xlu0 %v996, 109
  %v1011 = vpop.permute.xlu0 %1010
  %1012 = vrot.lane.b32.xlu0 %v997, 109
  %v1013 = vpop.permute.xlu0 %1012
  %1014 = vrot.lane.b32.xlu0 %v998, 109
  %v1015 = vpop.permute.xlu0 %1014
  %1016 = vrot.lane.b32.xlu0 %v999, 109
  %v1017 = vpop.permute.xlu0 %1016
  %v1018 = vsel %vm882, %v1007, %v1009
  %v1019 = vsel %vm882, %v1009, %v1011
  %v1020 = vsel %vm882, %v1011, %v1013
  %v1021 = vsel %vm882, %v1013, %v1015
  %v1022 = vsel %vm882, %v1015, %v1017
  %v1029 = vadd.f32 %v984, %v1018
  %v1030 = vadd.f32 %v985, %v1019
  %v1031 = vadd.f32 %v986, %v1020
  %v1032 = vadd.f32 %v987, %v1021
  %v1033 = vadd.f32 %v988, %v1022
  %v1034 = vadd.f32 %v989, %v1017
  %1035 = vset.pattern.permute.xlu0 20
  %1036 = vperm.xlu0 %1035, %v24
  %v1037 = vpop.permute.xlu0 %1036
  %v1039 = vmul.f32 %v1037, %v68
  %v1040 = vmul.f32 %v1037, %v72
  %v1041 = vmul.f32 %v1037, %v76
  %v1042 = vmul.f32 %v1037, %v80
  %v1043 = vmul.f32 %v1037, %v84
  %v1044 = vmul.f32 %v1037, %v88
  %1051 = vrot.lane.b32.xlu0 %v1039, 108
  %v1052 = vpop.permute.xlu0 %1051
  %1053 = vrot.lane.b32.xlu0 %v1040, 108
  %v1054 = vpop.permute.xlu0 %1053
  %1055 = vrot.lane.b32.xlu0 %v1041, 108
  %v1056 = vpop.permute.xlu0 %1055
  %1057 = vrot.lane.b32.xlu0 %v1042, 108
  %v1058 = vpop.permute.xlu0 %1057
  %1059 = vrot.lane.b32.xlu0 %v1043, 108
  %v1060 = vpop.permute.xlu0 %1059
  %1061 = vrot.lane.b32.xlu0 %v1044, 108
  %v1062 = vpop.permute.xlu0 %1061
  %vm1063 = vcmask 883712
  %v1064 = vsel %vm1063, %v1052, %v1054
  %v1065 = vsel %vm1063, %v1054, %v1056
  %v1066 = vsel %vm1063, %v1056, %v1058
  %v1067 = vsel %vm1063, %v1058, %v1060
  %v1068 = vsel %vm1063, %v1060, %v1062
  %v1075 = vadd.f32 %v1029, %v1064
  %v1076 = vadd.f32 %v1030, %v1065
  %v1077 = vadd.f32 %v1031, %v1066
  %v1078 = vadd.f32 %v1032, %v1067
  %v1079 = vadd.f32 %v1033, %v1068
  %v1080 = vadd.f32 %v1034, %v1062
  %1081 = vset.pattern.permute.xlu0 21
  %1082 = vperm.xlu0 %1081, %v24
  %v1083 = vpop.permute.xlu0 %1082
  %v1085 = vmul.f32 %v1083, %v138
  %v1086 = vmul.f32 %v1083, %v142
  %v1087 = vmul.f32 %v1083, %v146
  %v1088 = vmul.f32 %v1083, %v150
  %v1089 = vmul.f32 %v1083, %v154
  %v1090 = vmul.f32 %v1083, %v158
  %1097 = vrot.lane.b32.xlu0 %v1085, 108
  %v1098 = vpop.permute.xlu0 %1097
  %1099 = vrot.lane.b32.xlu0 %v1086, 108
  %v1100 = vpop.permute.xlu0 %1099
  %1101 = vrot.lane.b32.xlu0 %v1087, 108
  %v1102 = vpop.permute.xlu0 %1101
  %1103 = vrot.lane.b32.xlu0 %v1088, 108
  %v1104 = vpop.permute.xlu0 %1103
  %1105 = vrot.lane.b32.xlu0 %v1089, 108
  %v1106 = vpop.permute.xlu0 %1105
  %1107 = vrot.lane.b32.xlu0 %v1090, 108
  %v1108 = vpop.permute.xlu0 %1107
  %v1109 = vsel %vm1063, %v1098, %v1100
  %v1110 = vsel %vm1063, %v1100, %v1102
  %v1111 = vsel %vm1063, %v1102, %v1104
  %v1112 = vsel %vm1063, %v1104, %v1106
  %v1113 = vsel %vm1063, %v1106, %v1108
  %v1120 = vadd.f32 %v1075, %v1109
  %v1121 = vadd.f32 %v1076, %v1110
  %v1122 = vadd.f32 %v1077, %v1111
  %v1123 = vadd.f32 %v1078, %v1112
  %v1124 = vadd.f32 %v1079, %v1113
  %v1125 = vadd.f32 %v1080, %v1108
  %1126 = vset.pattern.permute.xlu0 22
  %1127 = vperm.xlu0 %1126, %v24
  %v1128 = vpop.permute.xlu0 %1127
  %v1130 = vmul.f32 %v1128, %v208
  %v1131 = vmul.f32 %v1128, %v212
  %v1132 = vmul.f32 %v1128, %v216
  %v1133 = vmul.f32 %v1128, %v220
  %v1134 = vmul.f32 %v1128, %v224
  %v1135 = vmul.f32 %v1128, %v228
  %1142 = vrot.lane.b32.xlu0 %v1130, 108
  %v1143 = vpop.permute.xlu0 %1142
  %1144 = vrot.lane.b32.xlu0 %v1131, 108
  %v1145 = vpop.permute.xlu0 %1144
  %1146 = vrot.lane.b32.xlu0 %v1132, 108
  %v1147 = vpop.permute.xlu0 %1146
  %1148 = vrot.lane.b32.xlu0 %v1133, 108
  %v1149 = vpop.permute.xlu0 %1148
  %1150 = vrot.lane.b32.xlu0 %v1134, 108
  %v1151 = vpop.permute.xlu0 %1150
  %1152 = vrot.lane.b32.xlu0 %v1135, 108
  %v1153 = vpop.permute.xlu0 %1152
  %v1154 = vsel %vm1063, %v1143, %v1145
  %v1155 = vsel %vm1063, %v1145, %v1147
  %v1156 = vsel %vm1063, %v1147, %v1149
  %v1157 = vsel %vm1063, %v1149, %v1151
  %v1158 = vsel %vm1063, %v1151, %v1153
  %v1165 = vadd.f32 %v1120, %v1154
  %v1166 = vadd.f32 %v1121, %v1155
  %v1167 = vadd.f32 %v1122, %v1156
  %v1168 = vadd.f32 %v1123, %v1157
  %v1169 = vadd.f32 %v1124, %v1158
  %v1170 = vadd.f32 %v1125, %v1153
  %1171 = vset.pattern.permute.xlu0 23
  %1172 = vperm.xlu0 %1171, %v24
  %v1173 = vpop.permute.xlu0 %1172
  %v1175 = vmul.f32 %v1173, %v278
  %v1176 = vmul.f32 %v1173, %v282
  %v1177 = vmul.f32 %v1173, %v286
  %v1178 = vmul.f32 %v1173, %v290
  %v1179 = vmul.f32 %v1173, %v294
  %v1180 = vmul.f32 %v1173, %v298
  %1187 = vrot.lane.b32.xlu0 %v1175, 108
  %v1188 = vpop.permute.xlu0 %1187
  %1189 = vrot.lane.b32.xlu0 %v1176, 108
  %v1190 = vpop.permute.xlu0 %1189
  %1191 = vrot.lane.b32.xlu0 %v1177, 108
  %v1192 = vpop.permute.xlu0 %1191
  %1193 = vrot.lane.b32.xlu0 %v1178, 108
  %v1194 = vpop.permute.xlu0 %1193
  %1195 = vrot.lane.b32.xlu0 %v1179, 108
  %v1196 = vpop.permute.xlu0 %1195
  %1197 = vrot.lane.b32.xlu0 %v1180, 108
  %v1198 = vpop.permute.xlu0 %1197
  %v1199 = vsel %vm1063, %v1188, %v1190
  %v1200 = vsel %vm1063, %v1190, %v1192
  %v1201 = vsel %vm1063, %v1192, %v1194
  %v1202 = vsel %vm1063, %v1194, %v1196
  %v1203 = vsel %vm1063, %v1196, %v1198
  %v1210 = vadd.f32 %v1165, %v1199
  %v1211 = vadd.f32 %v1166, %v1200
  %v1212 = vadd.f32 %v1167, %v1201
  %v1213 = vadd.f32 %v1168, %v1202
  %v1214 = vadd.f32 %v1169, %v1203
  %v1215 = vadd.f32 %v1170, %v1198
  %1216 = vset.pattern.permute.xlu0 24
  %1217 = vperm.xlu0 %1216, %v24
  %v1218 = vpop.permute.xlu0 %1217
  %v1220 = vmul.f32 %v1218, %v68
  %v1221 = vmul.f32 %v1218, %v72
  %v1222 = vmul.f32 %v1218, %v76
  %v1223 = vmul.f32 %v1218, %v80
  %v1224 = vmul.f32 %v1218, %v84
  %v1225 = vmul.f32 %v1218, %v88
  %1232 = vrot.lane.b32.xlu0 %v1220, 92
  %v1233 = vpop.permute.xlu0 %1232
  %1234 = vrot.lane.b32.xlu0 %v1221, 92
  %v1235 = vpop.permute.xlu0 %1234
  %1236 = vrot.lane.b32.xlu0 %v1222, 92
  %v1237 = vpop.permute.xlu0 %1236
  %1238 = vrot.lane.b32.xlu0 %v1223, 92
  %v1239 = vpop.permute.xlu0 %1238
  %1240 = vrot.lane.b32.xlu0 %v1224, 92
  %v1241 = vpop.permute.xlu0 %1240
  %1242 = vrot.lane.b32.xlu0 %v1225, 92
  %v1243 = vpop.permute.xlu0 %1242
  %vm1244 = vcmask 752640
  %v1245 = vsel %vm1244, %v1233, %v1235
  %v1246 = vsel %vm1244, %v1235, %v1237
  %v1247 = vsel %vm1244, %v1237, %v1239
  %v1248 = vsel %vm1244, %v1239, %v1241
  %v1249 = vsel %vm1244, %v1241, %v1243
  %v1256 = vadd.f32 %v1210, %v1245
  %v1257 = vadd.f32 %v1211, %v1246
  %v1258 = vadd.f32 %v1212, %v1247
  %v1259 = vadd.f32 %v1213, %v1248
  %v1260 = vadd.f32 %v1214, %v1249
  %v1261 = vadd.f32 %v1215, %v1243
  %1262 = vset.pattern.permute.xlu0 25
  %1263 = vperm.xlu0 %1262, %v24
  %v1264 = vpop.permute.xlu0 %1263
  %v1266 = vmul.f32 %v1264, %v138
  %v1267 = vmul.f32 %v1264, %v142
  %v1268 = vmul.f32 %v1264, %v146
  %v1269 = vmul.f32 %v1264, %v150
  %v1270 = vmul.f32 %v1264, %v154
  %v1271 = vmul.f32 %v1264, %v158
  %1278 = vrot.lane.b32.xlu0 %v1266, 92
  %v1279 = vpop.permute.xlu0 %1278
  %1280 = vrot.lane.b32.xlu0 %v1267, 92
  %v1281 = vpop.permute.xlu0 %1280
  %1282 = vrot.lane.b32.xlu0 %v1268, 92
  %v1283 = vpop.permute.xlu0 %1282
  %1284 = vrot.lane.b32.xlu0 %v1269, 92
  %v1285 = vpop.permute.xlu0 %1284
  %1286 = vrot.lane.b32.xlu0 %v1270, 92
  %v1287 = vpop.permute.xlu0 %1286
  %1288 = vrot.lane.b32.xlu0 %v1271, 92
  %v1289 = vpop.permute.xlu0 %1288
  %v1290 = vsel %vm1244, %v1279, %v1281
  %v1291 = vsel %vm1244, %v1281, %v1283
  %v1292 = vsel %vm1244, %v1283, %v1285
  %v1293 = vsel %vm1244, %v1285, %v1287
  %v1294 = vsel %vm1244, %v1287, %v1289
  %v1301 = vadd.f32 %v1256, %v1290
  %v1302 = vadd.f32 %v1257, %v1291
  %v1303 = vadd.f32 %v1258, %v1292
  %v1304 = vadd.f32 %v1259, %v1293
  %v1305 = vadd.f32 %v1260, %v1294
  %v1306 = vadd.f32 %v1261, %v1289
  %1307 = vset.pattern.permute.xlu0 26
  %1308 = vperm.xlu0 %1307, %v24
  %v1309 = vpop.permute.xlu0 %1308
  %v1311 = vmul.f32 %v1309, %v208
  %v1312 = vmul.f32 %v1309, %v212
  %v1313 = vmul.f32 %v1309, %v216
  %v1314 = vmul.f32 %v1309, %v220
  %v1315 = vmul.f32 %v1309, %v224
  %v1316 = vmul.f32 %v1309, %v228
  %1323 = vrot.lane.b32.xlu0 %v1311, 92
  %v1324 = vpop.permute.xlu0 %1323
  %1325 = vrot.lane.b32.xlu0 %v1312, 92
  %v1326 = vpop.permute.xlu0 %1325
  %1327 = vrot.lane.b32.xlu0 %v1313, 92
  %v1328 = vpop.permute.xlu0 %1327
  %1329 = vrot.lane.b32.xlu0 %v1314, 92
  %v1330 = vpop.permute.xlu0 %1329
  %1331 = vrot.lane.b32.xlu0 %v1315, 92
  %v1332 = vpop.permute.xlu0 %1331
  %1333 = vrot.lane.b32.xlu0 %v1316, 92
  %v1334 = vpop.permute.xlu0 %1333
  %v1335 = vsel %vm1244, %v1324, %v1326
  %v1336 = vsel %vm1244, %v1326, %v1328
  %v1337 = vsel %vm1244, %v1328, %v1330
  %v1338 = vsel %vm1244, %v1330, %v1332
  %v1339 = vsel %vm1244, %v1332, %v1334
  %v1346 = vadd.f32 %v1301, %v1335
  %v1347 = vadd.f32 %v1302, %v1336
  %v1348 = vadd.f32 %v1303, %v1337
  %v1349 = vadd.f32 %v1304, %v1338
  %v1350 = vadd.f32 %v1305, %v1339
  %v1351 = vadd.f32 %v1306, %v1334
  %1352 = vset.pattern.permute.xlu0 27
  %1353 = vperm.xlu0 %1352, %v24
  %v1354 = vpop.permute.xlu0 %1353
  %v1356 = vmul.f32 %v1354, %v278
  %v1357 = vmul.f32 %v1354, %v282
  %v1358 = vmul.f32 %v1354, %v286
  %v1359 = vmul.f32 %v1354, %v290
  %v1360 = vmul.f32 %v1354, %v294
  %v1361 = vmul.f32 %v1354, %v298
  %1368 = vrot.lane.b32.xlu0 %v1356, 92
  %v1369 = vpop.permute.xlu0 %1368
  %1370 = vrot.lane.b32.xlu0 %v1357, 92
  %v1371 = vpop.permute.xlu0 %1370
  %1372 = vrot.lane.b32.xlu0 %v1358, 92
  %v1373 = vpop.permute.xlu0 %1372
  %1374 = vrot.lane.b32.xlu0 %v1359, 92
  %v1375 = vpop.permute.xlu0 %1374
  %1376 = vrot.lane.b32.xlu0 %v1360, 92
  %v1377 = vpop.permute.xlu0 %1376
  %1378 = vrot.lane.b32.xlu0 %v1361, 92
  %v1379 = vpop.permute.xlu0 %1378
  %v1380 = vsel %vm1244, %v1369, %v1371
  %v1381 = vsel %vm1244, %v1371, %v1373
  %v1382 = vsel %vm1244, %v1373, %v1375
  %v1383 = vsel %vm1244, %v1375, %v1377
  %v1384 = vsel %vm1244, %v1377, %v1379
  %v1391 = vadd.f32 %v1346, %v1380
  %v1392 = vadd.f32 %v1347, %v1381
  %v1393 = vadd.f32 %v1348, %v1382
  %v1394 = vadd.f32 %v1349, %v1383
  %v1395 = vadd.f32 %v1350, %v1384
  %v1396 = vadd.f32 %v1351, %v1379
  %1397 = vset.pattern.permute.xlu0 28
  %1398 = vperm.xlu0 %1397, %v24
  %v1399 = vpop.permute.xlu0 %1398
  %v1401 = vmul.f32 %v1399, %v68
  %v1402 = vmul.f32 %v1399, %v72
  %v1403 = vmul.f32 %v1399, %v76
  %v1404 = vmul.f32 %v1399, %v80
  %v1405 = vmul.f32 %v1399, %v84
  %v1406 = vmul.f32 %v1399, %v88
  %1413 = vrot.lane.b32.xlu0 %v1401, 91
  %v1414 = vpop.permute.xlu0 %1413
  %1415 = vrot.lane.b32.xlu0 %v1402, 91
  %v1416 = vpop.permute.xlu0 %1415
  %1417 = vrot.lane.b32.xlu0 %v1403, 91
  %v1418 = vpop.permute.xlu0 %1417
  %1419 = vrot.lane.b32.xlu0 %v1404, 91
  %v1420 = vpop.permute.xlu0 %1419
  %1421 = vrot.lane.b32.xlu0 %v1405, 91
  %v1422 = vpop.permute.xlu0 %1421
  %1423 = vrot.lane.b32.xlu0 %v1406, 91
  %v1424 = vpop.permute.xlu0 %1423
  %vm1425 = vcmask 744448
  %v1426 = vsel %vm1425, %v1414, %v1416
  %v1427 = vsel %vm1425, %v1416, %v1418
  %v1428 = vsel %vm1425, %v1418, %v1420
  %v1429 = vsel %vm1425, %v1420, %v1422
  %v1430 = vsel %vm1425, %v1422, %v1424
  %v1437 = vadd.f32 %v1391, %v1426
  %v1438 = vadd.f32 %v1392, %v1427
  %v1439 = vadd.f32 %v1393, %v1428
  %v1440 = vadd.f32 %v1394, %v1429
  %v1441 = vadd.f32 %v1395, %v1430
  %v1442 = vadd.f32 %v1396, %v1424
  %1443 = vset.pattern.permute.xlu0 29
  %1444 = vperm.xlu0 %1443, %v24
  %v1445 = vpop.permute.xlu0 %1444
  %v1447 = vmul.f32 %v1445, %v138
  %v1448 = vmul.f32 %v1445, %v142
  %v1449 = vmul.f32 %v1445, %v146
  %v1450 = vmul.f32 %v1445, %v150
  %v1451 = vmul.f32 %v1445, %v154
  %v1452 = vmul.f32 %v1445, %v158
  %1459 = vrot.lane.b32.xlu0 %v1447, 91
  %v1460 = vpop.permute.xlu0 %1459
  %1461 = vrot.lane.b32.xlu0 %v1448, 91
  %v1462 = vpop.permute.xlu0 %1461
  %1463 = vrot.lane.b32.xlu0 %v1449, 91
  %v1464 = vpop.permute.xlu0 %1463
  %1465 = vrot.lane.b32.xlu0 %v1450, 91
  %v1466 = vpop.permute.xlu0 %1465
  %1467 = vrot.lane.b32.xlu0 %v1451, 91
  %v1468 = vpop.permute.xlu0 %1467
  %1469 = vrot.lane.b32.xlu0 %v1452, 91
  %v1470 = vpop.permute.xlu0 %1469
  %v1471 = vsel %vm1425, %v1460, %v1462
  %v1472 = vsel %vm1425, %v1462, %v1464
  %v1473 = vsel %vm1425, %v1464, %v1466
  %v1474 = vsel %vm1425, %v1466, %v1468
  %v1475 = vsel %vm1425, %v1468, %v1470
  %v1482 = vadd.f32 %v1437, %v1471
  %v1483 = vadd.f32 %v1438, %v1472
  %v1484 = vadd.f32 %v1439, %v1473
  %v1485 = vadd.f32 %v1440, %v1474
  %v1486 = vadd.f32 %v1441, %v1475
  %v1487 = vadd.f32 %v1442, %v1470
  %1488 = vset.pattern.permute.xlu0 30
  %1489 = vperm.xlu0 %1488, %v24
  %v1490 = vpop.permute.xlu0 %1489
  %v1492 = vmul.f32 %v1490, %v208
  %v1493 = vmul.f32 %v1490, %v212
  %v1494 = vmul.f32 %v1490, %v216
  %v1495 = vmul.f32 %v1490, %v220
  %v1496 = vmul.f32 %v1490, %v224
  %v1497 = vmul.f32 %v1490, %v228
  %1504 = vrot.lane.b32.xlu0 %v1492, 91
  %v1505 = vpop.permute.xlu0 %1504
  %1506 = vrot.lane.b32.xlu0 %v1493, 91
  %v1507 = vpop.permute.xlu0 %1506
  %1508 = vrot.lane.b32.xlu0 %v1494, 91
  %v1509 = vpop.permute.xlu0 %1508
  %1510 = vrot.lane.b32.xlu0 %v1495, 91
  %v1511 = vpop.permute.xlu0 %1510
  %1512 = vrot.lane.b32.xlu0 %v1496, 91
  %v1513 = vpop.permute.xlu0 %1512
  %1514 = vrot.lane.b32.xlu0 %v1497, 91
  %v1515 = vpop.permute.xlu0 %1514
  %v1516 = vsel %vm1425, %v1505, %v1507
  %v1517 = vsel %vm1425, %v1507, %v1509
  %v1518 = vsel %vm1425, %v1509, %v1511
  %v1519 = vsel %vm1425, %v1511, %v1513
  %v1520 = vsel %vm1425, %v1513, %v1515
  %v1527 = vadd.f32 %v1482, %v1516
  %v1528 = vadd.f32 %v1483, %v1517
  %v1529 = vadd.f32 %v1484, %v1518
  %v1530 = vadd.f32 %v1485, %v1519
  %v1531 = vadd.f32 %v1486, %v1520
  %v1532 = vadd.f32 %v1487, %v1515
  %1533 = vset.pattern.permute.xlu0 31
  %1534 = vperm.xlu0 %1533, %v24
  %v1535 = vpop.permute.xlu0 %1534
  %v1537 = vmul.f32 %v1535, %v278
  %v1538 = vmul.f32 %v1535, %v282
  %v1539 = vmul.f32 %v1535, %v286
  %v1540 = vmul.f32 %v1535, %v290
  %v1541 = vmul.f32 %v1535, %v294
  %v1542 = vmul.f32 %v1535, %v298
  %1549 = vrot.lane.b32.xlu0 %v1537, 91
  %v1550 = vpop.permute.xlu0 %1549
  %1551 = vrot.lane.b32.xlu0 %v1538, 91
  %v1552 = vpop.permute.xlu0 %1551
  %1553 = vrot.lane.b32.xlu0 %v1539, 91
  %v1554 = vpop.permute.xlu0 %1553
  %1555 = vrot.lane.b32.xlu0 %v1540, 91
  %v1556 = vpop.permute.xlu0 %1555
  %1557 = vrot.lane.b32.xlu0 %v1541, 91
  %v1558 = vpop.permute.xlu0 %1557
  %1559 = vrot.lane.b32.xlu0 %v1542, 91
  %v1560 = vpop.permute.xlu0 %1559
  %v1561 = vsel %vm1425, %v1550, %v1552
  %v1562 = vsel %vm1425, %v1552, %v1554
  %v1563 = vsel %vm1425, %v1554, %v1556
  %v1564 = vsel %vm1425, %v1556, %v1558
  %v1565 = vsel %vm1425, %v1558, %v1560
  %v1572 = vadd.f32 %v1527, %v1561
  %v1573 = vadd.f32 %v1528, %v1562
  %v1574 = vadd.f32 %v1529, %v1563
  %v1575 = vadd.f32 %v1530, %v1564
  %v1576 = vadd.f32 %v1531, %v1565
  %v1577 = vadd.f32 %v1532, %v1560
  %1578 = vset.pattern.permute.xlu0 32
  %1579 = vperm.xlu0 %1578, %v24
  %v1580 = vpop.permute.xlu0 %1579
  %v1582 = vmul.f32 %v1580, %v68
  %v1583 = vmul.f32 %v1580, %v72
  %v1584 = vmul.f32 %v1580, %v76
  %v1585 = vmul.f32 %v1580, %v80
  %v1586 = vmul.f32 %v1580, %v84
  %v1587 = vmul.f32 %v1580, %v88
  %1594 = vrot.lane.b32.xlu0 %v1582, 90
  %v1595 = vpop.permute.xlu0 %1594
  %1596 = vrot.lane.b32.xlu0 %v1583, 90
  %v1597 = vpop.permute.xlu0 %1596
  %1598 = vrot.lane.b32.xlu0 %v1584, 90
  %v1599 = vpop.permute.xlu0 %1598
  %1600 = vrot.lane.b32.xlu0 %v1585, 90
  %v1601 = vpop.permute.xlu0 %1600
  %1602 = vrot.lane.b32.xlu0 %v1586, 90
  %v1603 = vpop.permute.xlu0 %1602
  %1604 = vrot.lane.b32.xlu0 %v1587, 90
  %v1605 = vpop.permute.xlu0 %1604
  %vm1606 = vcmask 736256
  %v1607 = vsel %vm1606, %v1595, %v1597
  %v1608 = vsel %vm1606, %v1597, %v1599
  %v1609 = vsel %vm1606, %v1599, %v1601
  %v1610 = vsel %vm1606, %v1601, %v1603
  %v1611 = vsel %vm1606, %v1603, %v1605
  %v1618 = vadd.f32 %v1572, %v1607
  %v1619 = vadd.f32 %v1573, %v1608
  %v1620 = vadd.f32 %v1574, %v1609
  %v1621 = vadd.f32 %v1575, %v1610
  %v1622 = vadd.f32 %v1576, %v1611
  %v1623 = vadd.f32 %v1577, %v1605
  %1624 = vset.pattern.permute.xlu0 33
  %1625 = vperm.xlu0 %1624, %v24
  %v1626 = vpop.permute.xlu0 %1625
  %v1628 = vmul.f32 %v1626, %v138
  %v1629 = vmul.f32 %v1626, %v142
  %v1630 = vmul.f32 %v1626, %v146
  %v1631 = vmul.f32 %v1626, %v150
  %v1632 = vmul.f32 %v1626, %v154
  %v1633 = vmul.f32 %v1626, %v158
  %1640 = vrot.lane.b32.xlu0 %v1628, 90
  %v1641 = vpop.permute.xlu0 %1640
  %1642 = vrot.lane.b32.xlu0 %v1629, 90
  %v1643 = vpop.permute.xlu0 %1642
  %1644 = vrot.lane.b32.xlu0 %v1630, 90
  %v1645 = vpop.permute.xlu0 %1644
  %1646 = vrot.lane.b32.xlu0 %v1631, 90
  %v1647 = vpop.permute.xlu0 %1646
  %1648 = vrot.lane.b32.xlu0 %v1632, 90
  %v1649 = vpop.permute.xlu0 %1648
  %1650 = vrot.lane.b32.xlu0 %v1633, 90
  %v1651 = vpop.permute.xlu0 %1650
  %v1652 = vsel %vm1606, %v1641, %v1643
  %v1653 = vsel %vm1606, %v1643, %v1645
  %v1654 = vsel %vm1606, %v1645, %v1647
  %v1655 = vsel %vm1606, %v1647, %v1649
  %v1656 = vsel %vm1606, %v1649, %v1651
  %v1663 = vadd.f32 %v1618, %v1652
  %v1664 = vadd.f32 %v1619, %v1653
  %v1665 = vadd.f32 %v1620, %v1654
  %v1666 = vadd.f32 %v1621, %v1655
  %v1667 = vadd.f32 %v1622, %v1656
  %v1668 = vadd.f32 %v1623, %v1651
  %1669 = vset.pattern.permute.xlu0 34
  %1670 = vperm.xlu0 %1669, %v24
  %v1671 = vpop.permute.xlu0 %1670
  %v1673 = vmul.f32 %v1671, %v208
  %v1674 = vmul.f32 %v1671, %v212
  %v1675 = vmul.f32 %v1671, %v216
  %v1676 = vmul.f32 %v1671, %v220
  %v1677 = vmul.f32 %v1671, %v224
  %v1678 = vmul.f32 %v1671, %v228
  %1685 = vrot.lane.b32.xlu0 %v1673, 90
  %v1686 = vpop.permute.xlu0 %1685
  %1687 = vrot.lane.b32.xlu0 %v1674, 90
  %v1688 = vpop.permute.xlu0 %1687
  %1689 = vrot.lane.b32.xlu0 %v1675, 90
  %v1690 = vpop.permute.xlu0 %1689
  %1691 = vrot.lane.b32.xlu0 %v1676, 90
  %v1692 = vpop.permute.xlu0 %1691
  %1693 = vrot.lane.b32.xlu0 %v1677, 90
  %v1694 = vpop.permute.xlu0 %1693
  %1695 = vrot.lane.b32.xlu0 %v1678, 90
  %v1696 = vpop.permute.xlu0 %1695
  %v1697 = vsel %vm1606, %v1686, %v1688
  %v1698 = vsel %vm1606, %v1688, %v1690
  %v1699 = vsel %vm1606, %v1690, %v1692
  %v1700 = vsel %vm1606, %v1692, %v1694
  %v1701 = vsel %vm1606, %v1694, %v1696
  %v1708 = vadd.f32 %v1663, %v1697
  %v1709 = vadd.f32 %v1664, %v1698
  %v1710 = vadd.f32 %v1665, %v1699
  %v1711 = vadd.f32 %v1666, %v1700
  %v1712 = vadd.f32 %v1667, %v1701
  %v1713 = vadd.f32 %v1668, %v1696
  %1714 = vset.pattern.permute.xlu0 35
  %1715 = vperm.xlu0 %1714, %v24
  %v1716 = vpop.permute.xlu0 %1715
  %v1718 = vmul.f32 %v1716, %v278
  %v1719 = vmul.f32 %v1716, %v282
  %v1720 = vmul.f32 %v1716, %v286
  %v1721 = vmul.f32 %v1716, %v290
  %v1722 = vmul.f32 %v1716, %v294
  %v1723 = vmul.f32 %v1716, %v298
  %1730 = vrot.lane.b32.xlu0 %v1718, 90
  %v1731 = vpop.permute.xlu0 %1730
  %1732 = vrot.lane.b32.xlu0 %v1719, 90
  %v1733 = vpop.permute.xlu0 %1732
  %1734 = vrot.lane.b32.xlu0 %v1720, 90
  %v1735 = vpop.permute.xlu0 %1734
  %1736 = vrot.lane.b32.xlu0 %v1721, 90
  %v1737 = vpop.permute.xlu0 %1736
  %1738 = vrot.lane.b32.xlu0 %v1722, 90
  %v1739 = vpop.permute.xlu0 %1738
  %1740 = vrot.lane.b32.xlu0 %v1723, 90
  %v1741 = vpop.permute.xlu0 %1740
  %v1742 = vsel %vm1606, %v1731, %v1733
  %v1743 = vsel %vm1606, %v1733, %v1735
  %v1744 = vsel %vm1606, %v1735, %v1737
  %v1745 = vsel %vm1606, %v1737, %v1739
  %v1746 = vsel %vm1606, %v1739, %v1741
  %v1753 = vadd.f32 %v1708, %v1742
  %v1754 = vadd.f32 %v1709, %v1743
  %v1755 = vadd.f32 %v1710, %v1744
  %v1756 = vadd.f32 %v1711, %v1745
  %v1757 = vadd.f32 %v1712, %v1746
  %v1758 = vadd.f32 %v1713, %v1741
  %v1760 = vlaneseq
  %v1761 = vshrl.u32 %v1760, 7
  %v1762 = vsub.s32 0, %v1761
  %v1763 = vrot.slane %v23, %v1762
  %v1764 = vlaneseq
  %v1765 = vshrl.u32 %v1764, 7
  %v1766 = vsub.s32 1, %v1765
  %v1767 = vrot.slane %v23, %v1766
  %v1768 = vlaneseq
  %v1769 = vshrl.u32 %v1768, 7
  %v1770 = vsub.s32 2, %v1769
  %v1771 = vrot.slane %v23, %v1770
  %v1772 = vlaneseq
  %v1773 = vshrl.u32 %v1772, 7
  %v1774 = vsub.s32 3, %v1773
  %v1775 = vrot.slane %v23, %v1774
  %v1776 = vlaneseq
  %v1777 = vshrl.u32 %v1776, 7
  %v1778 = vsub.s32 4, %v1777
  %v1779 = vrot.slane %v23, %v1778
  %v1780 = vlaneseq
  %v1781 = vshrl.u32 %v1780, 7
  %v1782 = vsub.s32 5, %v1781
  %v1783 = vrot.slane %v23, %v1782
  %v1790 = vmul.f32 %v1753, %v1763
  %v1791 = vmul.f32 %v1754, %v1767
  %v1792 = vmul.f32 %v1755, %v1771
  %v1793 = vmul.f32 %v1756, %v1775
  %v1794 = vmul.f32 %v1757, %v1779
  %v1795 = vmul.f32 %v1758, %v1783
  %vm1796 = vcmask 1043456
  %v1797 = vsel %vm1796, %v1790, 0.0
  %v1798 = vsel %vm1796, %v1791, 0.0
  %v1799 = vadd.f32 %v1797, %v1798
  %v1800 = vsel %vm1796, %v1792, 0.0
  %v1801 = vadd.f32 %v1799, %v1800
  %v1802 = vsel %vm1796, %v1793, 0.0
  %v1803 = vadd.f32 %v1801, %v1802
  %v1804 = vsel %vm1796, %v1794, 0.0
  %v1805 = vadd.f32 %v1803, %v1804
  %vm1806 = vcmask 76800
  %v1807 = vsel %vm1806, %v1795, 0.0
  %v1808 = vadd.f32 %v1805, %v1807
  %1809 = vadd.xlane.f32.xlu0 %v1808
  %v1810 = vpop.xlane.xlu0 %1809
  %v1811 = vmul.f32 %v1810, 0.001953125
  %v1812 = vmul.f32 %v1790, %v1790
  %v1813 = vmul.f32 %v1791, %v1791
  %v1814 = vmul.f32 %v1792, %v1792
  %v1815 = vmul.f32 %v1793, %v1793
  %v1816 = vmul.f32 %v1794, %v1794
  %v1817 = vmul.f32 %v1795, %v1795
  %v1818 = vsel %vm1796, %v1812, 0.0
  %v1819 = vsel %vm1796, %v1813, 0.0
  %v1820 = vadd.f32 %v1818, %v1819
  %v1821 = vsel %vm1796, %v1814, 0.0
  %v1822 = vadd.f32 %v1820, %v1821
  %v1823 = vsel %vm1796, %v1815, 0.0
  %v1824 = vadd.f32 %v1822, %v1823
  %v1825 = vsel %vm1796, %v1816, 0.0
  %v1826 = vadd.f32 %v1824, %v1825
  %v1827 = vsel %vm1806, %v1817, 0.0
  %v1828 = vadd.f32 %v1826, %v1827
  %1829 = vadd.xlane.f32.xlu0 %v1828
  %v1830 = vpop.xlane.xlu0 %1829
  %v1831 = vmul.f32 %v1830, 0.001953125
  %v1832 = vmul.f32 %v1811, %v1811
  %v1833 = vsub.f32 %v1831, %v1832
  %v1834 = vadd.f32 %v1833, 1e-05
  %v1835 = vrsqrt.pop %v1834
  %v1836 = vmul.f32 %v26, %v1835
  %v1837 = vmul.f32 %v1811, %v1836
  %1839 = vrot.lane.b32.xlu0 %v1837, 1
  %v1840 = vpop.permute.xlu0 %1839
  %v1842 = vsub.f32 %v26, %v1840
  %1844 = vset.pattern.permute.xlu0 0
  %1845 = vperm.xlu0 %1844, %v1836
  %v1846 = vpop.permute.xlu0 %1845
  %v1848 = vmul.f32 %v1753, %v1846
  %v1849 = vmul.f32 %v1754, %v1846
  %v1850 = vmul.f32 %v1755, %v1846
  %v1851 = vmul.f32 %v1756, %v1846
  %v1852 = vmul.f32 %v1757, %v1846
  %v1853 = vmul.f32 %v1758, %v1846
  %1855 = vset.pattern.permute.xlu0 1
  %1856 = vperm.xlu0 %1855, %v1842
  %v1857 = vpop.permute.xlu0 %1856
  %v1859 = vadd.f32 %v1848, %v1857
  %v1860 = vadd.f32 %v1849, %v1857
  %v1861 = vadd.f32 %v1850, %v1857
  %v1862 = vadd.f32 %v1851, %v1857
  %v1863 = vadd.f32 %v1852, %v1857
  %v1864 = vadd.f32 %v1853, %v1857
  %vm1865 = vcmp.gt.f32.partialorder %v1859, 0.0
  %vm1866 = vcmp.gt.f32.partialorder %v1860, 0.0
  %vm1867 = vcmp.gt.f32.partialorder %v1861, 0.0
  %vm1868 = vcmp.gt.f32.partialorder %v1862, 0.0
  %vm1869 = vcmp.gt.f32.partialorder %v1863, 0.0
  %vm1870 = vcmp.gt.f32.partialorder %v1864, 0.0
  %v1871 = vmul.f32 %v1859, 0.01
  %v1872 = vmul.f32 %v1860, 0.01
  %v1873 = vmul.f32 %v1861, 0.01
  %v1874 = vmul.f32 %v1862, 0.01
  %v1875 = vmul.f32 %v1863, 0.01
  %v1876 = vmul.f32 %v1864, 0.01
  %v1877 = vsel %vm1865, %v1859, %v1871
  %v1878 = vsel %vm1866, %v1860, %v1872
  %v1879 = vsel %vm1867, %v1861, %v1873
  %v1880 = vsel %vm1868, %v1862, %v1874
  %v1881 = vsel %vm1869, %v1863, %v1875
  %v1882 = vsel %vm1870, %v1864, %v1876
  %v1883 = vmul.f32 %v1877, %v1763
  %v1884 = vmul.f32 %v1878, %v1767
  %v1885 = vmul.f32 %v1879, %v1771
  %v1886 = vmul.f32 %v1880, %v1775
  %v1887 = vmul.f32 %v1881, %v1779
  %v1888 = vmul.f32 %v1882, %v1783
  %1890 = vset.pattern.permute.xlu0 0
  %1891 = vperm.xlu0 %1890, %v25
  %v1892 = vpop.permute.xlu0 %1891
  %v1894 = vlaneseq
  %v1895 = vshrl.u32 %v1894, 7
  %v1896 = vsub.s32 0, %v1895
  %v1897 = vrot.slane %v1883, %v1896
  %v1898 = vlaneseq
  %v1899 = vshrl.u32 %v1898, 7
  %v1900 = vsub.s32 0, %v1899
  %v1901 = vrot.slane %v1884, %v1900
  %v1902 = vlaneseq
  %v1903 = vshrl.u32 %v1902, 7
  %v1904 = vsub.s32 0, %v1903
  %v1905 = vrot.slane %v1885, %v1904
  %v1906 = vlaneseq
  %v1907 = vshrl.u32 %v1906, 7
  %v1908 = vsub.s32 0, %v1907
  %v1909 = vrot.slane %v1886, %v1908
  %v1910 = vlaneseq
  %v1911 = vshrl.u32 %v1910, 7
  %v1912 = vsub.s32 0, %v1911
  %v1913 = vrot.slane %v1887, %v1912
  %v1914 = vmul.f32 %v1892, %v1897
  %v1915 = vmul.f32 %v1892, %v1901
  %v1916 = vmul.f32 %v1892, %v1905
  %v1917 = vmul.f32 %v1892, %v1909
  %v1918 = vmul.f32 %v1892, %v1913
  %v1919 = vadd.f32 %v1914, 0.0
  %v1920 = vadd.f32 %v1915, 0.0
  %v1921 = vadd.f32 %v1916, 0.0
  %v1922 = vadd.f32 %v1917, 0.0
  %v1923 = vadd.f32 %v1918, 0.0
  %1924 = vset.pattern.permute.xlu0 1
  %1925 = vperm.xlu0 %1924, %v25
  %v1926 = vpop.permute.xlu0 %1925
  %v1928 = vlaneseq
  %v1929 = vshrl.u32 %v1928, 7
  %v1930 = vsub.s32 1, %v1929
  %v1931 = vrot.slane %v1883, %v1930
  %v1932 = vlaneseq
  %v1933 = vshrl.u32 %v1932, 7
  %v1934 = vsub.s32 1, %v1933
  %v1935 = vrot.slane %v1884, %v1934
  %v1936 = vlaneseq
  %v1937 = vshrl.u32 %v1936, 7
  %v1938 = vsub.s32 1, %v1937
  %v1939 = vrot.slane %v1885, %v1938
  %v1940 = vlaneseq
  %v1941 = vshrl.u32 %v1940, 7
  %v1942 = vsub.s32 1, %v1941
  %v1943 = vrot.slane %v1886, %v1942
  %v1944 = vlaneseq
  %v1945 = vshrl.u32 %v1944, 7
  %v1946 = vsub.s32 1, %v1945
  %v1947 = vrot.slane %v1887, %v1946
  %v1948 = vmul.f32 %v1926, %v1931
  %v1949 = vmul.f32 %v1926, %v1935
  %v1950 = vmul.f32 %v1926, %v1939
  %v1951 = vmul.f32 %v1926, %v1943
  %v1952 = vmul.f32 %v1926, %v1947
  %v1953 = vadd.f32 %v1919, %v1948
  %v1954 = vadd.f32 %v1920, %v1949
  %v1955 = vadd.f32 %v1921, %v1950
  %v1956 = vadd.f32 %v1922, %v1951
  %v1957 = vadd.f32 %v1923, %v1952
  %1958 = vset.pattern.permute.xlu0 2
  %1959 = vperm.xlu0 %1958, %v25
  %v1960 = vpop.permute.xlu0 %1959
  %v1962 = vlaneseq
  %v1963 = vshrl.u32 %v1962, 7
  %v1964 = vsub.s32 2, %v1963
  %v1965 = vrot.slane %v1883, %v1964
  %v1966 = vlaneseq
  %v1967 = vshrl.u32 %v1966, 7
  %v1968 = vsub.s32 2, %v1967
  %v1969 = vrot.slane %v1884, %v1968
  %v1970 = vlaneseq
  %v1971 = vshrl.u32 %v1970, 7
  %v1972 = vsub.s32 2, %v1971
  %v1973 = vrot.slane %v1885, %v1972
  %v1974 = vlaneseq
  %v1975 = vshrl.u32 %v1974, 7
  %v1976 = vsub.s32 2, %v1975
  %v1977 = vrot.slane %v1886, %v1976
  %v1978 = vlaneseq
  %v1979 = vshrl.u32 %v1978, 7
  %v1980 = vsub.s32 2, %v1979
  %v1981 = vrot.slane %v1887, %v1980
  %v1982 = vmul.f32 %v1960, %v1965
  %v1983 = vmul.f32 %v1960, %v1969
  %v1984 = vmul.f32 %v1960, %v1973
  %v1985 = vmul.f32 %v1960, %v1977
  %v1986 = vmul.f32 %v1960, %v1981
  %v1987 = vadd.f32 %v1953, %v1982
  %v1988 = vadd.f32 %v1954, %v1983
  %v1989 = vadd.f32 %v1955, %v1984
  %v1990 = vadd.f32 %v1956, %v1985
  %v1991 = vadd.f32 %v1957, %v1986
  %1992 = vset.pattern.permute.xlu0 3
  %1993 = vperm.xlu0 %1992, %v25
  %v1994 = vpop.permute.xlu0 %1993
  %v1996 = vlaneseq
  %v1997 = vshrl.u32 %v1996, 7
  %v1998 = vsub.s32 3, %v1997
  %v1999 = vrot.slane %v1883, %v1998
  %v2000 = vlaneseq
  %v2001 = vshrl.u32 %v2000, 7
  %v2002 = vsub.s32 3, %v2001
  %v2003 = vrot.slane %v1884, %v2002
  %v2004 = vlaneseq
  %v2005 = vshrl.u32 %v2004, 7
  %v2006 = vsub.s32 3, %v2005
  %v2007 = vrot.slane %v1885, %v2006
  %v2008 = vlaneseq
  %v2009 = vshrl.u32 %v2008, 7
  %v2010 = vsub.s32 3, %v2009
  %v2011 = vrot.slane %v1886, %v2010
  %v2012 = vlaneseq
  %v2013 = vshrl.u32 %v2012, 7
  %v2014 = vsub.s32 3, %v2013
  %v2015 = vrot.slane %v1887, %v2014
  %v2016 = vmul.f32 %v1994, %v1999
  %v2017 = vmul.f32 %v1994, %v2003
  %v2018 = vmul.f32 %v1994, %v2007
  %v2019 = vmul.f32 %v1994, %v2011
  %v2020 = vmul.f32 %v1994, %v2015
  %v2021 = vadd.f32 %v1987, %v2016
  %v2022 = vadd.f32 %v1988, %v2017
  %v2023 = vadd.f32 %v1989, %v2018
  %v2024 = vadd.f32 %v1990, %v2019
  %v2025 = vadd.f32 %v1991, %v2020
  %2026 = vset.pattern.permute.xlu0 4
  %2027 = vperm.xlu0 %2026, %v25
  %v2028 = vpop.permute.xlu0 %2027
  %v2030 = vmul.f32 %v2028, %v1897
  %v2031 = vmul.f32 %v2028, %v1901
  %v2032 = vmul.f32 %v2028, %v1905
  %v2033 = vmul.f32 %v2028, %v1909
  %v2034 = vmul.f32 %v2028, %v1913
  %2040 = vrot.lane.b32.xlu0 %v2030, 127
  %v2041 = vpop.permute.xlu0 %2040
  %2042 = vrot.lane.b32.xlu0 %v2031, 127
  %v2043 = vpop.permute.xlu0 %2042
  %2044 = vrot.lane.b32.xlu0 %v2032, 127
  %v2045 = vpop.permute.xlu0 %2044
  %2046 = vrot.lane.b32.xlu0 %v2033, 127
  %v2047 = vpop.permute.xlu0 %2046
  %2048 = vrot.lane.b32.xlu0 %v2034, 127
  %v2049 = vpop.permute.xlu0 %2048
  %v2050 = vsel %vm339, %v2041, %v2043
  %v2051 = vsel %vm339, %v2043, %v2045
  %v2052 = vsel %vm339, %v2045, %v2047
  %v2053 = vsel %vm339, %v2047, %v2049
  %v2059 = vadd.f32 %v2021, %v2050
  %v2060 = vadd.f32 %v2022, %v2051
  %v2061 = vadd.f32 %v2023, %v2052
  %v2062 = vadd.f32 %v2024, %v2053
  %v2063 = vadd.f32 %v2025, %v2049
  %2064 = vset.pattern.permute.xlu0 5
  %2065 = vperm.xlu0 %2064, %v25
  %v2066 = vpop.permute.xlu0 %2065
  %v2068 = vmul.f32 %v2066, %v1931
  %v2069 = vmul.f32 %v2066, %v1935
  %v2070 = vmul.f32 %v2066, %v1939
  %v2071 = vmul.f32 %v2066, %v1943
  %v2072 = vmul.f32 %v2066, %v1947
  %2078 = vrot.lane.b32.xlu0 %v2068, 127
  %v2079 = vpop.permute.xlu0 %2078
  %2080 = vrot.lane.b32.xlu0 %v2069, 127
  %v2081 = vpop.permute.xlu0 %2080
  %2082 = vrot.lane.b32.xlu0 %v2070, 127
  %v2083 = vpop.permute.xlu0 %2082
  %2084 = vrot.lane.b32.xlu0 %v2071, 127
  %v2085 = vpop.permute.xlu0 %2084
  %2086 = vrot.lane.b32.xlu0 %v2072, 127
  %v2087 = vpop.permute.xlu0 %2086
  %v2088 = vsel %vm339, %v2079, %v2081
  %v2089 = vsel %vm339, %v2081, %v2083
  %v2090 = vsel %vm339, %v2083, %v2085
  %v2091 = vsel %vm339, %v2085, %v2087
  %v2097 = vadd.f32 %v2059, %v2088
  %v2098 = vadd.f32 %v2060, %v2089
  %v2099 = vadd.f32 %v2061, %v2090
  %v2100 = vadd.f32 %v2062, %v2091
  %v2101 = vadd.f32 %v2063, %v2087
  %2102 = vset.pattern.permute.xlu0 6
  %2103 = vperm.xlu0 %2102, %v25
  %v2104 = vpop.permute.xlu0 %2103
  %v2106 = vmul.f32 %v2104, %v1965
  %v2107 = vmul.f32 %v2104, %v1969
  %v2108 = vmul.f32 %v2104, %v1973
  %v2109 = vmul.f32 %v2104, %v1977
  %v2110 = vmul.f32 %v2104, %v1981
  %2116 = vrot.lane.b32.xlu0 %v2106, 127
  %v2117 = vpop.permute.xlu0 %2116
  %2118 = vrot.lane.b32.xlu0 %v2107, 127
  %v2119 = vpop.permute.xlu0 %2118
  %2120 = vrot.lane.b32.xlu0 %v2108, 127
  %v2121 = vpop.permute.xlu0 %2120
  %2122 = vrot.lane.b32.xlu0 %v2109, 127
  %v2123 = vpop.permute.xlu0 %2122
  %2124 = vrot.lane.b32.xlu0 %v2110, 127
  %v2125 = vpop.permute.xlu0 %2124
  %v2126 = vsel %vm339, %v2117, %v2119
  %v2127 = vsel %vm339, %v2119, %v2121
  %v2128 = vsel %vm339, %v2121, %v2123
  %v2129 = vsel %vm339, %v2123, %v2125
  %v2135 = vadd.f32 %v2097, %v2126
  %v2136 = vadd.f32 %v2098, %v2127
  %v2137 = vadd.f32 %v2099, %v2128
  %v2138 = vadd.f32 %v2100, %v2129
  %v2139 = vadd.f32 %v2101, %v2125
  %2140 = vset.pattern.permute.xlu0 7
  %2141 = vperm.xlu0 %2140, %v25
  %v2142 = vpop.permute.xlu0 %2141
  %v2144 = vmul.f32 %v2142, %v1999
  %v2145 = vmul.f32 %v2142, %v2003
  %v2146 = vmul.f32 %v2142, %v2007
  %v2147 = vmul.f32 %v2142, %v2011
  %v2148 = vmul.f32 %v2142, %v2015
  %2154 = vrot.lane.b32.xlu0 %v2144, 127
  %v2155 = vpop.permute.xlu0 %2154
  %2156 = vrot.lane.b32.xlu0 %v2145, 127
  %v2157 = vpop.permute.xlu0 %2156
  %2158 = vrot.lane.b32.xlu0 %v2146, 127
  %v2159 = vpop.permute.xlu0 %2158
  %2160 = vrot.lane.b32.xlu0 %v2147, 127
  %v2161 = vpop.permute.xlu0 %2160
  %2162 = vrot.lane.b32.xlu0 %v2148, 127
  %v2163 = vpop.permute.xlu0 %2162
  %v2164 = vsel %vm339, %v2155, %v2157
  %v2165 = vsel %vm339, %v2157, %v2159
  %v2166 = vsel %vm339, %v2159, %v2161
  %v2167 = vsel %vm339, %v2161, %v2163
  %v2173 = vadd.f32 %v2135, %v2164
  %v2174 = vadd.f32 %v2136, %v2165
  %v2175 = vadd.f32 %v2137, %v2166
  %v2176 = vadd.f32 %v2138, %v2167
  %v2177 = vadd.f32 %v2139, %v2163
  %2178 = vset.pattern.permute.xlu0 8
  %2179 = vperm.xlu0 %2178, %v25
  %v2180 = vpop.permute.xlu0 %2179
  %v2182 = vmul.f32 %v2180, %v1897
  %v2183 = vmul.f32 %v2180, %v1901
  %v2184 = vmul.f32 %v2180, %v1905
  %v2185 = vmul.f32 %v2180, %v1909
  %v2186 = vmul.f32 %v2180, %v1913
  %2192 = vrot.lane.b32.xlu0 %v2182, 126
  %v2193 = vpop.permute.xlu0 %2192
  %2194 = vrot.lane.b32.xlu0 %v2183, 126
  %v2195 = vpop.permute.xlu0 %2194
  %2196 = vrot.lane.b32.xlu0 %v2184, 126
  %v2197 = vpop.permute.xlu0 %2196
  %2198 = vrot.lane.b32.xlu0 %v2185, 126
  %v2199 = vpop.permute.xlu0 %2198
  %2200 = vrot.lane.b32.xlu0 %v2186, 126
  %v2201 = vpop.permute.xlu0 %2200
  %v2202 = vsel %vm520, %v2193, %v2195
  %v2203 = vsel %vm520, %v2195, %v2197
  %v2204 = vsel %vm520, %v2197, %v2199
  %v2205 = vsel %vm520, %v2199, %v2201
  %v2211 = vadd.f32 %v2173, %v2202
  %v2212 = vadd.f32 %v2174, %v2203
  %v2213 = vadd.f32 %v2175, %v2204
  %v2214 = vadd.f32 %v2176, %v2205
  %v2215 = vadd.f32 %v2177, %v2201
  %2216 = vset.pattern.permute.xlu0 9
  %2217 = vperm.xlu0 %2216, %v25
  %v2218 = vpop.permute.xlu0 %2217
  %v2220 = vmul.f32 %v2218, %v1931
  %v2221 = vmul.f32 %v2218, %v1935
  %v2222 = vmul.f32 %v2218, %v1939
  %v2223 = vmul.f32 %v2218, %v1943
  %v2224 = vmul.f32 %v2218, %v1947
  %2230 = vrot.lane.b32.xlu0 %v2220, 126
  %v2231 = vpop.permute.xlu0 %2230
  %2232 = vrot.lane.b32.xlu0 %v2221, 126
  %v2233 = vpop.permute.xlu0 %2232
  %2234 = vrot.lane.b32.xlu0 %v2222, 126
  %v2235 = vpop.permute.xlu0 %2234
  %2236 = vrot.lane.b32.xlu0 %v2223, 126
  %v2237 = vpop.permute.xlu0 %2236
  %2238 = vrot.lane.b32.xlu0 %v2224, 126
  %v2239 = vpop.permute.xlu0 %2238
  %v2240 = vsel %vm520, %v2231, %v2233
  %v2241 = vsel %vm520, %v2233, %v2235
  %v2242 = vsel %vm520, %v2235, %v2237
  %v2243 = vsel %vm520, %v2237, %v2239
  %v2249 = vadd.f32 %v2211, %v2240
  %v2250 = vadd.f32 %v2212, %v2241
  %v2251 = vadd.f32 %v2213, %v2242
  %v2252 = vadd.f32 %v2214, %v2243
  %v2253 = vadd.f32 %v2215, %v2239
  %2254 = vset.pattern.permute.xlu0 10
  %2255 = vperm.xlu0 %2254, %v25
  %v2256 = vpop.permute.xlu0 %2255
  %v2258 = vmul.f32 %v2256, %v1965
  %v2259 = vmul.f32 %v2256, %v1969
  %v2260 = vmul.f32 %v2256, %v1973
  %v2261 = vmul.f32 %v2256, %v1977
  %v2262 = vmul.f32 %v2256, %v1981
  %2268 = vrot.lane.b32.xlu0 %v2258, 126
  %v2269 = vpop.permute.xlu0 %2268
  %2270 = vrot.lane.b32.xlu0 %v2259, 126
  %v2271 = vpop.permute.xlu0 %2270
  %2272 = vrot.lane.b32.xlu0 %v2260, 126
  %v2273 = vpop.permute.xlu0 %2272
  %2274 = vrot.lane.b32.xlu0 %v2261, 126
  %v2275 = vpop.permute.xlu0 %2274
  %2276 = vrot.lane.b32.xlu0 %v2262, 126
  %v2277 = vpop.permute.xlu0 %2276
  %v2278 = vsel %vm520, %v2269, %v2271
  %v2279 = vsel %vm520, %v2271, %v2273
  %v2280 = vsel %vm520, %v2273, %v2275
  %v2281 = vsel %vm520, %v2275, %v2277
  %v2287 = vadd.f32 %v2249, %v2278
  %v2288 = vadd.f32 %v2250, %v2279
  %v2289 = vadd.f32 %v2251, %v2280
  %v2290 = vadd.f32 %v2252, %v2281
  %v2291 = vadd.f32 %v2253, %v2277
  %2292 = vset.pattern.permute.xlu0 11
  %2293 = vperm.xlu0 %2292, %v25
  %v2294 = vpop.permute.xlu0 %2293
  %v2296 = vmul.f32 %v2294, %v1999
  %v2297 = vmul.f32 %v2294, %v2003
  %v2298 = vmul.f32 %v2294, %v2007
  %v2299 = vmul.f32 %v2294, %v2011
  %v2300 = vmul.f32 %v2294, %v2015
  %2306 = vrot.lane.b32.xlu0 %v2296, 126
  %v2307 = vpop.permute.xlu0 %2306
  %2308 = vrot.lane.b32.xlu0 %v2297, 126
  %v2309 = vpop.permute.xlu0 %2308
  %2310 = vrot.lane.b32.xlu0 %v2298, 126
  %v2311 = vpop.permute.xlu0 %2310
  %2312 = vrot.lane.b32.xlu0 %v2299, 126
  %v2313 = vpop.permute.xlu0 %2312
  %2314 = vrot.lane.b32.xlu0 %v2300, 126
  %v2315 = vpop.permute.xlu0 %2314
  %v2316 = vsel %vm520, %v2307, %v2309
  %v2317 = vsel %vm520, %v2309, %v2311
  %v2318 = vsel %vm520, %v2311, %v2313
  %v2319 = vsel %vm520, %v2313, %v2315
  %v2325 = vadd.f32 %v2287, %v2316
  %v2326 = vadd.f32 %v2288, %v2317
  %v2327 = vadd.f32 %v2289, %v2318
  %v2328 = vadd.f32 %v2290, %v2319
  %v2329 = vadd.f32 %v2291, %v2315
  %2330 = vset.pattern.permute.xlu0 12
  %2331 = vperm.xlu0 %2330, %v25
  %v2332 = vpop.permute.xlu0 %2331
  %v2334 = vmul.f32 %v2332, %v1897
  %v2335 = vmul.f32 %v2332, %v1901
  %v2336 = vmul.f32 %v2332, %v1905
  %v2337 = vmul.f32 %v2332, %v1909
  %v2338 = vmul.f32 %v2332, %v1913
  %2344 = vrot.lane.b32.xlu0 %v2334, 110
  %v2345 = vpop.permute.xlu0 %2344
  %2346 = vrot.lane.b32.xlu0 %v2335, 110
  %v2347 = vpop.permute.xlu0 %2346
  %2348 = vrot.lane.b32.xlu0 %v2336, 110
  %v2349 = vpop.permute.xlu0 %2348
  %2350 = vrot.lane.b32.xlu0 %v2337, 110
  %v2351 = vpop.permute.xlu0 %2350
  %2352 = vrot.lane.b32.xlu0 %v2338, 110
  %v2353 = vpop.permute.xlu0 %2352
  %v2354 = vsel %vm701, %v2345, %v2347
  %v2355 = vsel %vm701, %v2347, %v2349
  %v2356 = vsel %vm701, %v2349, %v2351
  %v2357 = vsel %vm701, %v2351, %v2353
  %v2363 = vadd.f32 %v2325, %v2354
  %v2364 = vadd.f32 %v2326, %v2355
  %v2365 = vadd.f32 %v2327, %v2356
  %v2366 = vadd.f32 %v2328, %v2357
  %v2367 = vadd.f32 %v2329, %v2353
  %2368 = vset.pattern.permute.xlu0 13
  %2369 = vperm.xlu0 %2368, %v25
  %v2370 = vpop.permute.xlu0 %2369
  %v2372 = vmul.f32 %v2370, %v1931
  %v2373 = vmul.f32 %v2370, %v1935
  %v2374 = vmul.f32 %v2370, %v1939
  %v2375 = vmul.f32 %v2370, %v1943
  %v2376 = vmul.f32 %v2370, %v1947
  %2382 = vrot.lane.b32.xlu0 %v2372, 110
  %v2383 = vpop.permute.xlu0 %2382
  %2384 = vrot.lane.b32.xlu0 %v2373, 110
  %v2385 = vpop.permute.xlu0 %2384
  %2386 = vrot.lane.b32.xlu0 %v2374, 110
  %v2387 = vpop.permute.xlu0 %2386
  %2388 = vrot.lane.b32.xlu0 %v2375, 110
  %v2389 = vpop.permute.xlu0 %2388
  %2390 = vrot.lane.b32.xlu0 %v2376, 110
  %v2391 = vpop.permute.xlu0 %2390
  %v2392 = vsel %vm701, %v2383, %v2385
  %v2393 = vsel %vm701, %v2385, %v2387
  %v2394 = vsel %vm701, %v2387, %v2389
  %v2395 = vsel %vm701, %v2389, %v2391
  %v2401 = vadd.f32 %v2363, %v2392
  %v2402 = vadd.f32 %v2364, %v2393
  %v2403 = vadd.f32 %v2365, %v2394
  %v2404 = vadd.f32 %v2366, %v2395
  %v2405 = vadd.f32 %v2367, %v2391
  %2406 = vset.pattern.permute.xlu0 14
  %2407 = vperm.xlu0 %2406, %v25
  %v2408 = vpop.permute.xlu0 %2407
  %v2410 = vmul.f32 %v2408, %v1965
  %v2411 = vmul.f32 %v2408, %v1969
  %v2412 = vmul.f32 %v2408, %v1973
  %v2413 = vmul.f32 %v2408, %v1977
  %v2414 = vmul.f32 %v2408, %v1981
  %2420 = vrot.lane.b32.xlu0 %v2410, 110
  %v2421 = vpop.permute.xlu0 %2420
  %2422 = vrot.lane.b32.xlu0 %v2411, 110
  %v2423 = vpop.permute.xlu0 %2422
  %2424 = vrot.lane.b32.xlu0 %v2412, 110
  %v2425 = vpop.permute.xlu0 %2424
  %2426 = vrot.lane.b32.xlu0 %v2413, 110
  %v2427 = vpop.permute.xlu0 %2426
  %2428 = vrot.lane.b32.xlu0 %v2414, 110
  %v2429 = vpop.permute.xlu0 %2428
  %v2430 = vsel %vm701, %v2421, %v2423
  %v2431 = vsel %vm701, %v2423, %v2425
  %v2432 = vsel %vm701, %v2425, %v2427
  %v2433 = vsel %vm701, %v2427, %v2429
  %v2439 = vadd.f32 %v2401, %v2430
  %v2440 = vadd.f32 %v2402, %v2431
  %v2441 = vadd.f32 %v2403, %v2432
  %v2442 = vadd.f32 %v2404, %v2433
  %v2443 = vadd.f32 %v2405, %v2429
  %2444 = vset.pattern.permute.xlu0 15
  %2445 = vperm.xlu0 %2444, %v25
  %v2446 = vpop.permute.xlu0 %2445
  %v2448 = vmul.f32 %v2446, %v1999
  %v2449 = vmul.f32 %v2446, %v2003
  %v2450 = vmul.f32 %v2446, %v2007
  %v2451 = vmul.f32 %v2446, %v2011
  %v2452 = vmul.f32 %v2446, %v2015
  %2458 = vrot.lane.b32.xlu0 %v2448, 110
  %v2459 = vpop.permute.xlu0 %2458
  %2460 = vrot.lane.b32.xlu0 %v2449, 110
  %v2461 = vpop.permute.xlu0 %2460
  %2462 = vrot.lane.b32.xlu0 %v2450, 110
  %v2463 = vpop.permute.xlu0 %2462
  %2464 = vrot.lane.b32.xlu0 %v2451, 110
  %v2465 = vpop.permute.xlu0 %2464
  %2466 = vrot.lane.b32.xlu0 %v2452, 110
  %v2467 = vpop.permute.xlu0 %2466
  %v2468 = vsel %vm701, %v2459, %v2461
  %v2469 = vsel %vm701, %v2461, %v2463
  %v2470 = vsel %vm701, %v2463, %v2465
  %v2471 = vsel %vm701, %v2465, %v2467
  %v2477 = vadd.f32 %v2439, %v2468
  %v2478 = vadd.f32 %v2440, %v2469
  %v2479 = vadd.f32 %v2441, %v2470
  %v2480 = vadd.f32 %v2442, %v2471
  %v2481 = vadd.f32 %v2443, %v2467
  %2482 = vset.pattern.permute.xlu0 16
  %2483 = vperm.xlu0 %2482, %v25
  %v2484 = vpop.permute.xlu0 %2483
  %v2486 = vmul.f32 %v2484, %v1897
  %v2487 = vmul.f32 %v2484, %v1901
  %v2488 = vmul.f32 %v2484, %v1905
  %v2489 = vmul.f32 %v2484, %v1909
  %v2490 = vmul.f32 %v2484, %v1913
  %2496 = vrot.lane.b32.xlu0 %v2486, 109
  %v2497 = vpop.permute.xlu0 %2496
  %2498 = vrot.lane.b32.xlu0 %v2487, 109
  %v2499 = vpop.permute.xlu0 %2498
  %2500 = vrot.lane.b32.xlu0 %v2488, 109
  %v2501 = vpop.permute.xlu0 %2500
  %2502 = vrot.lane.b32.xlu0 %v2489, 109
  %v2503 = vpop.permute.xlu0 %2502
  %2504 = vrot.lane.b32.xlu0 %v2490, 109
  %v2505 = vpop.permute.xlu0 %2504
  %v2506 = vsel %vm882, %v2497, %v2499
  %v2507 = vsel %vm882, %v2499, %v2501
  %v2508 = vsel %vm882, %v2501, %v2503
  %v2509 = vsel %vm882, %v2503, %v2505
  %v2515 = vadd.f32 %v2477, %v2506
  %v2516 = vadd.f32 %v2478, %v2507
  %v2517 = vadd.f32 %v2479, %v2508
  %v2518 = vadd.f32 %v2480, %v2509
  %v2519 = vadd.f32 %v2481, %v2505
  %2520 = vset.pattern.permute.xlu0 17
  %2521 = vperm.xlu0 %2520, %v25
  %v2522 = vpop.permute.xlu0 %2521
  %v2524 = vmul.f32 %v2522, %v1931
  %v2525 = vmul.f32 %v2522, %v1935
  %v2526 = vmul.f32 %v2522, %v1939
  %v2527 = vmul.f32 %v2522, %v1943
  %v2528 = vmul.f32 %v2522, %v1947
  %2534 = vrot.lane.b32.xlu0 %v2524, 109
  %v2535 = vpop.permute.xlu0 %2534
  %2536 = vrot.lane.b32.xlu0 %v2525, 109
  %v2537 = vpop.permute.xlu0 %2536
  %2538 = vrot.lane.b32.xlu0 %v2526, 109
  %v2539 = vpop.permute.xlu0 %2538
  %2540 = vrot.lane.b32.xlu0 %v2527, 109
  %v2541 = vpop.permute.xlu0 %2540
  %2542 = vrot.lane.b32.xlu0 %v2528, 109
  %v2543 = vpop.permute.xlu0 %2542
  %v2544 = vsel %vm882, %v2535, %v2537
  %v2545 = vsel %vm882, %v2537, %v2539
  %v2546 = vsel %vm882, %v2539, %v2541
  %v2547 = vsel %vm882, %v2541, %v2543
  %v2553 = vadd.f32 %v2515, %v2544
  %v2554 = vadd.f32 %v2516, %v2545
  %v2555 = vadd.f32 %v2517, %v2546
  %v2556 = vadd.f32 %v2518, %v2547
  %v2557 = vadd.f32 %v2519, %v2543
  %2558 = vset.pattern.permute.xlu0 18
  %2559 = vperm.xlu0 %2558, %v25
  %v2560 = vpop.permute.xlu0 %2559
  %v2562 = vmul.f32 %v2560, %v1965
  %v2563 = vmul.f32 %v2560, %v1969
  %v2564 = vmul.f32 %v2560, %v1973
  %v2565 = vmul.f32 %v2560, %v1977
  %v2566 = vmul.f32 %v2560, %v1981
  %2572 = vrot.lane.b32.xlu0 %v2562, 109
  %v2573 = vpop.permute.xlu0 %2572
  %2574 = vrot.lane.b32.xlu0 %v2563, 109
  %v2575 = vpop.permute.xlu0 %2574
  %2576 = vrot.lane.b32.xlu0 %v2564, 109
  %v2577 = vpop.permute.xlu0 %2576
  %2578 = vrot.lane.b32.xlu0 %v2565, 109
  %v2579 = vpop.permute.xlu0 %2578
  %2580 = vrot.lane.b32.xlu0 %v2566, 109
  %v2581 = vpop.permute.xlu0 %2580
  %v2582 = vsel %vm882, %v2573, %v2575
  %v2583 = vsel %vm882, %v2575, %v2577
  %v2584 = vsel %vm882, %v2577, %v2579
  %v2585 = vsel %vm882, %v2579, %v2581
  %v2591 = vadd.f32 %v2553, %v2582
  %v2592 = vadd.f32 %v2554, %v2583
  %v2593 = vadd.f32 %v2555, %v2584
  %v2594 = vadd.f32 %v2556, %v2585
  %v2595 = vadd.f32 %v2557, %v2581
  %2596 = vset.pattern.permute.xlu0 19
  %2597 = vperm.xlu0 %2596, %v25
  %v2598 = vpop.permute.xlu0 %2597
  %v2600 = vmul.f32 %v2598, %v1999
  %v2601 = vmul.f32 %v2598, %v2003
  %v2602 = vmul.f32 %v2598, %v2007
  %v2603 = vmul.f32 %v2598, %v2011
  %v2604 = vmul.f32 %v2598, %v2015
  %2610 = vrot.lane.b32.xlu0 %v2600, 109
  %v2611 = vpop.permute.xlu0 %2610
  %2612 = vrot.lane.b32.xlu0 %v2601, 109
  %v2613 = vpop.permute.xlu0 %2612
  %2614 = vrot.lane.b32.xlu0 %v2602, 109
  %v2615 = vpop.permute.xlu0 %2614
  %2616 = vrot.lane.b32.xlu0 %v2603, 109
  %v2617 = vpop.permute.xlu0 %2616
  %2618 = vrot.lane.b32.xlu0 %v2604, 109
  %v2619 = vpop.permute.xlu0 %2618
  %v2620 = vsel %vm882, %v2611, %v2613
  %v2621 = vsel %vm882, %v2613, %v2615
  %v2622 = vsel %vm882, %v2615, %v2617
  %v2623 = vsel %vm882, %v2617, %v2619
  %v2629 = vadd.f32 %v2591, %v2620
  %v2630 = vadd.f32 %v2592, %v2621
  %v2631 = vadd.f32 %v2593, %v2622
  %v2632 = vadd.f32 %v2594, %v2623
  %v2633 = vadd.f32 %v2595, %v2619
  %2634 = vset.pattern.permute.xlu0 20
  %2635 = vperm.xlu0 %2634, %v25
  %v2636 = vpop.permute.xlu0 %2635
  %v2638 = vmul.f32 %v2636, %v1897
  %v2639 = vmul.f32 %v2636, %v1901
  %v2640 = vmul.f32 %v2636, %v1905
  %v2641 = vmul.f32 %v2636, %v1909
  %v2642 = vmul.f32 %v2636, %v1913
  %2648 = vrot.lane.b32.xlu0 %v2638, 108
  %v2649 = vpop.permute.xlu0 %2648
  %2650 = vrot.lane.b32.xlu0 %v2639, 108
  %v2651 = vpop.permute.xlu0 %2650
  %2652 = vrot.lane.b32.xlu0 %v2640, 108
  %v2653 = vpop.permute.xlu0 %2652
  %2654 = vrot.lane.b32.xlu0 %v2641, 108
  %v2655 = vpop.permute.xlu0 %2654
  %2656 = vrot.lane.b32.xlu0 %v2642, 108
  %v2657 = vpop.permute.xlu0 %2656
  %v2658 = vsel %vm1063, %v2649, %v2651
  %v2659 = vsel %vm1063, %v2651, %v2653
  %v2660 = vsel %vm1063, %v2653, %v2655
  %v2661 = vsel %vm1063, %v2655, %v2657
  %v2667 = vadd.f32 %v2629, %v2658
  %v2668 = vadd.f32 %v2630, %v2659
  %v2669 = vadd.f32 %v2631, %v2660
  %v2670 = vadd.f32 %v2632, %v2661
  %v2671 = vadd.f32 %v2633, %v2657
  %2672 = vset.pattern.permute.xlu0 21
  %2673 = vperm.xlu0 %2672, %v25
  %v2674 = vpop.permute.xlu0 %2673
  %v2676 = vmul.f32 %v2674, %v1931
  %v2677 = vmul.f32 %v2674, %v1935
  %v2678 = vmul.f32 %v2674, %v1939
  %v2679 = vmul.f32 %v2674, %v1943
  %v2680 = vmul.f32 %v2674, %v1947
  %2686 = vrot.lane.b32.xlu0 %v2676, 108
  %v2687 = vpop.permute.xlu0 %2686
  %2688 = vrot.lane.b32.xlu0 %v2677, 108
  %v2689 = vpop.permute.xlu0 %2688
  %2690 = vrot.lane.b32.xlu0 %v2678, 108
  %v2691 = vpop.permute.xlu0 %2690
  %2692 = vrot.lane.b32.xlu0 %v2679, 108
  %v2693 = vpop.permute.xlu0 %2692
  %2694 = vrot.lane.b32.xlu0 %v2680, 108
  %v2695 = vpop.permute.xlu0 %2694
  %v2696 = vsel %vm1063, %v2687, %v2689
  %v2697 = vsel %vm1063, %v2689, %v2691
  %v2698 = vsel %vm1063, %v2691, %v2693
  %v2699 = vsel %vm1063, %v2693, %v2695
  %v2705 = vadd.f32 %v2667, %v2696
  %v2706 = vadd.f32 %v2668, %v2697
  %v2707 = vadd.f32 %v2669, %v2698
  %v2708 = vadd.f32 %v2670, %v2699
  %v2709 = vadd.f32 %v2671, %v2695
  %2710 = vset.pattern.permute.xlu0 22
  %2711 = vperm.xlu0 %2710, %v25
  %v2712 = vpop.permute.xlu0 %2711
  %v2714 = vmul.f32 %v2712, %v1965
  %v2715 = vmul.f32 %v2712, %v1969
  %v2716 = vmul.f32 %v2712, %v1973
  %v2717 = vmul.f32 %v2712, %v1977
  %v2718 = vmul.f32 %v2712, %v1981
  %2724 = vrot.lane.b32.xlu0 %v2714, 108
  %v2725 = vpop.permute.xlu0 %2724
  %2726 = vrot.lane.b32.xlu0 %v2715, 108
  %v2727 = vpop.permute.xlu0 %2726
  %2728 = vrot.lane.b32.xlu0 %v2716, 108
  %v2729 = vpop.permute.xlu0 %2728
  %2730 = vrot.lane.b32.xlu0 %v2717, 108
  %v2731 = vpop.permute.xlu0 %2730
  %2732 = vrot.lane.b32.xlu0 %v2718, 108
  %v2733 = vpop.permute.xlu0 %2732
  %v2734 = vsel %vm1063, %v2725, %v2727
  %v2735 = vsel %vm1063, %v2727, %v2729
  %v2736 = vsel %vm1063, %v2729, %v2731
  %v2737 = vsel %vm1063, %v2731, %v2733
  %v2743 = vadd.f32 %v2705, %v2734
  %v2744 = vadd.f32 %v2706, %v2735
  %v2745 = vadd.f32 %v2707, %v2736
  %v2746 = vadd.f32 %v2708, %v2737
  %v2747 = vadd.f32 %v2709, %v2733
  %2748 = vset.pattern.permute.xlu0 23
  %2749 = vperm.xlu0 %2748, %v25
  %v2750 = vpop.permute.xlu0 %2749
  %v2752 = vmul.f32 %v2750, %v1999
  %v2753 = vmul.f32 %v2750, %v2003
  %v2754 = vmul.f32 %v2750, %v2007
  %v2755 = vmul.f32 %v2750, %v2011
  %v2756 = vmul.f32 %v2750, %v2015
  %2762 = vrot.lane.b32.xlu0 %v2752, 108
  %v2763 = vpop.permute.xlu0 %2762
  %2764 = vrot.lane.b32.xlu0 %v2753, 108
  %v2765 = vpop.permute.xlu0 %2764
  %2766 = vrot.lane.b32.xlu0 %v2754, 108
  %v2767 = vpop.permute.xlu0 %2766
  %2768 = vrot.lane.b32.xlu0 %v2755, 108
  %v2769 = vpop.permute.xlu0 %2768
  %2770 = vrot.lane.b32.xlu0 %v2756, 108
  %v2771 = vpop.permute.xlu0 %2770
  %v2772 = vsel %vm1063, %v2763, %v2765
  %v2773 = vsel %vm1063, %v2765, %v2767
  %v2774 = vsel %vm1063, %v2767, %v2769
  %v2775 = vsel %vm1063, %v2769, %v2771
  %v2781 = vadd.f32 %v2743, %v2772
  %v2782 = vadd.f32 %v2744, %v2773
  %v2783 = vadd.f32 %v2745, %v2774
  %v2784 = vadd.f32 %v2746, %v2775
  %v2785 = vadd.f32 %v2747, %v2771
  %2786 = vset.pattern.permute.xlu0 24
  %2787 = vperm.xlu0 %2786, %v25
  %v2788 = vpop.permute.xlu0 %2787
  %v2790 = vlaneseq
  %v2791 = vshrl.u32 %v2790, 7
  %v2792 = vsub.s32 0, %v2791
  %v2793 = vrot.slane %v1888, %v2792
  %v2794 = vmul.f32 %v2788, %v1897
  %v2795 = vmul.f32 %v2788, %v1901
  %v2796 = vmul.f32 %v2788, %v1905
  %v2797 = vmul.f32 %v2788, %v1909
  %v2798 = vmul.f32 %v2788, %v1913
  %v2799 = vmul.f32 %v2788, %v2793
  %2806 = vrot.lane.b32.xlu0 %v2794, 92
  %v2807 = vpop.permute.xlu0 %2806
  %2808 = vrot.lane.b32.xlu0 %v2795, 92
  %v2809 = vpop.permute.xlu0 %2808
  %2810 = vrot.lane.b32.xlu0 %v2796, 92
  %v2811 = vpop.permute.xlu0 %2810
  %2812 = vrot.lane.b32.xlu0 %v2797, 92
  %v2813 = vpop.permute.xlu0 %2812
  %2814 = vrot.lane.b32.xlu0 %v2798, 92
  %v2815 = vpop.permute.xlu0 %2814
  %2816 = vrot.lane.b32.xlu0 %v2799, 92
  %v2817 = vpop.permute.xlu0 %2816
  %v2818 = vsel %vm1244, %v2807, %v2809
  %v2819 = vsel %vm1244, %v2809, %v2811
  %v2820 = vsel %vm1244, %v2811, %v2813
  %v2821 = vsel %vm1244, %v2813, %v2815
  %v2822 = vsel %vm1244, %v2815, %v2817
  %v2828 = vadd.f32 %v2781, %v2818
  %v2829 = vadd.f32 %v2782, %v2819
  %v2830 = vadd.f32 %v2783, %v2820
  %v2831 = vadd.f32 %v2784, %v2821
  %v2832 = vadd.f32 %v2785, %v2822
  %2833 = vset.pattern.permute.xlu0 25
  %2834 = vperm.xlu0 %2833, %v25
  %v2835 = vpop.permute.xlu0 %2834
  %v2837 = vlaneseq
  %v2838 = vshrl.u32 %v2837, 7
  %v2839 = vsub.s32 1, %v2838
  %v2840 = vrot.slane %v1888, %v2839
  %v2841 = vmul.f32 %v2835, %v1931
  %v2842 = vmul.f32 %v2835, %v1935
  %v2843 = vmul.f32 %v2835, %v1939
  %v2844 = vmul.f32 %v2835, %v1943
  %v2845 = vmul.f32 %v2835, %v1947
  %v2846 = vmul.f32 %v2835, %v2840
  %2853 = vrot.lane.b32.xlu0 %v2841, 92
  %v2854 = vpop.permute.xlu0 %2853
  %2855 = vrot.lane.b32.xlu0 %v2842, 92
  %v2856 = vpop.permute.xlu0 %2855
  %2857 = vrot.lane.b32.xlu0 %v2843, 92
  %v2858 = vpop.permute.xlu0 %2857
  %2859 = vrot.lane.b32.xlu0 %v2844, 92
  %v2860 = vpop.permute.xlu0 %2859
  %2861 = vrot.lane.b32.xlu0 %v2845, 92
  %v2862 = vpop.permute.xlu0 %2861
  %2863 = vrot.lane.b32.xlu0 %v2846, 92
  %v2864 = vpop.permute.xlu0 %2863
  %v2865 = vsel %vm1244, %v2854, %v2856
  %v2866 = vsel %vm1244, %v2856, %v2858
  %v2867 = vsel %vm1244, %v2858, %v2860
  %v2868 = vsel %vm1244, %v2860, %v2862
  %v2869 = vsel %vm1244, %v2862, %v2864
  %v2875 = vadd.f32 %v2828, %v2865
  %v2876 = vadd.f32 %v2829, %v2866
  %v2877 = vadd.f32 %v2830, %v2867
  %v2878 = vadd.f32 %v2831, %v2868
  %v2879 = vadd.f32 %v2832, %v2869
  %2880 = vset.pattern.permute.xlu0 26
  %2881 = vperm.xlu0 %2880, %v25
  %v2882 = vpop.permute.xlu0 %2881
  %v2884 = vlaneseq
  %v2885 = vshrl.u32 %v2884, 7
  %v2886 = vsub.s32 2, %v2885
  %v2887 = vrot.slane %v1888, %v2886
  %v2888 = vmul.f32 %v2882, %v1965
  %v2889 = vmul.f32 %v2882, %v1969
  %v2890 = vmul.f32 %v2882, %v1973
  %v2891 = vmul.f32 %v2882, %v1977
  %v2892 = vmul.f32 %v2882, %v1981
  %v2893 = vmul.f32 %v2882, %v2887
  %2900 = vrot.lane.b32.xlu0 %v2888, 92
  %v2901 = vpop.permute.xlu0 %2900
  %2902 = vrot.lane.b32.xlu0 %v2889, 92
  %v2903 = vpop.permute.xlu0 %2902
  %2904 = vrot.lane.b32.xlu0 %v2890, 92
  %v2905 = vpop.permute.xlu0 %2904
  %2906 = vrot.lane.b32.xlu0 %v2891, 92
  %v2907 = vpop.permute.xlu0 %2906
  %2908 = vrot.lane.b32.xlu0 %v2892, 92
  %v2909 = vpop.permute.xlu0 %2908
  %2910 = vrot.lane.b32.xlu0 %v2893, 92
  %v2911 = vpop.permute.xlu0 %2910
  %v2912 = vsel %vm1244, %v2901, %v2903
  %v2913 = vsel %vm1244, %v2903, %v2905
  %v2914 = vsel %vm1244, %v2905, %v2907
  %v2915 = vsel %vm1244, %v2907, %v2909
  %v2916 = vsel %vm1244, %v2909, %v2911
  %v2922 = vadd.f32 %v2875, %v2912
  %v2923 = vadd.f32 %v2876, %v2913
  %v2924 = vadd.f32 %v2877, %v2914
  %v2925 = vadd.f32 %v2878, %v2915
  %v2926 = vadd.f32 %v2879, %v2916
  %2927 = vset.pattern.permute.xlu0 27
  %2928 = vperm.xlu0 %2927, %v25
  %v2929 = vpop.permute.xlu0 %2928
  %v2931 = vlaneseq
  %v2932 = vshrl.u32 %v2931, 7
  %v2933 = vsub.s32 3, %v2932
  %v2934 = vrot.slane %v1888, %v2933
  %v2935 = vmul.f32 %v2929, %v1999
  %v2936 = vmul.f32 %v2929, %v2003
  %v2937 = vmul.f32 %v2929, %v2007
  %v2938 = vmul.f32 %v2929, %v2011
  %v2939 = vmul.f32 %v2929, %v2015
  %v2940 = vmul.f32 %v2929, %v2934
  %2947 = vrot.lane.b32.xlu0 %v2935, 92
  %v2948 = vpop.permute.xlu0 %2947
  %2949 = vrot.lane.b32.xlu0 %v2936, 92
  %v2950 = vpop.permute.xlu0 %2949
  %2951 = vrot.lane.b32.xlu0 %v2937, 92
  %v2952 = vpop.permute.xlu0 %2951
  %2953 = vrot.lane.b32.xlu0 %v2938, 92
  %v2954 = vpop.permute.xlu0 %2953
  %2955 = vrot.lane.b32.xlu0 %v2939, 92
  %v2956 = vpop.permute.xlu0 %2955
  %2957 = vrot.lane.b32.xlu0 %v2940, 92
  %v2958 = vpop.permute.xlu0 %2957
  %v2959 = vsel %vm1244, %v2948, %v2950
  %v2960 = vsel %vm1244, %v2950, %v2952
  %v2961 = vsel %vm1244, %v2952, %v2954
  %v2962 = vsel %vm1244, %v2954, %v2956
  %v2963 = vsel %vm1244, %v2956, %v2958
  %v2969 = vadd.f32 %v2922, %v2959
  %v2970 = vadd.f32 %v2923, %v2960
  %v2971 = vadd.f32 %v2924, %v2961
  %v2972 = vadd.f32 %v2925, %v2962
  %v2973 = vadd.f32 %v2926, %v2963
  %2974 = vset.pattern.permute.xlu0 28
  %2975 = vperm.xlu0 %2974, %v25
  %v2976 = vpop.permute.xlu0 %2975
  %v2978 = vmul.f32 %v2976, %v1897
  %v2979 = vmul.f32 %v2976, %v1901
  %v2980 = vmul.f32 %v2976, %v1905
  %v2981 = vmul.f32 %v2976, %v1909
  %v2982 = vmul.f32 %v2976, %v1913
  %v2983 = vmul.f32 %v2976, %v2793
  %2990 = vrot.lane.b32.xlu0 %v2978, 91
  %v2991 = vpop.permute.xlu0 %2990
  %2992 = vrot.lane.b32.xlu0 %v2979, 91
  %v2993 = vpop.permute.xlu0 %2992
  %2994 = vrot.lane.b32.xlu0 %v2980, 91
  %v2995 = vpop.permute.xlu0 %2994
  %2996 = vrot.lane.b32.xlu0 %v2981, 91
  %v2997 = vpop.permute.xlu0 %2996
  %2998 = vrot.lane.b32.xlu0 %v2982, 91
  %v2999 = vpop.permute.xlu0 %2998
  %3000 = vrot.lane.b32.xlu0 %v2983, 91
  %v3001 = vpop.permute.xlu0 %3000
  %v3002 = vsel %vm1425, %v2991, %v2993
  %v3003 = vsel %vm1425, %v2993, %v2995
  %v3004 = vsel %vm1425, %v2995, %v2997
  %v3005 = vsel %vm1425, %v2997, %v2999
  %v3006 = vsel %vm1425, %v2999, %v3001
  %v3012 = vadd.f32 %v2969, %v3002
  %v3013 = vadd.f32 %v2970, %v3003
  %v3014 = vadd.f32 %v2971, %v3004
  %v3015 = vadd.f32 %v2972, %v3005
  %v3016 = vadd.f32 %v2973, %v3006
  %3017 = vset.pattern.permute.xlu0 29
  %3018 = vperm.xlu0 %3017, %v25
  %v3019 = vpop.permute.xlu0 %3018
  %v3021 = vmul.f32 %v3019, %v1931
  %v3022 = vmul.f32 %v3019, %v1935
  %v3023 = vmul.f32 %v3019, %v1939
  %v3024 = vmul.f32 %v3019, %v1943
  %v3025 = vmul.f32 %v3019, %v1947
  %v3026 = vmul.f32 %v3019, %v2840
  %3033 = vrot.lane.b32.xlu0 %v3021, 91
  %v3034 = vpop.permute.xlu0 %3033
  %3035 = vrot.lane.b32.xlu0 %v3022, 91
  %v3036 = vpop.permute.xlu0 %3035
  %3037 = vrot.lane.b32.xlu0 %v3023, 91
  %v3038 = vpop.permute.xlu0 %3037
  %3039 = vrot.lane.b32.xlu0 %v3024, 91
  %v3040 = vpop.permute.xlu0 %3039
  %3041 = vrot.lane.b32.xlu0 %v3025, 91
  %v3042 = vpop.permute.xlu0 %3041
  %3043 = vrot.lane.b32.xlu0 %v3026, 91
  %v3044 = vpop.permute.xlu0 %3043
  %v3045 = vsel %vm1425, %v3034, %v3036
  %v3046 = vsel %vm1425, %v3036, %v3038
  %v3047 = vsel %vm1425, %v3038, %v3040
  %v3048 = vsel %vm1425, %v3040, %v3042
  %v3049 = vsel %vm1425, %v3042, %v3044
  %v3055 = vadd.f32 %v3012, %v3045
  %v3056 = vadd.f32 %v3013, %v3046
  %v3057 = vadd.f32 %v3014, %v3047
  %v3058 = vadd.f32 %v3015, %v3048
  %v3059 = vadd.f32 %v3016, %v3049
  %3060 = vset.pattern.permute.xlu0 30
  %3061 = vperm.xlu0 %3060, %v25
  %v3062 = vpop.permute.xlu0 %3061
  %v3064 = vmul.f32 %v3062, %v1965
  %v3065 = vmul.f32 %v3062, %v1969
  %v3066 = vmul.f32 %v3062, %v1973
  %v3067 = vmul.f32 %v3062, %v1977
  %v3068 = vmul.f32 %v3062, %v1981
  %v3069 = vmul.f32 %v3062, %v2887
  %3076 = vrot.lane.b32.xlu0 %v3064, 91
  %v3077 = vpop.permute.xlu0 %3076
  %3078 = vrot.lane.b32.xlu0 %v3065, 91
  %v3079 = vpop.permute.xlu0 %3078
  %3080 = vrot.lane.b32.xlu0 %v3066, 91
  %v3081 = vpop.permute.xlu0 %3080
  %3082 = vrot.lane.b32.xlu0 %v3067, 91
  %v3083 = vpop.permute.xlu0 %3082
  %3084 = vrot.lane.b32.xlu0 %v3068, 91
  %v3085 = vpop.permute.xlu0 %3084
  %3086 = vrot.lane.b32.xlu0 %v3069, 91
  %v3087 = vpop.permute.xlu0 %3086
  %v3088 = vsel %vm1425, %v3077, %v3079
  %v3089 = vsel %vm1425, %v3079, %v3081
  %v3090 = vsel %vm1425, %v3081, %v3083
  %v3091 = vsel %vm1425, %v3083, %v3085
  %v3092 = vsel %vm1425, %v3085, %v3087
  %v3098 = vadd.f32 %v3055, %v3088
  %v3099 = vadd.f32 %v3056, %v3089
  %v3100 = vadd.f32 %v3057, %v3090
  %v3101 = vadd.f32 %v3058, %v3091
  %v3102 = vadd.f32 %v3059, %v3092
  %3103 = vset.pattern.permute.xlu0 31
  %3104 = vperm.xlu0 %3103, %v25
  %v3105 = vpop.permute.xlu0 %3104
  %v3107 = vmul.f32 %v3105, %v1999
  %v3108 = vmul.f32 %v3105, %v2003
  %v3109 = vmul.f32 %v3105, %v2007
  %v3110 = vmul.f32 %v3105, %v2011
  %v3111 = vmul.f32 %v3105, %v2015
  %v3112 = vmul.f32 %v3105, %v2934
  %3119 = vrot.lane.b32.xlu0 %v3107, 91
  %v3120 = vpop.permute.xlu0 %3119
  %3121 = vrot.lane.b32.xlu0 %v3108, 91
  %v3122 = vpop.permute.xlu0 %3121
  %3123 = vrot.lane.b32.xlu0 %v3109, 91
  %v3124 = vpop.permute.xlu0 %3123
  %3125 = vrot.lane.b32.xlu0 %v3110, 91
  %v3126 = vpop.permute.xlu0 %3125
  %3127 = vrot.lane.b32.xlu0 %v3111, 91
  %v3128 = vpop.permute.xlu0 %3127
  %3129 = vrot.lane.b32.xlu0 %v3112, 91
  %v3130 = vpop.permute.xlu0 %3129
  %v3131 = vsel %vm1425, %v3120, %v3122
  %v3132 = vsel %vm1425, %v3122, %v3124
  %v3133 = vsel %vm1425, %v3124, %v3126
  %v3134 = vsel %vm1425, %v3126, %v3128
  %v3135 = vsel %vm1425, %v3128, %v3130
  %v3141 = vadd.f32 %v3098, %v3131
  %v3142 = vadd.f32 %v3099, %v3132
  %v3143 = vadd.f32 %v3100, %v3133
  %v3144 = vadd.f32 %v3101, %v3134
  %v3145 = vadd.f32 %v3102, %v3135
  %3146 = vset.pattern.permute.xlu0 32
  %3147 = vperm.xlu0 %3146, %v25
  %v3148 = vpop.permute.xlu0 %3147
  %v3150 = vmul.f32 %v3148, %v1897
  %v3151 = vmul.f32 %v3148, %v1901
  %v3152 = vmul.f32 %v3148, %v1905
  %v3153 = vmul.f32 %v3148, %v1909
  %v3154 = vmul.f32 %v3148, %v1913
  %v3155 = vmul.f32 %v3148, %v2793
  %3162 = vrot.lane.b32.xlu0 %v3150, 90
  %v3163 = vpop.permute.xlu0 %3162
  %3164 = vrot.lane.b32.xlu0 %v3151, 90
  %v3165 = vpop.permute.xlu0 %3164
  %3166 = vrot.lane.b32.xlu0 %v3152, 90
  %v3167 = vpop.permute.xlu0 %3166
  %3168 = vrot.lane.b32.xlu0 %v3153, 90
  %v3169 = vpop.permute.xlu0 %3168
  %3170 = vrot.lane.b32.xlu0 %v3154, 90
  %v3171 = vpop.permute.xlu0 %3170
  %3172 = vrot.lane.b32.xlu0 %v3155, 90
  %v3173 = vpop.permute.xlu0 %3172
  %v3174 = vsel %vm1606, %v3163, %v3165
  %v3175 = vsel %vm1606, %v3165, %v3167
  %v3176 = vsel %vm1606, %v3167, %v3169
  %v3177 = vsel %vm1606, %v3169, %v3171
  %v3178 = vsel %vm1606, %v3171, %v3173
  %v3184 = vadd.f32 %v3141, %v3174
  %v3185 = vadd.f32 %v3142, %v3175
  %v3186 = vadd.f32 %v3143, %v3176
  %v3187 = vadd.f32 %v3144, %v3177
  %v3188 = vadd.f32 %v3145, %v3178
  %3189 = vset.pattern.permute.xlu0 33
  %3190 = vperm.xlu0 %3189, %v25
  %v3191 = vpop.permute.xlu0 %3190
  %v3193 = vmul.f32 %v3191, %v1931
  %v3194 = vmul.f32 %v3191, %v1935
  %v3195 = vmul.f32 %v3191, %v1939
  %v3196 = vmul.f32 %v3191, %v1943
  %v3197 = vmul.f32 %v3191, %v1947
  %v3198 = vmul.f32 %v3191, %v2840
  %3205 = vrot.lane.b32.xlu0 %v3193, 90
  %v3206 = vpop.permute.xlu0 %3205
  %3207 = vrot.lane.b32.xlu0 %v3194, 90
  %v3208 = vpop.permute.xlu0 %3207
  %3209 = vrot.lane.b32.xlu0 %v3195, 90
  %v3210 = vpop.permute.xlu0 %3209
  %3211 = vrot.lane.b32.xlu0 %v3196, 90
  %v3212 = vpop.permute.xlu0 %3211
  %3213 = vrot.lane.b32.xlu0 %v3197, 90
  %v3214 = vpop.permute.xlu0 %3213
  %3215 = vrot.lane.b32.xlu0 %v3198, 90
  %v3216 = vpop.permute.xlu0 %3215
  %v3217 = vsel %vm1606, %v3206, %v3208
  %v3218 = vsel %vm1606, %v3208, %v3210
  %v3219 = vsel %vm1606, %v3210, %v3212
  %v3220 = vsel %vm1606, %v3212, %v3214
  %v3221 = vsel %vm1606, %v3214, %v3216
  %v3227 = vadd.f32 %v3184, %v3217
  %v3228 = vadd.f32 %v3185, %v3218
  %v3229 = vadd.f32 %v3186, %v3219
  %v3230 = vadd.f32 %v3187, %v3220
  %v3231 = vadd.f32 %v3188, %v3221
  %3232 = vset.pattern.permute.xlu0 34
  %3233 = vperm.xlu0 %3232, %v25
  %v3234 = vpop.permute.xlu0 %3233
  %v3236 = vmul.f32 %v3234, %v1965
  %v3237 = vmul.f32 %v3234, %v1969
  %v3238 = vmul.f32 %v3234, %v1973
  %v3239 = vmul.f32 %v3234, %v1977
  %v3240 = vmul.f32 %v3234, %v1981
  %v3241 = vmul.f32 %v3234, %v2887
  %3248 = vrot.lane.b32.xlu0 %v3236, 90
  %v3249 = vpop.permute.xlu0 %3248
  %3250 = vrot.lane.b32.xlu0 %v3237, 90
  %v3251 = vpop.permute.xlu0 %3250
  %3252 = vrot.lane.b32.xlu0 %v3238, 90
  %v3253 = vpop.permute.xlu0 %3252
  %3254 = vrot.lane.b32.xlu0 %v3239, 90
  %v3255 = vpop.permute.xlu0 %3254
  %3256 = vrot.lane.b32.xlu0 %v3240, 90
  %v3257 = vpop.permute.xlu0 %3256
  %3258 = vrot.lane.b32.xlu0 %v3241, 90
  %v3259 = vpop.permute.xlu0 %3258
  %v3260 = vsel %vm1606, %v3249, %v3251
  %v3261 = vsel %vm1606, %v3251, %v3253
  %v3262 = vsel %vm1606, %v3253, %v3255
  %v3263 = vsel %vm1606, %v3255, %v3257
  %v3264 = vsel %vm1606, %v3257, %v3259
  %v3270 = vadd.f32 %v3227, %v3260
  %v3271 = vadd.f32 %v3228, %v3261
  %v3272 = vadd.f32 %v3229, %v3262
  %v3273 = vadd.f32 %v3230, %v3263
  %v3274 = vadd.f32 %v3231, %v3264
  %3275 = vset.pattern.permute.xlu0 35
  %3276 = vperm.xlu0 %3275, %v25
  %v3277 = vpop.permute.xlu0 %3276
  %v3279 = vmul.f32 %v3277, %v1999
  %v3280 = vmul.f32 %v3277, %v2003
  %v3281 = vmul.f32 %v3277, %v2007
  %v3282 = vmul.f32 %v3277, %v2011
  %v3283 = vmul.f32 %v3277, %v2015
  %v3284 = vmul.f32 %v3277, %v2934
  %3291 = vrot.lane.b32.xlu0 %v3279, 90
  %v3292 = vpop.permute.xlu0 %3291
  %3293 = vrot.lane.b32.xlu0 %v3280, 90
  %v3294 = vpop.permute.xlu0 %3293
  %3295 = vrot.lane.b32.xlu0 %v3281, 90
  %v3296 = vpop.permute.xlu0 %3295
  %3297 = vrot.lane.b32.xlu0 %v3282, 90
  %v3298 = vpop.permute.xlu0 %3297
  %3299 = vrot.lane.b32.xlu0 %v3283, 90
  %v3300 = vpop.permute.xlu0 %3299
  %3301 = vrot.lane.b32.xlu0 %v3284, 90
  %v3302 = vpop.permute.xlu0 %3301
  %v3303 = vsel %vm1606, %v3292, %v3294
  %v3304 = vsel %vm1606, %v3294, %v3296
  %v3305 = vsel %vm1606, %v3296, %v3298
  %v3306 = vsel %vm1606, %v3298, %v3300
  %v3307 = vsel %vm1606, %v3300, %v3302
  %v3313 = vadd.f32 %v3270, %v3303
  %v3314 = vadd.f32 %v3271, %v3304
  %v3315 = vadd.f32 %v3272, %v3305
  %v3316 = vadd.f32 %v3273, %v3306
  %v3317 = vadd.f32 %v3274, %v3307
  %3318 = vrot.lane.b32.xlu0 %v1763, 109
  %v3319 = vpop.permute.xlu0 %3318
  %3320 = vrot.lane.b32.xlu0 %v1767, 109
  %v3321 = vpop.permute.xlu0 %3320
  %3322 = vrot.lane.b32.xlu0 %v1771, 109
  %v3323 = vpop.permute.xlu0 %3322
  %3324 = vrot.lane.b32.xlu0 %v1775, 109
  %v3325 = vpop.permute.xlu0 %3324
  %3326 = vrot.lane.b32.xlu0 %v1779, 109
  %v3327 = vpop.permute.xlu0 %3326
  %v3328 = vsel %vm882, %v3319, %v3321
  %v3329 = vsel %vm882, %v3321, %v3323
  %v3330 = vsel %vm882, %v3323, %v3325
  %v3331 = vsel %vm882, %v3325, %v3327
  %v3337 = vmul.f32 %v3313, %v3328
  %v3338 = vmul.f32 %v3314, %v3329
  %v3339 = vmul.f32 %v3315, %v3330
  %v3340 = vmul.f32 %v3316, %v3331
  %v3341 = vmul.f32 %v3317, %v3327
  %v3342 = vsel %vm1796, %v3337, 0.0
  %v3343 = vsel %vm1796, %v3338, 0.0
  %v3344 = vadd.f32 %v3342, %v3343
  %v3345 = vsel %vm1796, %v3339, 0.0
  %v3346 = vadd.f32 %v3344, %v3345
  %v3347 = vsel %vm1796, %v3340, 0.0
  %v3348 = vadd.f32 %v3346, %v3347
  %vm3349 = vcmask 814080
  %v3350 = vsel %vm3349, %v3341, 0.0
  %v3351 = vadd.f32 %v3348, %v3350
  %3352 = vadd.xlane.f32.xlu0 %v3351
  %v3353 = vpop.xlane.xlu0 %3352
  %v3354 = vmul.f32 %v3353, 0.001953125
  %v3355 = vmul.f32 %v3337, %v3337
  %v3356 = vmul.f32 %v3338, %v3338
  %v3357 = vmul.f32 %v3339, %v3339
  %v3358 = vmul.f32 %v3340, %v3340
  %v3359 = vmul.f32 %v3341, %v3341
  %v3360 = vsel %vm1796, %v3355, 0.0
  %v3361 = vsel %vm1796, %v3356, 0.0
  %v3362 = vadd.f32 %v3360, %v3361
  %v3363 = vsel %vm1796, %v3357, 0.0
  %v3364 = vadd.f32 %v3362, %v3363
  %v3365 = vsel %vm1796, %v3358, 0.0
  %v3366 = vadd.f32 %v3364, %v3365
  %v3367 = vsel %vm3349, %v3359, 0.0
  %v3368 = vadd.f32 %v3366, %v3367
  %3369 = vadd.xlane.f32.xlu0 %v3368
  %v3370 = vpop.xlane.xlu0 %3369
  %v3371 = vmul.f32 %v3370, 0.001953125
  %v3372 = vmul.f32 %v3354, %v3354
  %v3373 = vsub.f32 %v3371, %v3372
  %v3374 = vadd.f32 %v3373, 1e-05
  %v3375 = vrsqrt.pop %v3374
  %v3376 = vmul.f32 %v26, %v3375
  %v3377 = vmul.f32 %v3354, %v3376
  %3379 = vrot.lane.b32.xlu0 %v3377, 1
  %v3380 = vpop.permute.xlu0 %3379
  %v3382 = vsub.f32 %v26, %v3380
  %3384 = vset.pattern.permute.xlu0 2
  %3385 = vperm.xlu0 %3384, %v3376
  %v3386 = vpop.permute.xlu0 %3385
  %v3388 = vmul.f32 %v3313, %v3386
  %v3389 = vmul.f32 %v3314, %v3386
  %v3390 = vmul.f32 %v3315, %v3386
  %v3391 = vmul.f32 %v3316, %v3386
  %v3392 = vmul.f32 %v3317, %v3386
  %3394 = vset.pattern.permute.xlu0 3
  %3395 = vperm.xlu0 %3394, %v3382
  %v3396 = vpop.permute.xlu0 %3395
  %v3398 = vadd.f32 %v3388, %v3396
  %v3399 = vadd.f32 %v3389, %v3396
  %v3400 = vadd.f32 %v3390, %v3396
  %v3401 = vadd.f32 %v3391, %v3396
  %v3402 = vadd.f32 %v3392, %v3396
  %v3403 = vcombine.high %v20, %v20
  %v3404 = vcombine.high %v21, %v21
  %v3405 = vcombine.high %v22, %v22
  %3406 = vrot.lane.b32.xlu0 %v20, 90
  %v3407 = vpop.permute.xlu0 %3406
  %3408 = vrot.lane.b32.xlu0 %v3403, 90
  %v3409 = vpop.permute.xlu0 %3408
  %3410 = vrot.lane.b32.xlu0 %v21, 90
  %v3411 = vpop.permute.xlu0 %3410
  %3412 = vrot.lane.b32.xlu0 %v3404, 90
  %v3413 = vpop.permute.xlu0 %3412
  %3414 = vrot.lane.b32.xlu0 %v22, 90
  %v3415 = vpop.permute.xlu0 %3414
  %3416 = vrot.lane.b32.xlu0 %v3405, 90
  %v3417 = vpop.permute.xlu0 %3416
  %v3418 = vsel %vm1606, %v3407, %v3409
  %v3419 = vsel %vm1606, %v3409, %v3411
  %v3420 = vsel %vm1606, %v3411, %v3413
  %v3421 = vsel %vm1606, %v3413, %v3415
  %v3422 = vsel %vm1606, %v3415, %v3417
  %v3428 = vadd.f32 %v3398, %v3418
  %v3429 = vadd.f32 %v3399, %v3419
  %v3430 = vadd.f32 %v3400, %v3420
  %v3431 = vadd.f32 %v3401, %v3421
  %v3432 = vadd.f32 %v3402, %v3422
  %vm3433 = vcmp.gt.f32.partialorder %v3428, 0.0
  %vm3434 = vcmp.gt.f32.partialorder %v3429, 0.0
  %vm3435 = vcmp.gt.f32.partialorder %v3430, 0.0
  %vm3436 = vcmp.gt.f32.partialorder %v3431, 0.0
  %vm3437 = vcmp.gt.f32.partialorder %v3432, 0.0
  %v3438 = vmul.f32 %v3428, 0.01
  %v3439 = vmul.f32 %v3429, 0.01
  %v3440 = vmul.f32 %v3430, 0.01
  %v3441 = vmul.f32 %v3431, 0.01
  %v3442 = vmul.f32 %v3432, 0.01
  %v3443 = vsel %vm3433, %v3428, %v3438
  %v3444 = vsel %vm3434, %v3429, %v3439
  %v3445 = vsel %vm3435, %v3430, %v3440
  %v3446 = vsel %vm3436, %v3431, %v3441
  %v3447 = vsel %vm3437, %v3432, %v3442
  %v3451 = vcombine.low %v3443, %v3444
  %3453 = vst [vmem:[%s5] sm:$0xff] %v3451
  %vm3454 = vcmask 257024
  %3455 = vst.msk [vmem:[%s5 + $0x8] sm:$0xf] %vm3454, %v3445
  %v3458 = vcombine.low %v3445, %v3446
  %3459 = vrot.lane.b32.xlu0 %v3458, 60
  %v3460 = vpop.permute.xlu0 %3459
  %3461 = vrot.lane.b32.xlu0 %v3447, 60
  %v3462 = vpop.permute.xlu0 %3461
  %v3463 = vrot.slane %v3460, 4
  %v3464 = vrot.slane %v3462, 4
  %v3465 = vsel %vm1796, %v3463, %v3464
  %vm3466 = vcmask 490496
  %v3467 = vsel %vm3466, %v3460, %v3465
  %s3470 = scalar_lea.vmem %s5, 12
  %3471 = vst [vmem:[%s3470] sm:$0xff] %v3467
  %3472 = vst.msk [vmem:[%s3470 + $0x8] sm:$0xf] %vm3454, %v3462
  // Predicated region
  $region22: #{residual_block_forward.1} parent=0 // pred_check
    _
  $region23: #{residual_block_forward.1} parent=0 // pred_check_branch
    %3474 = sbr.rel (0) target = $region25
  $region24: #{residual_block_forward.1} parent=0 // pred_region
    _
  $region25: #{residual_block_forward.1} parent=0 // pred_fallthru
    _
  // Predicated region
  $region26: #{residual_block_forward.1} parent=0 // pred_check
    _
  $region27: #{residual_block_forward.1} parent=0 // pred_check_branch
    %3476 = sbr.rel (0) target = $region29
  $region28: #{residual_block_forward.1} parent=0 // pred_region
    _
  $region29: #{residual_block_forward.1} parent=0 // pred_fallthru
    _

</llo_original>
